<compile_context>
chip_gen: v7x
topology: tpu7x:2x2x1
jax: 0.10.0
libtpu: 0.0.40
codegen_flags: <defaults>
</compile_context>

<pallas_src>
import jax
import jax.numpy as jnp
import numpy as np
from jax import lax
from jax.experimental import pallas as pl
from jax.experimental.pallas import tpu as pltpu

STATE_DIM = 24       # laser-scan + goal state used by this robot-nav module
ACTION_DIM = 2
H1 = 800             # logical hidden sizes (PyTorch module)
H2 = 600
SP = 128             # lane-padded state width (zero columns / zero w1 rows)
H1P = 896            # lane-aligned (multiple of 128) padded hidden sizes
H2P = 640
OUT_PAD = 128        # padded output lanes; wrapper slices [:, :action_dim]


def _round_up(x, m):
    return (x + m - 1) // m * m


def _cdiv(a, b):
    return (a + b - 1) // b


def _actor_kernel(s_ref, w1_ref, b1_ref, w2_ref, b2_ref, w3_ref, b3_ref, out_ref):
    # All three matmuls hit the MXU with f32 accumulation.  Activations are
    # cast to the next layer's weight dtype right after each ReLU (identical
    # numerics to casting at the dot, half the intermediate spill traffic).
    x = s_ref[...].astype(w1_ref.dtype)
    h1 = jnp.dot(x, w1_ref[...], preferred_element_type=jnp.float32)
    h1 = jnp.maximum(h1 + b1_ref[...], 0.0).astype(w2_ref.dtype)

    h2 = jnp.dot(h1, w2_ref[...], preferred_element_type=jnp.float32)
    h2 = jnp.maximum(h2 + b2_ref[...], 0.0).astype(w3_ref.dtype)

    a = jnp.dot(h2, w3_ref[...], preferred_element_type=jnp.float32)
    out_ref[...] = jnp.tanh(a + b3_ref[...]).astype(out_ref.dtype)


def actor_forward(s, params, *, action_dim=ACTION_DIM, block_b=256):
    """Fused Actor forward pass.

    s:      (B, STATE_DIM) float32
    params: dict with padded weights/biases:
            w1 (SP, H1P), b1 (1, H1P), w2 (H1P, H2P), b2 (1, H2P),
            w3 (H2P, OUT_PAD), b3 (1, OUT_PAD)
    returns (B, action_dim) float32 in [-1, 1]
    """
    B, sd = s.shape
    w1, b1 = params["w1"], params["b1"]
    w2, b2 = params["w2"], params["b2"]
    w3, b3 = params["w3"], params["b3"]
    sp = w1.shape[0]

    # ---- batch tile selection --------------------------------------------
    # tb is always a multiple of 8 (sublane).  Tile size is derived from the
    # tile count so the padded tail is small, and multi-tile grids use an
    # even tile count so v7x's two TensorCores split the work evenly.
    n_tiles = max(1, _cdiv(B, max(8, block_b)))
    if n_tiles > 1:
        n_tiles = 2 * _cdiv(n_tiles, 2)
    tb = max(8, _round_up(_cdiv(B, n_tiles), 8))
    bp = n_tiles * tb

    # Pad rows to bp and lane-pad state columns to sp (w1's extra rows are 0).
    s = jnp.pad(s.astype(jnp.float32), ((0, bp - B), (0, sp - sd)))

    # ---- cost estimate ----------------------------------------------------
    flops = 2 * bp * (sp * H1P + H1P * H2P + H2P * OUT_PAD)
    transcendentals = bp * OUT_PAD                          # tanh lanes
    w_bytes = sum(int(np.prod(p.shape)) * p.dtype.itemsize
                  for p in (w1, b1, w2, b2, w3, b3))
    bytes_accessed = int(w_bytes + bp * (sp + OUT_PAD) * 4)
    cost = pl.CostEstimate(flops=int(flops),
                           transcendentals=int(transcendentals),
                           bytes_accessed=bytes_accessed)

    const2d = lambda i: (0, 0)

    def _build(single_buffer_weights):
        if single_buffer_weights:
            # Constant index_map => never re-fetched; one buffer is enough.
            wspec = lambda shp: pl.BlockSpec(shp, const2d,
                                             pipeline_mode=pl.Buffered(buffer_count=1))
        else:
            wspec = lambda shp: pl.BlockSpec(shp, const2d)
        return pl.pallas_call(
            _actor_kernel,
            out_shape=jax.ShapeDtypeStruct((bp, OUT_PAD), jnp.float32),
            grid=(n_tiles,),
            in_specs=[
                pl.BlockSpec((tb, sp), lambda i: (i, 0)),   # state rows (tiled)
                wspec((sp, H1P)),                           # w1 (resident)
                wspec((1, H1P)),                            # b1
                wspec((H1P, H2P)),                          # w2 (resident)
                wspec((1, H2P)),                            # b2
                wspec((H2P, OUT_PAD)),                      # w3 (resident)
                wspec((1, OUT_PAD)),                        # b3
            ],
            out_specs=pl.BlockSpec((tb, OUT_PAD), lambda i: (i, 0)),
            compiler_params=pltpu.CompilerParams(
                dimension_semantics=("parallel",),          # v7x: 2 TCs split tiles
            ),
            cost_estimate=cost,
        )

    try:
        out = _build(True)(s, w1, b1, w2, b2, w3, b3)
    except Exception:
        # Fallback if this jax build rejects single-buffered pipeline_mode.
        out = _build(False)(s, w1, b1, w2, b2, w3, b3)

    return out[:B, :action_dim]


def init_actor_params(key, state_dim=STATE_DIM, action_dim=ACTION_DIM,
                      weight_dtype=jnp.bfloat16):
    """PyTorch nn.Linear-style init (U(-1/sqrt(fan_in), +1/sqrt(fan_in))),
    zero-padded to lane-aligned shapes.  weight_dtype=bf16 halves weight DMA;
    weight_dtype=f32 reproduces the PyTorch module's numerics."""
    ks = jax.random.split(key, 6)

    def linear(kw, kb, fan_in, fan_out, pad_in, pad_out):
        bound = 1.0 / np.sqrt(fan_in)
        w = jax.random.uniform(kw, (fan_in, fan_out), jnp.float32, -bound, bound)
        b = jax.random.uniform(kb, (1, fan_out), jnp.float32, -bound, bound)
        # Zero-pad extra rows/cols AND bias entries -> results identical
        # through ReLU/Tanh in the logical columns.
        w = jnp.pad(w, ((0, pad_in - fan_in), (0, pad_out - fan_out)))
        b = jnp.pad(b, ((0, 0), (0, pad_out - fan_out)))
        return w.astype(weight_dtype), b.astype(jnp.float32)

    w1, b1 = linear(ks[0], ks[1], state_dim, H1, SP, H1P)
    w2, b2 = linear(ks[2], ks[3], H1, H2, H1P, H2P)
    w3, b3 = linear(ks[4], ks[5], H2, action_dim, H2P, OUT_PAD)
    return {"w1": w1, "b1": b1, "w2": w2, "b2": b2, "w3": w3, "b3": b3}


def _actor_ref(s, p, action_dim=ACTION_DIM):
    """Pure-JAX reference mirroring the kernel's cast/accumulation pattern.
    With f32 params this is the PyTorch module's forward."""
    sp = p["w1"].shape[0]
    x = jnp.pad(s.astype(jnp.float32), ((0, 0), (0, sp - s.shape[1])))
    dot = lambda a, w: jnp.dot(a.astype(w.dtype), w,
                               preferred_element_type=jnp.float32,
                               precision=lax.Precision.HIGHEST)
    h1 = jnp.maximum(dot(x, p["w1"]) + p["b1"], 0.0).astype(p["w2"].dtype)
    h2 = jnp.maximum(dot(h1, p["w2"]) + p["b2"], 0.0).astype(p["w3"].dtype)
    a = jnp.tanh(dot(h2, p["w3"]) + p["b3"])
    return a[:, :action_dim]


if __name__ == "__main__":
    key = jax.random.PRNGKey(0)
    k_params, k_state, k_big = jax.random.split(key, 3)

    batch = 2
    s = jax.random.normal(k_state, (batch, STATE_DIM), dtype=jnp.float32)

    # --- exact f32 path: matches the PyTorch module numerics ---------------
    params_f32 = init_actor_params(k_params, weight_dtype=jnp.float32)
    out_f32 = jax.block_until_ready(actor_forward(s, params_f32))
    ref_f32 = jax.block_until_ready(_actor_ref(s, params_f32))
    np.testing.assert_allclose(np.asarray(out_f32), np.asarray(ref_f32),
                               rtol=1e-4, atol=1e-5)
    assert out_f32.shape == (batch, ACTION_DIM)

    # --- bf16-weight fast path (half the weight DMA), f32 accumulation -----
    params_bf16 = init_actor_params(k_params, weight_dtype=jnp.bfloat16)
    out_bf16 = jax.block_until_ready(actor_forward(s, params_bf16))
    ref_bf16 = jax.block_until_ready(_actor_ref(s, params_bf16))
    np.testing.assert_allclose(np.asarray(out_bf16), np.asarray(ref_bf16),
                               rtol=2e-3, atol=2e-3)
    # bf16 weights are a deliberate numerics tradeoff; stay close to f32 ref.
    np.testing.assert_allclose(np.asarray(out_bf16), np.asarray(ref_f32),
                               rtol=5e-2, atol=5e-2)

    # --- multi-tile batch path (grid > 1, resident weights, odd block_b) ---
    big_b = 300
    s_big = jax.random.normal(k_big, (big_b, STATE_DIM), dtype=jnp.float32)
    out_big = jax.block_until_ready(
        actor_forward(s_big, params_bf16, block_b=100))   # non-multiple-of-8 tile req
    ref_big = jax.block_until_ready(_actor_ref(s_big, params_bf16))
    np.testing.assert_allclose(np.asarray(out_big), np.asarray(ref_big),
                               rtol=2e-3, atol=2e-3)
    assert out_big.shape == (big_b, ACTION_DIM)

    print("KERNEL_OK")
</pallas_src>

<mosaic_0001>
module attributes {stable_mosaic.version = 11 : i64} {
  func.func @_actor_kernel(%arg0: i32, %arg1: memref<8x128xf32, #tpu.memory_space<vmem>>, %arg2: memref<128x896xf32, #tpu.memory_space<vmem>>, %arg3: memref<1x896xf32, #tpu.memory_space<vmem>>, %arg4: memref<896x640xf32, #tpu.memory_space<vmem>>, %arg5: memref<1x640xf32, #tpu.memory_space<vmem>>, %arg6: memref<640x128xf32, #tpu.memory_space<vmem>>, %arg7: memref<1x128xf32, #tpu.memory_space<vmem>>, %arg8: memref<8x128xf32, #tpu.memory_space<vmem>>) attributes {dimension_semantics = [#tpu.dimension_semantics<parallel>], iteration_bounds = array<i64: 1>, scalar_prefetch = 0 : i64, scratch_operands = 0 : i64, tpu.core_type = #tpu.core_type<tc>, window_params = [{transform_indices = @transform_0, window_bounds = array<i64: 8, 128>}, {pipeline_mode = #tpu.pipeline_mode<synchronous>, transform_indices = @transform_1, window_bounds = array<i64: 128, 896>}, {pipeline_mode = #tpu.pipeline_mode<synchronous>, transform_indices = @transform_2, window_bounds = array<i64: 1, 896>}, {pipeline_mode = #tpu.pipeline_mode<synchronous>, transform_indices = @transform_3, window_bounds = array<i64: 896, 640>}, {pipeline_mode = #tpu.pipeline_mode<synchronous>, transform_indices = @transform_4, window_bounds = array<i64: 1, 640>}, {pipeline_mode = #tpu.pipeline_mode<synchronous>, transform_indices = @transform_5, window_bounds = array<i64: 640, 128>}, {pipeline_mode = #tpu.pipeline_mode<synchronous>, transform_indices = @transform_6, window_bounds = array<i64: 1, 128>}, {transform_indices = @transform_7, window_bounds = array<i64: 8, 128>}]} {
    %c0 = arith.constant 0 : index
    %c0_0 = arith.constant 0 : index
    %0 = vector.load %arg1[%c0, %c0_0] : memref<8x128xf32, #tpu.memory_space<vmem>>, vector<8x128xf32>
    %c0_1 = arith.constant 0 : index
    %c0_2 = arith.constant 0 : index
    %1 = vector.load %arg2[%c0_1, %c0_2] : memref<128x896xf32, #tpu.memory_space<vmem>>, vector<128x896xf32>
    %cst = arith.constant dense<0.000000e+00> : vector<8x896xf32>
    %2 = tpu.matmul %0, %1, %cst {dimension_numbers = #tpu.dot_dimension_numbers<[1], [0], [0], [1], [0, 0, 1, 1], [], []>} : vector<8x128xf32>, vector<128x896xf32>, vector<8x896xf32> -> vector<8x896xf32>
    %c0_3 = arith.constant 0 : index
    %c0_4 = arith.constant 0 : index
    %3 = vector.load %arg3[%c0_3, %c0_4] : memref<1x896xf32, #tpu.memory_space<vmem>>, vector<1x896xf32>
    %4 = vector.broadcast %3 : vector<1x896xf32> to vector<8x896xf32>
    %5 = arith.addf %2, %4 : vector<8x896xf32>
    %cst_5 = arith.constant 0.000000e+00 : f32
    %6 = vector.broadcast %cst_5 : f32 to vector<8x896xf32>
    %7 = arith.maximumf %5, %6 : vector<8x896xf32>
    %c0_6 = arith.constant 0 : index
    %c0_7 = arith.constant 0 : index
    %8 = vector.load %arg4[%c0_6, %c0_7] : memref<896x640xf32, #tpu.memory_space<vmem>>, vector<896x640xf32>
    %cst_8 = arith.constant dense<0.000000e+00> : vector<8x640xf32>
    %9 = tpu.matmul %7, %8, %cst_8 {dimension_numbers = #tpu.dot_dimension_numbers<[1], [0], [0], [1], [0, 0, 1, 1], [], []>} : vector<8x896xf32>, vector<896x640xf32>, vector<8x640xf32> -> vector<8x640xf32>
    %c0_9 = arith.constant 0 : index
    %c0_10 = arith.constant 0 : index
    %10 = vector.load %arg5[%c0_9, %c0_10] : memref<1x640xf32, #tpu.memory_space<vmem>>, vector<1x640xf32>
    %11 = vector.broadcast %10 : vector<1x640xf32> to vector<8x640xf32>
    %12 = arith.addf %9, %11 : vector<8x640xf32>
    %cst_11 = arith.constant 0.000000e+00 : f32
    %13 = vector.broadcast %cst_11 : f32 to vector<8x640xf32>
    %14 = arith.maximumf %12, %13 : vector<8x640xf32>
    %c0_12 = arith.constant 0 : index
    %c0_13 = arith.constant 0 : index
    %15 = vector.load %arg6[%c0_12, %c0_13] : memref<640x128xf32, #tpu.memory_space<vmem>>, vector<640x128xf32>
    %cst_14 = arith.constant dense<0.000000e+00> : vector<8x128xf32>
    %16 = tpu.matmul %14, %15, %cst_14 {dimension_numbers = #tpu.dot_dimension_numbers<[1], [0], [0], [1], [0, 0, 1, 1], [], []>} : vector<8x640xf32>, vector<640x128xf32>, vector<8x128xf32> -> vector<8x128xf32>
    %c0_15 = arith.constant 0 : index
    %c0_16 = arith.constant 0 : index
    %17 = vector.load %arg7[%c0_15, %c0_16] : memref<1x128xf32, #tpu.memory_space<vmem>>, vector<1x128xf32>
    %18 = vector.broadcast %17 : vector<1x128xf32> to vector<8x128xf32>
    %19 = arith.addf %16, %18 : vector<8x128xf32>
    %20 = math.tanh %19 : vector<8x128xf32>
    %c0_17 = arith.constant 0 : index
    %c0_18 = arith.constant 0 : index
    %21 = vector.load %arg8[%c0_17, %c0_18] : memref<8x128xf32, #tpu.memory_space<vmem>>, vector<8x128xf32>
    tpu.vector_store %arg8[%c0_17, %c0_18], %20 {strides = array<i32>} : memref<8x128xf32, #tpu.memory_space<vmem>>, vector<8x128xf32>,
    return
  }
  func.func @transform_0(%arg0: i32) -> (i32, i32) {
    %c0_i32 = arith.constant 0 : i32
    %c0_i32_0 = arith.constant 0 : i32
    return %arg0, %c0_i32 : i32, i32
  }
  func.func @transform_1(%arg0: i32) -> (i32, i32) {
    %c0_i32 = arith.constant 0 : i32
    %c0_i32_0 = arith.constant 0 : i32
    %c0_i32_1 = arith.constant 0 : i32
    return %c0_i32, %c0_i32_0 : i32, i32
  }
  func.func @transform_2(%arg0: i32) -> (i32, i32) {
    %c0_i32 = arith.constant 0 : i32
    %c0_i32_0 = arith.constant 0 : i32
    %c0_i32_1 = arith.constant 0 : i32
    return %c0_i32, %c0_i32_0 : i32, i32
  }
  func.func @transform_3(%arg0: i32) -> (i32, i32) {
    %c0_i32 = arith.constant 0 : i32
    %c0_i32_0 = arith.constant 0 : i32
    %c0_i32_1 = arith.constant 0 : i32
    return %c0_i32, %c0_i32_0 : i32, i32
  }
  func.func @transform_4(%arg0: i32) -> (i32, i32) {
    %c0_i32 = arith.constant 0 : i32
    %c0_i32_0 = arith.constant 0 : i32
    %c0_i32_1 = arith.constant 0 : i32
    return %c0_i32, %c0_i32_0 : i32, i32
  }
  func.func @transform_5(%arg0: i32) -> (i32, i32) {
    %c0_i32 = arith.constant 0 : i32
    %c0_i32_0 = arith.constant 0 : i32
    %c0_i32_1 = arith.constant 0 : i32
    return %c0_i32, %c0_i32_0 : i32, i32
  }
  func.func @transform_6(%arg0: i32) -> (i32, i32) {
    %c0_i32 = arith.constant 0 : i32
    %c0_i32_0 = arith.constant 0 : i32
    %c0_i32_1 = arith.constant 0 : i32
    return %c0_i32, %c0_i32_0 : i32, i32
  }
  func.func @transform_7(%arg0: i32) -> (i32, i32) {
    %c0_i32 = arith.constant 0 : i32
    %c0_i32_0 = arith.constant 0 : i32
    return %arg0, %c0_i32 : i32, i32
  }
}

module attributes {stable_mosaic.version = 11 : i64} {
  func.func @_actor_kernel(%arg0: i32, %arg1: memref<8x128xf32, #tpu.memory_space<vmem>>, %arg2: memref<128x896xf32, #tpu.memory_space<vmem>>, %arg3: memref<1x896xf32, #tpu.memory_space<vmem>>, %arg4: memref<896x640xf32, #tpu.memory_space<vmem>>, %arg5: memref<1x640xf32, #tpu.memory_space<vmem>>, %arg6: memref<640x128xf32, #tpu.memory_space<vmem>>, %arg7: memref<1x128xf32, #tpu.memory_space<vmem>>, %arg8: memref<8x128xf32, #tpu.memory_space<vmem>>) attributes {dimension_semantics = [#tpu.dimension_semantics<parallel>], iteration_bounds = array<i64: 1>, scalar_prefetch = 0 : i64, scratch_operands = 0 : i64, tpu.core_type = #tpu.core_type<tc>, window_params = [{transform_indices = @transform_0, window_bounds = array<i64: 8, 128>}, {pipeline_mode = #tpu.pipeline_mode<synchronous>, transform_indices = @transform_1, window_bounds = array<i64: 128, 896>}, {pipeline_mode = #tpu.pipeline_mode<synchronous>, transform_indices = @transform_2, window_bounds = array<i64: 1, 896>}, {pipeline_mode = #tpu.pipeline_mode<synchronous>, transform_indices = @transform_3, window_bounds = array<i64: 896, 640>}, {pipeline_mode = #tpu.pipeline_mode<synchronous>, transform_indices = @transform_4, window_bounds = array<i64: 1, 640>}, {pipeline_mode = #tpu.pipeline_mode<synchronous>, transform_indices = @transform_5, window_bounds = array<i64: 640, 128>}, {pipeline_mode = #tpu.pipeline_mode<synchronous>, transform_indices = @transform_6, window_bounds = array<i64: 1, 128>}, {transform_indices = @transform_7, window_bounds = array<i64: 8, 128>}]} {
    %c0 = arith.constant 0 : index
    %c0_0 = arith.constant 0 : index
    %0 = vector.load %arg1[%c0, %c0_0] : memref<8x128xf32, #tpu.memory_space<vmem>>, vector<8x128xf32>
    %c0_1 = arith.constant 0 : index
    %c0_2 = arith.constant 0 : index
    %1 = vector.load %arg2[%c0_1, %c0_2] : memref<128x896xf32, #tpu.memory_space<vmem>>, vector<128x896xf32>
    %cst = arith.constant dense<0.000000e+00> : vector<8x896xf32>
    %2 = tpu.matmul %0, %1, %cst {dimension_numbers = #tpu.dot_dimension_numbers<[1], [0], [0], [1], [0, 0, 1, 1], [], []>} : vector<8x128xf32>, vector<128x896xf32>, vector<8x896xf32> -> vector<8x896xf32>
    %c0_3 = arith.constant 0 : index
    %c0_4 = arith.constant 0 : index
    %3 = vector.load %arg3[%c0_3, %c0_4] : memref<1x896xf32, #tpu.memory_space<vmem>>, vector<1x896xf32>
    %4 = vector.broadcast %3 : vector<1x896xf32> to vector<8x896xf32>
    %5 = arith.addf %2, %4 : vector<8x896xf32>
    %cst_5 = arith.constant 0.000000e+00 : f32
    %6 = vector.broadcast %cst_5 : f32 to vector<8x896xf32>
    %7 = arith.maximumf %5, %6 : vector<8x896xf32>
    %c0_6 = arith.constant 0 : index
    %c0_7 = arith.constant 0 : index
    %8 = vector.load %arg4[%c0_6, %c0_7] : memref<896x640xf32, #tpu.memory_space<vmem>>, vector<896x640xf32>
    %cst_8 = arith.constant dense<0.000000e+00> : vector<8x640xf32>
    %9 = tpu.matmul %7, %8, %cst_8 {dimension_numbers = #tpu.dot_dimension_numbers<[1], [0], [0], [1], [0, 0, 1, 1], [], []>} : vector<8x896xf32>, vector<896x640xf32>, vector<8x640xf32> -> vector<8x640xf32>
    %c0_9 = arith.constant 0 : index
    %c0_10 = arith.constant 0 : index
    %10 = vector.load %arg5[%c0_9, %c0_10] : memref<1x640xf32, #tpu.memory_space<vmem>>, vector<1x640xf32>
    %11 = vector.broadcast %10 : vector<1x640xf32> to vector<8x640xf32>
    %12 = arith.addf %9, %11 : vector<8x640xf32>
    %cst_11 = arith.constant 0.000000e+00 : f32
    %13 = vector.broadcast %cst_11 : f32 to vector<8x640xf32>
    %14 = arith.maximumf %12, %13 : vector<8x640xf32>
    %c0_12 = arith.constant 0 : index
    %c0_13 = arith.constant 0 : index
    %15 = vector.load %arg6[%c0_12, %c0_13] : memref<640x128xf32, #tpu.memory_space<vmem>>, vector<640x128xf32>
    %cst_14 = arith.constant dense<0.000000e+00> : vector<8x128xf32>
    %16 = tpu.matmul %14, %15, %cst_14 {dimension_numbers = #tpu.dot_dimension_numbers<[1], [0], [0], [1], [0, 0, 1, 1], [], []>} : vector<8x640xf32>, vector<640x128xf32>, vector<8x128xf32> -> vector<8x128xf32>
    %c0_15 = arith.constant 0 : index
    %c0_16 = arith.constant 0 : index
    %17 = vector.load %arg7[%c0_15, %c0_16] : memref<1x128xf32, #tpu.memory_space<vmem>>, vector<1x128xf32>
    %18 = vector.broadcast %17 : vector<1x128xf32> to vector<8x128xf32>
    %19 = arith.addf %16, %18 : vector<8x128xf32>
    %20 = math.tanh %19 : vector<8x128xf32>
    %c0_17 = arith.constant 0 : index
    %c0_18 = arith.constant 0 : index
    %21 = vector.load %arg8[%c0_17, %c0_18] : memref<8x128xf32, #tpu.memory_space<vmem>>, vector<8x128xf32>
    tpu.vector_store %arg8[%c0_17, %c0_18], %20 {strides = array<i32>} : memref<8x128xf32, #tpu.memory_space<vmem>>, vector<8x128xf32>,
    return
  }
  func.func @transform_0(%arg0: i32) -> (i32, i32) {
    %c0_i32 = arith.constant 0 : i32
    %c0_i32_0 = arith.constant 0 : i32
    return %arg0, %c0_i32 : i32, i32
  }
  func.func @transform_1(%arg0: i32) -> (i32, i32) {
    %c0_i32 = arith.constant 0 : i32
    %c0_i32_0 = arith.constant 0 : i32
    %c0_i32_1 = arith.constant 0 : i32
    return %c0_i32, %c0_i32_0 : i32, i32
  }
  func.func @transform_2(%arg0: i32) -> (i32, i32) {
    %c0_i32 = arith.constant 0 : i32
    %c0_i32_0 = arith.constant 0 : i32
    %c0_i32_1 = arith.constant 0 : i32
    return %c0_i32, %c0_i32_0 : i32, i32
  }
  func.func @transform_3(%arg0: i32) -> (i32, i32) {
    %c0_i32 = arith.constant 0 : i32
    %c0_i32_0 = arith.constant 0 : i32
    %c0_i32_1 = arith.constant 0 : i32
    return %c0_i32, %c0_i32_0 : i32, i32
  }
  func.func @transform_4(%arg0: i32) -> (i32, i32) {
    %c0_i32 = arith.constant 0 : i32
    %c0_i32_0 = arith.constant 0 : i32
    %c0_i32_1 = arith.constant 0 : i32
    return %c0_i32, %c0_i32_0 : i32, i32
  }
  func.func @transform_5(%arg0: i32) -> (i32, i32) {
    %c0_i32 = arith.constant 0 : i32
    %c0_i32_0 = arith.constant 0 : i32
    %c0_i32_1 = arith.constant 0 : i32
    return %c0_i32, %c0_i32_0 : i32, i32
  }
  func.func @transform_6(%arg0: i32) -> (i32, i32) {
    %c0_i32 = arith.constant 0 : i32
    %c0_i32_0 = arith.constant 0 : i32
    %c0_i32_1 = arith.constant 0 : i32
    return %c0_i32, %c0_i32_0 : i32, i32
  }
  func.func @transform_7(%arg0: i32) -> (i32, i32) {
    %c0_i32 = arith.constant 0 : i32
    %c0_i32_0 = arith.constant 0 : i32
    return %arg0, %c0_i32 : i32, i32
  }
}

</mosaic_0001>

<llo_original>
// kernel: tpu_custom_call.1
$region0: #{tpu_custom_call.1}
  #allocation0 [shape = 'u32[]', space=smem, size = 0x4, offset = 0x4, fixed_abs, tag = 'smem constant byte address 0x4 - core index']
  #allocation1 [shape = 'u32[144,128]{1,0:T(1,128)}', space=vmem, size = 0x12000, scoped, tag = 'internal scratch']
  %s0 = inlined_call_operand.hbm [shape: f32[8,128], index: 0, kind: input, shape index: {}]
  %s1 = inlined_call_operand.hbm [shape: f32[128,896], index: 1, kind: input, shape index: {}]
  %s2 = inlined_call_operand.hbm [shape: f32[1,896], index: 2, kind: input, shape index: {}]
  %s3 = inlined_call_operand.hbm [shape: f32[896,640], index: 3, kind: input, shape index: {}]
  %s4 = inlined_call_operand.hbm [shape: f32[1,640], index: 4, kind: input, shape index: {}]
  %s5 = inlined_call_operand.hbm [shape: f32[640,128], index: 5, kind: input, shape index: {}]
  %s6 = inlined_call_operand.hbm [shape: f32[1,128], index: 6, kind: input, shape index: {}]
  %s7 = inlined_call_operand.hbm [shape: f32[8,128], index: 7, kind: output, shape index: {}]
  %s8 = sld [smem:[#allocation0]]
  $region66: #{tpu_custom_call.1} parent=0
    _
  %s10 = ssub.s32 1, %s8
  %s11 = scalar_select 0, %s10, %s8
  $region1: #{tpu_custom_call.1} parent=0
    #allocation2 [shape = 'u8[4096]{0}', space=vmem, size = 0x1000, scoped, tag = 'input window, operand 0, single buffered']
    #allocation3 [shape = 's32[1]{0}', space=sflag, size = 0x4, scoped, tag = 'scoped memory for tpu_custom_call.1']
    #allocation4 [shape = 's32[1]{0}', space=sflag, size = 0x4, scoped, tag = 'scoped memory for tpu_custom_call.1']
    #allocation5 [shape = 'u8[458752]{0}', space=vmem, size = 0x70000, scoped, tag = 'input window, operand 1, single buffered']
    #allocation6 [shape = 's32[1]{0}', space=sflag, size = 0x4, scoped, tag = 'scoped memory for tpu_custom_call.1']
    #allocation7 [shape = 'u8[3584]{0}', space=vmem, size = 0x1000, scoped, tag = 'input window, operand 2, single buffered']
    #allocation8 [shape = 'u8[2293760]{0}', space=vmem, size = 0x230000, scoped, tag = 'input window, operand 3, single buffered']
    #allocation9 [shape = 's32[1]{0}', space=sflag, size = 0x4, scoped, tag = 'scoped memory for tpu_custom_call.1']
    #allocation10 [shape = 'u8[2560]{0}', space=vmem, size = 0xc00, scoped, tag = 'input window, operand 4, single buffered']
    #allocation11 [shape = 'u8[327680]{0}', space=vmem, size = 0x50000, scoped, tag = 'input window, operand 5, single buffered']
    #allocation12 [shape = 's32[1]{0}', space=sflag, size = 0x4, scoped, tag = 'scoped memory for tpu_custom_call.1']
    #allocation13 [shape = 'u8[512]{0}', space=vmem, size = 0x400, scoped, tag = 'input window, operand 6, single buffered']
    #allocation14 [shape = 'u8[4096]{0}', space=vmem, size = 0x1000, scoped, tag = 'output window, operand 0, single buffered']
    %12 = vsyncpa [#allocation3], 0
    %13 = vsyncpa [#allocation6], 0
    %14 = vsyncpa [#allocation9], 0
    %15 = vsyncpa [#allocation12], 0
    %16 = vsyncpa [#allocation4], 0
    // Predicated region
    $region2: #{tpu_custom_call.1} parent=1 // pred_check
      _
    $region3: #{tpu_custom_call.1} parent=1 // pred_check_branch
      %18 = sbr.rel (0) target = $region5
    $region4: #{tpu_custom_call.1} parent=1 // pred_region
      %s20 = ssub.s32 128, 128
      %21 = vsyncadd [#allocation3], %s20
      %s23 = sshll.u32 [#allocation2], 4
      %s24 = int_to_ptr.vmem [resolvable:$true] %s23
      %26 = dma.hbm_to_vmem [thread:$0]  %s0, 128, %s24, [#allocation3]
    $region5: #{tpu_custom_call.1} parent=1 // pred_fallthru
      _
    // Predicated region
    $region6: #{tpu_custom_call.1} parent=1 // pred_check
      _
    $region7: #{tpu_custom_call.1} parent=1 // pred_check_branch
      %28 = sbr.rel (0) target = $region9
    $region8: #{tpu_custom_call.1} parent=1 // pred_region
      %s30 = ssub.s32 14336, 14336
      %31 = vsyncadd [#allocation6], %s30
      %s32 = sshll.u32 [#allocation5], 4
      %s33 = int_to_ptr.vmem [resolvable:$true] %s32
      %38 = dma.hbm_to_vmem [thread:$0]  %s1, 14336, %s33, [#allocation6], 896, 896, 56
    $region9: #{tpu_custom_call.1} parent=1 // pred_fallthru
      _
    // Predicated region
    $region10: #{tpu_custom_call.1} parent=1 // pred_check
      _
    $region11: #{tpu_custom_call.1} parent=1 // pred_check_branch
      %40 = sbr.rel (0) target = $region13
    $region12: #{tpu_custom_call.1} parent=1 // pred_region
      %s42 = ssub.s32 112, 112
      %43 = vsyncadd [#allocation6], %s42
      %s45 = sshll.u32 [#allocation7], 4
      %s46 = int_to_ptr.vmem [resolvable:$true] %s45
      %48 = dma.hbm_to_vmem [thread:$0]  %s2, 112, %s46, [#allocation6]
    $region13: #{tpu_custom_call.1} parent=1 // pred_fallthru
      _
    // Predicated region
    $region14: #{tpu_custom_call.1} parent=1 // pred_check
      _
    $region15: #{tpu_custom_call.1} parent=1 // pred_check_branch
      %50 = sbr.rel (0) target = $region17
    $region16: #{tpu_custom_call.1} parent=1 // pred_region
      %s52 = ssub.s32 71680, 71680
      %53 = vsyncadd [#allocation9], %s52
      %s54 = sshll.u32 [#allocation8], 4
      %s55 = int_to_ptr.vmem [resolvable:$true] %s54
      %60 = dma.hbm_to_vmem [thread:$0]  %s3, 71680, %s55, [#allocation9], 640, 640, 40
    $region17: #{tpu_custom_call.1} parent=1 // pred_fallthru
      _
    // Predicated region
    $region18: #{tpu_custom_call.1} parent=1 // pred_check
      _
    $region19: #{tpu_custom_call.1} parent=1 // pred_check_branch
      %62 = sbr.rel (0) target = $region21
    $region20: #{tpu_custom_call.1} parent=1 // pred_region
      %s64 = ssub.s32 80, 80
      %65 = vsyncadd [#allocation9], %s64
      %s67 = sshll.u32 [#allocation10], 4
      %s68 = int_to_ptr.vmem [resolvable:$true] %s67
      %70 = dma.hbm_to_vmem [thread:$0]  %s4, 80, %s68, [#allocation9]
    $region21: #{tpu_custom_call.1} parent=1 // pred_fallthru
      _
    // Predicated region
    $region22: #{tpu_custom_call.1} parent=1 // pred_check
      _
    $region23: #{tpu_custom_call.1} parent=1 // pred_check_branch
      %72 = sbr.rel (0) target = $region25
    $region24: #{tpu_custom_call.1} parent=1 // pred_region
      %s74 = ssub.s32 10240, 10240
      %75 = vsyncadd [#allocation12], %s74
      %s76 = sshll.u32 [#allocation11], 4
      %s77 = int_to_ptr.vmem [resolvable:$true] %s76
      %82 = dma.hbm_to_vmem [thread:$0]  %s5, 10240, %s77, [#allocation12], 128, 128, 8
    $region25: #{tpu_custom_call.1} parent=1 // pred_fallthru
      _
    // Predicated region
    $region26: #{tpu_custom_call.1} parent=1 // pred_check
      _
    $region27: #{tpu_custom_call.1} parent=1 // pred_check_branch
      %84 = sbr.rel (0) target = $region29
    $region28: #{tpu_custom_call.1} parent=1 // pred_region
      %s86 = ssub.s32 16, 16
      %87 = vsyncadd [#allocation12], %s86
      %s89 = sshll.u32 [#allocation13], 4
      %s90 = int_to_ptr.vmem [resolvable:$true] %s89
      %92 = dma.hbm_to_vmem [thread:$0]  %s6, 16, %s90, [#allocation12]
    $region29: #{tpu_custom_call.1} parent=1 // pred_fallthru
      _
    // Predicated region
    $region30: #{tpu_custom_call.1} parent=1 // pred_check
      _
    $region31: #{tpu_custom_call.1} parent=1 // pred_check_branch
      %94 = sbr.rel (0) target = $region33
    $region32: #{tpu_custom_call.1} parent=1 // pred_region
      %95 = dma.done [#allocation3], 128
    $region33: #{tpu_custom_call.1} parent=1 // pred_fallthru
      _
    // Predicated region
    $region34: #{tpu_custom_call.1} parent=1 // pred_check
      _
    $region35: #{tpu_custom_call.1} parent=1 // pred_check_branch
      %97 = sbr.rel (0) target = $region37
    $region36: #{tpu_custom_call.1} parent=1 // pred_region
      %98 = dma.done [#allocation6], 14336
    $region37: #{tpu_custom_call.1} parent=1 // pred_fallthru
      _
    // Predicated region
    $region38: #{tpu_custom_call.1} parent=1 // pred_check
      _
    $region39: #{tpu_custom_call.1} parent=1 // pred_check_branch
      %100 = sbr.rel (0) target = $region41
    $region40: #{tpu_custom_call.1} parent=1 // pred_region
      %101 = dma.done [#allocation6], 112
    $region41: #{tpu_custom_call.1} parent=1 // pred_fallthru
      _
    // Predicated region
    $region42: #{tpu_custom_call.1} parent=1 // pred_check
      _
    $region43: #{tpu_custom_call.1} parent=1 // pred_check_branch
      %103 = sbr.rel (0) target = $region45
    $region44: #{tpu_custom_call.1} parent=1 // pred_region
      %104 = dma.done [#allocation9], 71680
    $region45: #{tpu_custom_call.1} parent=1 // pred_fallthru
      _
    // Predicated region
    $region46: #{tpu_custom_call.1} parent=1 // pred_check
      _
    $region47: #{tpu_custom_call.1} parent=1 // pred_check_branch
      %106 = sbr.rel (0) target = $region49
    $region48: #{tpu_custom_call.1} parent=1 // pred_region
      %107 = dma.done [#allocation9], 80
    $region49: #{tpu_custom_call.1} parent=1 // pred_fallthru
      _
    // Predicated region
    $region50: #{tpu_custom_call.1} parent=1 // pred_check
      _
    $region51: #{tpu_custom_call.1} parent=1 // pred_check_branch
      %109 = sbr.rel (0) target = $region53
    $region52: #{tpu_custom_call.1} parent=1 // pred_region
      %110 = dma.done [#allocation12], 10240
    $region53: #{tpu_custom_call.1} parent=1 // pred_fallthru
      _
    // Predicated region
    $region54: #{tpu_custom_call.1} parent=1 // pred_check
      _
    $region55: #{tpu_custom_call.1} parent=1 // pred_check_branch
      %112 = sbr.rel (0) target = $region57
    $region56: #{tpu_custom_call.1} parent=1 // pred_region
      %113 = dma.done [#allocation12], 16
    $region57: #{tpu_custom_call.1} parent=1 // pred_fallthru
      _
    %v114 = vld [vmem:[#allocation2] sm:$0xff]
    %v115 = vld [vmem:[#allocation5] sm:$0xff]
    %v116 = vld [vmem:[#allocation5 + $0x8] sm:$0xff]
    %v117 = vld [vmem:[#allocation5 + $0x10] sm:$0xff]
    %v118 = vld [vmem:[#allocation5 + $0x18] sm:$0xff]
    %v119 = vld [vmem:[#allocation5 + $0x20] sm:$0xff]
    %v120 = vld [vmem:[#allocation5 + $0x28] sm:$0xff]
    %v121 = vld [vmem:[#allocation5 + $0x30] sm:$0xff]
    %v122 = vld [vmem:[#allocation5 + $0x38] sm:$0xff]
    %v123 = vld [vmem:[#allocation5 + $0x40] sm:$0xff]
    %v124 = vld [vmem:[#allocation5 + $0x48] sm:$0xff]
    %v125 = vld [vmem:[#allocation5 + $0x50] sm:$0xff]
    %v126 = vld [vmem:[#allocation5 + $0x58] sm:$0xff]
    %v127 = vld [vmem:[#allocation5 + $0x60] sm:$0xff]
    %v128 = vld [vmem:[#allocation5 + $0x68] sm:$0xff]
    %v129 = vld [vmem:[#allocation5 + $0x70] sm:$0xff]
    %v130 = vld [vmem:[#allocation5 + $0x78] sm:$0xff]
    %v131 = vld [vmem:[#allocation5 + $0x80] sm:$0xff]
    %v132 = vld [vmem:[#allocation5 + $0x88] sm:$0xff]
    %v133 = vld [vmem:[#allocation5 + $0x90] sm:$0xff]
    %v134 = vld [vmem:[#allocation5 + $0x98] sm:$0xff]
    %v135 = vld [vmem:[#allocation5 + $0xa0] sm:$0xff]
    %v136 = vld [vmem:[#allocation5 + $0xa8] sm:$0xff]
    %v137 = vld [vmem:[#allocation5 + $0xb0] sm:$0xff]
    %v138 = vld [vmem:[#allocation5 + $0xb8] sm:$0xff]
    %v139 = vld [vmem:[#allocation5 + $0xc0] sm:$0xff]
    %v140 = vld [vmem:[#allocation5 + $0xc8] sm:$0xff]
    %v141 = vld [vmem:[#allocation5 + $0xd0] sm:$0xff]
    %v142 = vld [vmem:[#allocation5 + $0xd8] sm:$0xff]
    %v143 = vld [vmem:[#allocation5 + $0xe0] sm:$0xff]
    %v144 = vld [vmem:[#allocation5 + $0xe8] sm:$0xff]
    %v145 = vld [vmem:[#allocation5 + $0xf0] sm:$0xff]
    %v146 = vld [vmem:[#allocation5 + $0xf8] sm:$0xff]
    %v147 = vld [vmem:[#allocation5 + $0x100] sm:$0xff]
    %v148 = vld [vmem:[#allocation5 + $0x108] sm:$0xff]
    %v149 = vld [vmem:[#allocation5 + $0x110] sm:$0xff]
    %v150 = vld [vmem:[#allocation5 + $0x118] sm:$0xff]
    %v151 = vld [vmem:[#allocation5 + $0x120] sm:$0xff]
    %v152 = vld [vmem:[#allocation5 + $0x128] sm:$0xff]
    %v153 = vld [vmem:[#allocation5 + $0x130] sm:$0xff]
    %v154 = vld [vmem:[#allocation5 + $0x138] sm:$0xff]
    %v155 = vld [vmem:[#allocation5 + $0x140] sm:$0xff]
    %v156 = vld [vmem:[#allocation5 + $0x148] sm:$0xff]
    %v157 = vld [vmem:[#allocation5 + $0x150] sm:$0xff]
    %v158 = vld [vmem:[#allocation5 + $0x158] sm:$0xff]
    %v159 = vld [vmem:[#allocation5 + $0x160] sm:$0xff]
    %v160 = vld [vmem:[#allocation5 + $0x168] sm:$0xff]
    %v161 = vld [vmem:[#allocation5 + $0x170] sm:$0xff]
    %v162 = vld [vmem:[#allocation5 + $0x178] sm:$0xff]
    %v163 = vld [vmem:[#allocation5 + $0x180] sm:$0xff]
    %v164 = vld [vmem:[#allocation5 + $0x188] sm:$0xff]
    %v165 = vld [vmem:[#allocation5 + $0x190] sm:$0xff]
    %v166 = vld [vmem:[#allocation5 + $0x198] sm:$0xff]
    %v167 = vld [vmem:[#allocation5 + $0x1a0] sm:$0xff]
    %v168 = vld [vmem:[#allocation5 + $0x1a8] sm:$0xff]
    %v169 = vld [vmem:[#allocation5 + $0x1b0] sm:$0xff]
    %v170 = vld [vmem:[#allocation5 + $0x1b8] sm:$0xff]
    %v171 = vld [vmem:[#allocation5 + $0x1c0] sm:$0xff]
    %v172 = vld [vmem:[#allocation5 + $0x1c8] sm:$0xff]
    %v173 = vld [vmem:[#allocation5 + $0x1d0] sm:$0xff]
    %v174 = vld [vmem:[#allocation5 + $0x1d8] sm:$0xff]
    %v175 = vld [vmem:[#allocation5 + $0x1e0] sm:$0xff]
    %v176 = vld [vmem:[#allocation5 + $0x1e8] sm:$0xff]
    %v177 = vld [vmem:[#allocation5 + $0x1f0] sm:$0xff]
    %v178 = vld [vmem:[#allocation5 + $0x1f8] sm:$0xff]
    %v179 = vld [vmem:[#allocation5 + $0x200] sm:$0xff]
    %v180 = vld [vmem:[#allocation5 + $0x208] sm:$0xff]
    %v181 = vld [vmem:[#allocation5 + $0x210] sm:$0xff]
    %v182 = vld [vmem:[#allocation5 + $0x218] sm:$0xff]
    %v183 = vld [vmem:[#allocation5 + $0x220] sm:$0xff]
    %v184 = vld [vmem:[#allocation5 + $0x228] sm:$0xff]
    %v185 = vld [vmem:[#allocation5 + $0x230] sm:$0xff]
    %v186 = vld [vmem:[#allocation5 + $0x238] sm:$0xff]
    %v187 = vld [vmem:[#allocation5 + $0x240] sm:$0xff]
    %v188 = vld [vmem:[#allocation5 + $0x248] sm:$0xff]
    %v189 = vld [vmem:[#allocation5 + $0x250] sm:$0xff]
    %v190 = vld [vmem:[#allocation5 + $0x258] sm:$0xff]
    %v191 = vld [vmem:[#allocation5 + $0x260] sm:$0xff]
    %v192 = vld [vmem:[#allocation5 + $0x268] sm:$0xff]
    %v193 = vld [vmem:[#allocation5 + $0x270] sm:$0xff]
    %v194 = vld [vmem:[#allocation5 + $0x278] sm:$0xff]
    %v195 = vld [vmem:[#allocation5 + $0x280] sm:$0xff]
    %v196 = vld [vmem:[#allocation5 + $0x288] sm:$0xff]
    %v197 = vld [vmem:[#allocation5 + $0x290] sm:$0xff]
    %v198 = vld [vmem:[#allocation5 + $0x298] sm:$0xff]
    %v199 = vld [vmem:[#allocation5 + $0x2a0] sm:$0xff]
    %v200 = vld [vmem:[#allocation5 + $0x2a8] sm:$0xff]
    %v201 = vld [vmem:[#allocation5 + $0x2b0] sm:$0xff]
    %v202 = vld [vmem:[#allocation5 + $0x2b8] sm:$0xff]
    %v203 = vld [vmem:[#allocation5 + $0x2c0] sm:$0xff]
    %v204 = vld [vmem:[#allocation5 + $0x2c8] sm:$0xff]
    %v205 = vld [vmem:[#allocation5 + $0x2d0] sm:$0xff]
    %v206 = vld [vmem:[#allocation5 + $0x2d8] sm:$0xff]
    %v207 = vld [vmem:[#allocation5 + $0x2e0] sm:$0xff]
    %v208 = vld [vmem:[#allocation5 + $0x2e8] sm:$0xff]
    %v209 = vld [vmem:[#allocation5 + $0x2f0] sm:$0xff]
    %v210 = vld [vmem:[#allocation5 + $0x2f8] sm:$0xff]
    %v211 = vld [vmem:[#allocation5 + $0x300] sm:$0xff]
    %v212 = vld [vmem:[#allocation5 + $0x308] sm:$0xff]
    %v213 = vld [vmem:[#allocation5 + $0x310] sm:$0xff]
    %v214 = vld [vmem:[#allocation5 + $0x318] sm:$0xff]
    %v215 = vld [vmem:[#allocation5 + $0x320] sm:$0xff]
    %v216 = vld [vmem:[#allocation5 + $0x328] sm:$0xff]
    %v217 = vld [vmem:[#allocation5 + $0x330] sm:$0xff]
    %v218 = vld [vmem:[#allocation5 + $0x338] sm:$0xff]
    %v219 = vld [vmem:[#allocation5 + $0x340] sm:$0xff]
    %v220 = vld [vmem:[#allocation5 + $0x348] sm:$0xff]
    %v221 = vld [vmem:[#allocation5 + $0x350] sm:$0xff]
    %v222 = vld [vmem:[#allocation5 + $0x358] sm:$0xff]
    %v223 = vld [vmem:[#allocation5 + $0x360] sm:$0xff]
    %v224 = vld [vmem:[#allocation5 + $0x368] sm:$0xff]
    %v225 = vld [vmem:[#allocation5 + $0x370] sm:$0xff]
    %v226 = vld [vmem:[#allocation5 + $0x378] sm:$0xff]
    %v227 = vld [vmem:[#allocation7] sm:$0xff]
    %v229 = vlaneseq
    %v230 = vshrl.u32 %v229, 7
    %v231 = vsub.s32 0, %v230
    %v232 = vrot.slane %v227, %v231
    %v233 = vlaneseq
    %v234 = vshrl.u32 %v233, 7
    %v235 = vsub.s32 1, %v234
    %v236 = vrot.slane %v227, %v235
    %v237 = vlaneseq
    %v238 = vshrl.u32 %v237, 7
    %v239 = vsub.s32 2, %v238
    %v240 = vrot.slane %v227, %v239
    %v241 = vlaneseq
    %v242 = vshrl.u32 %v241, 7
    %v243 = vsub.s32 3, %v242
    %v244 = vrot.slane %v227, %v243
    %v245 = vlaneseq
    %v246 = vshrl.u32 %v245, 7
    %v247 = vsub.s32 4, %v246
    %v248 = vrot.slane %v227, %v247
    %v249 = vlaneseq
    %v250 = vshrl.u32 %v249, 7
    %v251 = vsub.s32 5, %v250
    %v252 = vrot.slane %v227, %v251
    %v253 = vlaneseq
    %v254 = vshrl.u32 %v253, 7
    %v255 = vsub.s32 6, %v254
    %v256 = vrot.slane %v227, %v255
    %264 = vmatprep.subr.mxu0 %v116
    %265 = vmatpush1.msra.mxu0 %v115
    %266 = vmatprep.subr.mxu0 %v123
    %267 = vmatpush1.msra.mxu0 %v122
    %268 = vmatprep.subr.mxu0 %v130
    %269 = vmatpush1.msra.mxu0 %v129
    %270 = vmatprep.subr.mxu0 %v137
    %271 = vmatpush1.msra.mxu0 %v136
    %272 = vmatprep.subr.mxu0 %v144
    %273 = vmatpush1.msra.mxu0 %v143
    %274 = vmatprep.subr.mxu0 %v151
    %275 = vmatpush1.msra.mxu0 %v150
    %276 = vmatprep.subr.mxu0 %v158
    %277 = vmatpush1.msra.mxu0 %v157
    %278 = vmatprep.subr.mxu0 %v165
    %279 = vmatpush1.msra.mxu0 %v164
    %280 = vmatprep.subr.mxu0 %v172
    %281 = vmatpush1.msra.mxu0 %v171
    %282 = vmatprep.subr.mxu0 %v179
    %283 = vmatpush1.msra.mxu0 %v178
    %284 = vmatprep.subr.mxu0 %v186
    %285 = vmatpush1.msra.mxu0 %v185
    %286 = vmatprep.subr.mxu0 %v193
    %287 = vmatpush1.msra.mxu0 %v192
    %288 = vmatprep.subr.mxu0 %v200
    %289 = vmatpush1.msra.mxu0 %v199
    %290 = vmatprep.subr.mxu0 %v207
    %291 = vmatpush1.msra.mxu0 %v206
    %292 = vmatprep.subr.mxu0 %v214
    %293 = vmatpush1.msra.mxu0 %v213
    %294 = vmatprep.subr.mxu0 %v221
    %295 = vmatpush1.msra.mxu0 %v220
    %296 = vmatprep.subr.mxu0 0.0
    %297 = vmatpush1.msra.mxu0 0.0
    %298 = vmatprep.subr.mxu0 0.0
    %299 = vmatpush1.msra.mxu0 0.0
    %300 = vmatprep.subr.mxu0 0.0
    %301 = vmatpush1.msra.mxu0 0.0
    %302 = vmatprep.subr.mxu0 0.0
    %303 = vmatpush1.msra.mxu0 0.0
    %304 = vmatprep.subr.mxu0 0.0
    %305 = vmatpush1.msra.mxu0 0.0
    %306 = vmatprep.subr.mxu0 0.0
    %307 = vmatpush1.msra.mxu0 0.0
    %308 = vmatprep.subr.mxu0 0.0
    %309 = vmatpush1.msra.mxu0 0.0
    %310 = vmatprep.subr.mxu0 0.0
    %311 = vmatpush1.msra.mxu0 0.0
    %312 = vmatprep.subr.mxu0 0.0
    %313 = vmatpush1.msra.mxu0 0.0
    %314 = vmatprep.subr.mxu0 0.0
    %315 = vmatpush1.msra.mxu0 0.0
    %316 = vmatprep.subr.mxu0 0.0
    %317 = vmatpush1.msra.mxu0 0.0
    %318 = vmatprep.subr.mxu0 0.0
    %319 = vmatpush1.msra.mxu0 0.0
    %320 = vmatprep.subr.mxu0 0.0
    %321 = vmatpush1.msra.mxu0 0.0
    %322 = vmatprep.subr.mxu0 0.0
    %323 = vmatpush1.msra.mxu0 0.0
    %324 = vmatprep.subr.mxu0 0.0
    %325 = vmatpush1.msra.mxu0 0.0
    %326 = vmatprep.subr.mxu0 0.0
    %327 = vmatpush1.msra.mxu0 0.0
    %328 = vmatprep.mubr.f32.mxu0 0.0
    %329 = vmatmul.mubr.f32.gmra.mrb[0].mxu0 %v114
    %v330 = vpop.f32.mrb[0].mxu0
    %v331 = vadd.f32 %v232, %v330
    %v332 = vpop.f32.mrb[0].mxu0
    %v333 = vadd.f32 %v236, %v332
    %334 = vdwg.mxu0
    %335 = vmatprep.subr.mxu0 %v118
    %336 = vmatpush1.msra.mxu0 %v117
    %337 = vmatprep.subr.mxu0 %v125
    %338 = vmatpush1.msra.mxu0 %v124
    %339 = vmatprep.subr.mxu0 %v132
    %340 = vmatpush1.msra.mxu0 %v131
    %341 = vmatprep.subr.mxu0 %v139
    %342 = vmatpush1.msra.mxu0 %v138
    %343 = vmatprep.subr.mxu0 %v146
    %344 = vmatpush1.msra.mxu0 %v145
    %345 = vmatprep.subr.mxu0 %v153
    %346 = vmatpush1.msra.mxu0 %v152
    %347 = vmatprep.subr.mxu0 %v160
    %348 = vmatpush1.msra.mxu0 %v159
    %349 = vmatprep.subr.mxu0 %v167
    %350 = vmatpush1.msra.mxu0 %v166
    %351 = vmatprep.subr.mxu0 %v174
    %352 = vmatpush1.msra.mxu0 %v173
    %353 = vmatprep.subr.mxu0 %v181
    %354 = vmatpush1.msra.mxu0 %v180
    %355 = vmatprep.subr.mxu0 %v188
    %356 = vmatpush1.msra.mxu0 %v187
    %357 = vmatprep.subr.mxu0 %v195
    %358 = vmatpush1.msra.mxu0 %v194
    %359 = vmatprep.subr.mxu0 %v202
    %360 = vmatpush1.msra.mxu0 %v201
    %361 = vmatprep.subr.mxu0 %v209
    %362 = vmatpush1.msra.mxu0 %v208
    %363 = vmatprep.subr.mxu0 %v216
    %364 = vmatpush1.msra.mxu0 %v215
    %365 = vmatprep.subr.mxu0 %v223
    %366 = vmatpush1.msra.mxu0 %v222
    %367 = vmatprep.subr.mxu0 0.0
    %368 = vmatpush1.msra.mxu0 0.0
    %369 = vmatprep.subr.mxu0 0.0
    %370 = vmatpush1.msra.mxu0 0.0
    %371 = vmatprep.subr.mxu0 0.0
    %372 = vmatpush1.msra.mxu0 0.0
    %373 = vmatprep.subr.mxu0 0.0
    %374 = vmatpush1.msra.mxu0 0.0
    %375 = vmatprep.subr.mxu0 0.0
    %376 = vmatpush1.msra.mxu0 0.0
    %377 = vmatprep.subr.mxu0 0.0
    %378 = vmatpush1.msra.mxu0 0.0
    %379 = vmatprep.subr.mxu0 0.0
    %380 = vmatpush1.msra.mxu0 0.0
    %381 = vmatprep.subr.mxu0 0.0
    %382 = vmatpush1.msra.mxu0 0.0
    %383 = vmatprep.subr.mxu0 0.0
    %384 = vmatpush1.msra.mxu0 0.0
    %385 = vmatprep.subr.mxu0 0.0
    %386 = vmatpush1.msra.mxu0 0.0
    %387 = vmatprep.subr.mxu0 0.0
    %388 = vmatpush1.msra.mxu0 0.0
    %389 = vmatprep.subr.mxu0 0.0
    %390 = vmatpush1.msra.mxu0 0.0
    %391 = vmatprep.subr.mxu0 0.0
    %392 = vmatpush1.msra.mxu0 0.0
    %393 = vmatprep.subr.mxu0 0.0
    %394 = vmatpush1.msra.mxu0 0.0
    %395 = vmatprep.subr.mxu0 0.0
    %396 = vmatpush1.msra.mxu0 0.0
    %397 = vmatprep.subr.mxu0 0.0
    %398 = vmatpush1.msra.mxu0 0.0
    %399 = vmatprep.mubr.f32.mxu0 0.0
    %400 = vmatmul.mubr.f32.gmra.mrb[0].mxu0 %v114
    %v401 = vpop.f32.mrb[0].mxu0
    %v402 = vadd.f32 %v240, %v401
    %v403 = vpop.f32.mrb[0].mxu0
    %v404 = vadd.f32 %v244, %v403
    %405 = vdwg.mxu0
    %406 = vmatprep.subr.mxu0 %v120
    %407 = vmatpush1.msra.mxu0 %v119
    %408 = vmatprep.subr.mxu0 %v127
    %409 = vmatpush1.msra.mxu0 %v126
    %410 = vmatprep.subr.mxu0 %v134
    %411 = vmatpush1.msra.mxu0 %v133
    %412 = vmatprep.subr.mxu0 %v141
    %413 = vmatpush1.msra.mxu0 %v140
    %414 = vmatprep.subr.mxu0 %v148
    %415 = vmatpush1.msra.mxu0 %v147
    %416 = vmatprep.subr.mxu0 %v155
    %417 = vmatpush1.msra.mxu0 %v154
    %418 = vmatprep.subr.mxu0 %v162
    %419 = vmatpush1.msra.mxu0 %v161
    %420 = vmatprep.subr.mxu0 %v169
    %421 = vmatpush1.msra.mxu0 %v168
    %422 = vmatprep.subr.mxu0 %v176
    %423 = vmatpush1.msra.mxu0 %v175
    %424 = vmatprep.subr.mxu0 %v183
    %425 = vmatpush1.msra.mxu0 %v182
    %426 = vmatprep.subr.mxu0 %v190
    %427 = vmatpush1.msra.mxu0 %v189
    %428 = vmatprep.subr.mxu0 %v197
    %429 = vmatpush1.msra.mxu0 %v196
    %430 = vmatprep.subr.mxu0 %v204
    %431 = vmatpush1.msra.mxu0 %v203
    %432 = vmatprep.subr.mxu0 %v211
    %433 = vmatpush1.msra.mxu0 %v210
    %434 = vmatprep.subr.mxu0 %v218
    %435 = vmatpush1.msra.mxu0 %v217
    %436 = vmatprep.subr.mxu0 %v225
    %437 = vmatpush1.msra.mxu0 %v224
    %438 = vmatprep.subr.mxu0 0.0
    %439 = vmatpush1.msra.mxu0 0.0
    %440 = vmatprep.subr.mxu0 0.0
    %441 = vmatpush1.msra.mxu0 0.0
    %442 = vmatprep.subr.mxu0 0.0
    %443 = vmatpush1.msra.mxu0 0.0
    %444 = vmatprep.subr.mxu0 0.0
    %445 = vmatpush1.msra.mxu0 0.0
    %446 = vmatprep.subr.mxu0 0.0
    %447 = vmatpush1.msra.mxu0 0.0
    %448 = vmatprep.subr.mxu0 0.0
    %449 = vmatpush1.msra.mxu0 0.0
    %450 = vmatprep.subr.mxu0 0.0
    %451 = vmatpush1.msra.mxu0 0.0
    %452 = vmatprep.subr.mxu0 0.0
    %453 = vmatpush1.msra.mxu0 0.0
    %454 = vmatprep.subr.mxu0 0.0
    %455 = vmatpush1.msra.mxu0 0.0
    %456 = vmatprep.subr.mxu0 0.0
    %457 = vmatpush1.msra.mxu0 0.0
    %458 = vmatprep.subr.mxu0 0.0
    %459 = vmatpush1.msra.mxu0 0.0
    %460 = vmatprep.subr.mxu0 0.0
    %461 = vmatpush1.msra.mxu0 0.0
    %462 = vmatprep.subr.mxu0 0.0
    %463 = vmatpush1.msra.mxu0 0.0
    %464 = vmatprep.subr.mxu0 0.0
    %465 = vmatpush1.msra.mxu0 0.0
    %466 = vmatprep.subr.mxu0 0.0
    %467 = vmatpush1.msra.mxu0 0.0
    %468 = vmatprep.subr.mxu0 0.0
    %469 = vmatpush1.msra.mxu0 0.0
    %470 = vmatprep.mubr.f32.mxu0 0.0
    %471 = vmatmul.mubr.f32.gmra.mrb[0].mxu0 %v114
    %v472 = vpop.f32.mrb[0].mxu0
    %v473 = vadd.f32 %v248, %v472
    %v474 = vpop.f32.mrb[0].mxu0
    %v475 = vadd.f32 %v252, %v474
    %476 = vdwg.mxu0
    %477 = vmatprep.subr.mxu0 0.0
    %478 = vmatpush1.msra.mxu0 %v121
    %479 = vmatprep.subr.mxu0 0.0
    %480 = vmatpush1.msra.mxu0 %v128
    %481 = vmatprep.subr.mxu0 0.0
    %482 = vmatpush1.msra.mxu0 %v135
    %483 = vmatprep.subr.mxu0 0.0
    %484 = vmatpush1.msra.mxu0 %v142
    %485 = vmatprep.subr.mxu0 0.0
    %486 = vmatpush1.msra.mxu0 %v149
    %487 = vmatprep.subr.mxu0 0.0
    %488 = vmatpush1.msra.mxu0 %v156
    %489 = vmatprep.subr.mxu0 0.0
    %490 = vmatpush1.msra.mxu0 %v163
    %491 = vmatprep.subr.mxu0 0.0
    %492 = vmatpush1.msra.mxu0 %v170
    %493 = vmatprep.subr.mxu0 0.0
    %494 = vmatpush1.msra.mxu0 %v177
    %495 = vmatprep.subr.mxu0 0.0
    %496 = vmatpush1.msra.mxu0 %v184
    %497 = vmatprep.subr.mxu0 0.0
    %498 = vmatpush1.msra.mxu0 %v191
    %499 = vmatprep.subr.mxu0 0.0
    %500 = vmatpush1.msra.mxu0 %v198
    %501 = vmatprep.subr.mxu0 0.0
    %502 = vmatpush1.msra.mxu0 %v205
    %503 = vmatprep.subr.mxu0 0.0
    %504 = vmatpush1.msra.mxu0 %v212
    %505 = vmatprep.subr.mxu0 0.0
    %506 = vmatpush1.msra.mxu0 %v219
    %507 = vmatprep.subr.mxu0 0.0
    %508 = vmatpush1.msra.mxu0 %v226
    %509 = vmatprep.subr.mxu0 0.0
    %510 = vmatpush1.msra.mxu0 0.0
    %511 = vmatprep.subr.mxu0 0.0
    %512 = vmatpush1.msra.mxu0 0.0
    %513 = vmatprep.subr.mxu0 0.0
    %514 = vmatpush1.msra.mxu0 0.0
    %515 = vmatprep.subr.mxu0 0.0
    %516 = vmatpush1.msra.mxu0 0.0
    %517 = vmatprep.subr.mxu0 0.0
    %518 = vmatpush1.msra.mxu0 0.0
    %519 = vmatprep.subr.mxu0 0.0
    %520 = vmatpush1.msra.mxu0 0.0
    %521 = vmatprep.subr.mxu0 0.0
    %522 = vmatpush1.msra.mxu0 0.0
    %523 = vmatprep.subr.mxu0 0.0
    %524 = vmatpush1.msra.mxu0 0.0
    %525 = vmatprep.subr.mxu0 0.0
    %526 = vmatpush1.msra.mxu0 0.0
    %527 = vmatprep.subr.mxu0 0.0
    %528 = vmatpush1.msra.mxu0 0.0
    %529 = vmatprep.subr.mxu0 0.0
    %530 = vmatpush1.msra.mxu0 0.0
    %531 = vmatprep.subr.mxu0 0.0
    %532 = vmatpush1.msra.mxu0 0.0
    %533 = vmatprep.subr.mxu0 0.0
    %534 = vmatpush1.msra.mxu0 0.0
    %535 = vmatprep.subr.mxu0 0.0
    %536 = vmatpush1.msra.mxu0 0.0
    %537 = vmatprep.subr.mxu0 0.0
    %538 = vmatpush1.msra.mxu0 0.0
    %539 = vmatprep.subr.mxu0 0.0
    %540 = vmatpush1.msra.mxu0 0.0
    %541 = vmatprep.mubr.f32.mxu0 0.0
    %542 = vmatmul.mubr.f32.gmra.mrb[0].mxu0 %v114
    %v543 = vpop.f32.mrb[0].mxu0
    %v544 = vadd.f32 %v256, %v543
    %v545 = vpop.f32.mrb[0].mxu0
    %546 = vdwg.mxu0
    %v547 = vmax.f32 %v331, 0.0
    %v548 = vmax.f32 %v333, 0.0
    %v549 = vmax.f32 %v402, 0.0
    %v550 = vmax.f32 %v404, 0.0
    %v551 = vmax.f32 %v473, 0.0
    %v552 = vmax.f32 %v475, 0.0
    %v553 = vmax.f32 %v544, 0.0
    %v554 = vld [vmem:[#allocation8] sm:$0xff]
    %v555 = vld [vmem:[#allocation8 + $0x8] sm:$0xff]
    %v556 = vld [vmem:[#allocation8 + $0x10] sm:$0xff]
    %v557 = vld [vmem:[#allocation8 + $0x18] sm:$0xff]
    %v558 = vld [vmem:[#allocation8 + $0x20] sm:$0xff]
    %v559 = vld [vmem:[#allocation8 + $0x28] sm:$0xff]
    %v560 = vld [vmem:[#allocation8 + $0x30] sm:$0xff]
    %v561 = vld [vmem:[#allocation8 + $0x38] sm:$0xff]
    %v562 = vld [vmem:[#allocation8 + $0x40] sm:$0xff]
    %v563 = vld [vmem:[#allocation8 + $0x48] sm:$0xff]
    %v564 = vld [vmem:[#allocation8 + $0x50] sm:$0xff]
    %v565 = vld [vmem:[#allocation8 + $0x58] sm:$0xff]
    %v566 = vld [vmem:[#allocation8 + $0x60] sm:$0xff]
    %v567 = vld [vmem:[#allocation8 + $0x68] sm:$0xff]
    %v568 = vld [vmem:[#allocation8 + $0x70] sm:$0xff]
    %v569 = vld [vmem:[#allocation8 + $0x78] sm:$0xff]
    %v570 = vld [vmem:[#allocation8 + $0x80] sm:$0xff]
    %v571 = vld [vmem:[#allocation8 + $0x88] sm:$0xff]
    %v572 = vld [vmem:[#allocation8 + $0x90] sm:$0xff]
    %v573 = vld [vmem:[#allocation8 + $0x98] sm:$0xff]
    %v574 = vld [vmem:[#allocation8 + $0xa0] sm:$0xff]
    %v575 = vld [vmem:[#allocation8 + $0xa8] sm:$0xff]
    %v576 = vld [vmem:[#allocation8 + $0xb0] sm:$0xff]
    %v577 = vld [vmem:[#allocation8 + $0xb8] sm:$0xff]
    %v578 = vld [vmem:[#allocation8 + $0xc0] sm:$0xff]
    %v579 = vld [vmem:[#allocation8 + $0xc8] sm:$0xff]
    %v580 = vld [vmem:[#allocation8 + $0xd0] sm:$0xff]
    %v581 = vld [vmem:[#allocation8 + $0xd8] sm:$0xff]
    %v582 = vld [vmem:[#allocation8 + $0xe0] sm:$0xff]
    %v583 = vld [vmem:[#allocation8 + $0xe8] sm:$0xff]
    %v584 = vld [vmem:[#allocation8 + $0xf0] sm:$0xff]
    %v585 = vld [vmem:[#allocation8 + $0xf8] sm:$0xff]
    %v586 = vld [vmem:[#allocation8 + $0x100] sm:$0xff]
    %v587 = vld [vmem:[#allocation8 + $0x108] sm:$0xff]
    %v588 = vld [vmem:[#allocation8 + $0x110] sm:$0xff]
    %v589 = vld [vmem:[#allocation8 + $0x118] sm:$0xff]
    %v590 = vld [vmem:[#allocation8 + $0x120] sm:$0xff]
    %v591 = vld [vmem:[#allocation8 + $0x128] sm:$0xff]
    %v592 = vld [vmem:[#allocation8 + $0x130] sm:$0xff]
    %v593 = vld [vmem:[#allocation8 + $0x138] sm:$0xff]
    %v594 = vld [vmem:[#allocation8 + $0x140] sm:$0xff]
    %v595 = vld [vmem:[#allocation8 + $0x148] sm:$0xff]
    %v596 = vld [vmem:[#allocation8 + $0x150] sm:$0xff]
    %v597 = vld [vmem:[#allocation8 + $0x158] sm:$0xff]
    %v598 = vld [vmem:[#allocation8 + $0x160] sm:$0xff]
    %v599 = vld [vmem:[#allocation8 + $0x168] sm:$0xff]
    %v600 = vld [vmem:[#allocation8 + $0x170] sm:$0xff]
    %v601 = vld [vmem:[#allocation8 + $0x178] sm:$0xff]
    %v602 = vld [vmem:[#allocation8 + $0x180] sm:$0xff]
    %v603 = vld [vmem:[#allocation8 + $0x188] sm:$0xff]
    %v604 = vld [vmem:[#allocation8 + $0x190] sm:$0xff]
    %v605 = vld [vmem:[#allocation8 + $0x198] sm:$0xff]
    %v606 = vld [vmem:[#allocation8 + $0x1a0] sm:$0xff]
    %v607 = vld [vmem:[#allocation8 + $0x1a8] sm:$0xff]
    %v608 = vld [vmem:[#allocation8 + $0x1b0] sm:$0xff]
    %v609 = vld [vmem:[#allocation8 + $0x1b8] sm:$0xff]
    %v610 = vld [vmem:[#allocation8 + $0x1c0] sm:$0xff]
    %v611 = vld [vmem:[#allocation8 + $0x1c8] sm:$0xff]
    %v612 = vld [vmem:[#allocation8 + $0x1d0] sm:$0xff]
    %v613 = vld [vmem:[#allocation8 + $0x1d8] sm:$0xff]
    %v614 = vld [vmem:[#allocation8 + $0x1e0] sm:$0xff]
    %v615 = vld [vmem:[#allocation8 + $0x1e8] sm:$0xff]
    %v616 = vld [vmem:[#allocation8 + $0x1f0] sm:$0xff]
    %v617 = vld [vmem:[#allocation8 + $0x1f8] sm:$0xff]
    %v618 = vld [vmem:[#allocation8 + $0x200] sm:$0xff]
    %v619 = vld [vmem:[#allocation8 + $0x208] sm:$0xff]
    %v620 = vld [vmem:[#allocation8 + $0x210] sm:$0xff]
    %v621 = vld [vmem:[#allocation8 + $0x218] sm:$0xff]
    %v622 = vld [vmem:[#allocation8 + $0x220] sm:$0xff]
    %v623 = vld [vmem:[#allocation8 + $0x228] sm:$0xff]
    %v624 = vld [vmem:[#allocation8 + $0x230] sm:$0xff]
    %v625 = vld [vmem:[#allocation8 + $0x238] sm:$0xff]
    %v626 = vld [vmem:[#allocation8 + $0x240] sm:$0xff]
    %v627 = vld [vmem:[#allocation8 + $0x248] sm:$0xff]
    %v628 = vld [vmem:[#allocation8 + $0x250] sm:$0xff]
    %v629 = vld [vmem:[#allocation8 + $0x258] sm:$0xff]
    %v630 = vld [vmem:[#allocation8 + $0x260] sm:$0xff]
    %v631 = vld [vmem:[#allocation8 + $0x268] sm:$0xff]
    %v632 = vld [vmem:[#allocation8 + $0x270] sm:$0xff]
    %v633 = vld [vmem:[#allocation8 + $0x278] sm:$0xff]
    %v634 = vld [vmem:[#allocation8 + $0x280] sm:$0xff]
    %v635 = vld [vmem:[#allocation8 + $0x288] sm:$0xff]
    %v636 = vld [vmem:[#allocation8 + $0x290] sm:$0xff]
    %v637 = vld [vmem:[#allocation8 + $0x298] sm:$0xff]
    %v638 = vld [vmem:[#allocation8 + $0x2a0] sm:$0xff]
    %v639 = vld [vmem:[#allocation8 + $0x2a8] sm:$0xff]
    %v640 = vld [vmem:[#allocation8 + $0x2b0] sm:$0xff]
    %v641 = vld [vmem:[#allocation8 + $0x2b8] sm:$0xff]
    %v642 = vld [vmem:[#allocation8 + $0x2c0] sm:$0xff]
    %v643 = vld [vmem:[#allocation8 + $0x2c8] sm:$0xff]
    %v644 = vld [vmem:[#allocation8 + $0x2d0] sm:$0xff]
    %v645 = vld [vmem:[#allocation8 + $0x2d8] sm:$0xff]
    %v646 = vld [vmem:[#allocation8 + $0x2e0] sm:$0xff]
    %v647 = vld [vmem:[#allocation8 + $0x2e8] sm:$0xff]
    %v648 = vld [vmem:[#allocation8 + $0x2f0] sm:$0xff]
    %v649 = vld [vmem:[#allocation8 + $0x2f8] sm:$0xff]
    %v650 = vld [vmem:[#allocation8 + $0x300] sm:$0xff]
    %v651 = vld [vmem:[#allocation8 + $0x308] sm:$0xff]
    %v652 = vld [vmem:[#allocation8 + $0x310] sm:$0xff]
    %v653 = vld [vmem:[#allocation8 + $0x318] sm:$0xff]
    %v654 = vld [vmem:[#allocation8 + $0x320] sm:$0xff]
    %v655 = vld [vmem:[#allocation8 + $0x328] sm:$0xff]
    %v656 = vld [vmem:[#allocation8 + $0x330] sm:$0xff]
    %v657 = vld [vmem:[#allocation8 + $0x338] sm:$0xff]
    %v658 = vld [vmem:[#allocation8 + $0x340] sm:$0xff]
    %v659 = vld [vmem:[#allocation8 + $0x348] sm:$0xff]
    %v660 = vld [vmem:[#allocation8 + $0x350] sm:$0xff]
    %v661 = vld [vmem:[#allocation8 + $0x358] sm:$0xff]
    %v662 = vld [vmem:[#allocation8 + $0x360] sm:$0xff]
    %v663 = vld [vmem:[#allocation8 + $0x368] sm:$0xff]
    %v664 = vld [vmem:[#allocation8 + $0x370] sm:$0xff]
    %v665 = vld [vmem:[#allocation8 + $0x378] sm:$0xff]
    %v666 = vld [vmem:[#allocation8 + $0x380] sm:$0xff]
    %v667 = vld [vmem:[#allocation8 + $0x388] sm:$0xff]
    %v668 = vld [vmem:[#allocation8 + $0x390] sm:$0xff]
    %v669 = vld [vmem:[#allocation8 + $0x398] sm:$0xff]
    %v670 = vld [vmem:[#allocation8 + $0x3a0] sm:$0xff]
    %v671 = vld [vmem:[#allocation8 + $0x3a8] sm:$0xff]
    %v672 = vld [vmem:[#allocation8 + $0x3b0] sm:$0xff]
    %v673 = vld [vmem:[#allocation8 + $0x3b8] sm:$0xff]
    %v674 = vld [vmem:[#allocation8 + $0x3c0] sm:$0xff]
    %v675 = vld [vmem:[#allocation8 + $0x3c8] sm:$0xff]
    %v676 = vld [vmem:[#allocation8 + $0x3d0] sm:$0xff]
    %v677 = vld [vmem:[#allocation8 + $0x3d8] sm:$0xff]
    %v678 = vld [vmem:[#allocation8 + $0x3e0] sm:$0xff]
    %v679 = vld [vmem:[#allocation8 + $0x3e8] sm:$0xff]
    %v680 = vld [vmem:[#allocation8 + $0x3f0] sm:$0xff]
    %v681 = vld [vmem:[#allocation8 + $0x3f8] sm:$0xff]
    %v682 = vld [vmem:[#allocation8 + $0x400] sm:$0xff]
    %v683 = vld [vmem:[#allocation8 + $0x408] sm:$0xff]
    %v684 = vld [vmem:[#allocation8 + $0x410] sm:$0xff]
    %v685 = vld [vmem:[#allocation8 + $0x418] sm:$0xff]
    %v686 = vld [vmem:[#allocation8 + $0x420] sm:$0xff]
    %v687 = vld [vmem:[#allocation8 + $0x428] sm:$0xff]
    %v688 = vld [vmem:[#allocation8 + $0x430] sm:$0xff]
    %v689 = vld [vmem:[#allocation8 + $0x438] sm:$0xff]
    %v690 = vld [vmem:[#allocation8 + $0x440] sm:$0xff]
    %v691 = vld [vmem:[#allocation8 + $0x448] sm:$0xff]
    %v692 = vld [vmem:[#allocation8 + $0x450] sm:$0xff]
    %v693 = vld [vmem:[#allocation8 + $0x458] sm:$0xff]
    %v694 = vld [vmem:[#allocation8 + $0x460] sm:$0xff]
    %v695 = vld [vmem:[#allocation8 + $0x468] sm:$0xff]
    %v696 = vld [vmem:[#allocation8 + $0x470] sm:$0xff]
    %v697 = vld [vmem:[#allocation8 + $0x478] sm:$0xff]
    %v698 = vld [vmem:[#allocation8 + $0x480] sm:$0xff]
    %v699 = vld [vmem:[#allocation8 + $0x488] sm:$0xff]
    %v700 = vld [vmem:[#allocation8 + $0x490] sm:$0xff]
    %v701 = vld [vmem:[#allocation8 + $0x498] sm:$0xff]
    %v702 = vld [vmem:[#allocation8 + $0x4a0] sm:$0xff]
    %v703 = vld [vmem:[#allocation8 + $0x4a8] sm:$0xff]
    %v704 = vld [vmem:[#allocation8 + $0x4b0] sm:$0xff]
    %v705 = vld [vmem:[#allocation8 + $0x4b8] sm:$0xff]
    %v706 = vld [vmem:[#allocation8 + $0x4c0] sm:$0xff]
    %v707 = vld [vmem:[#allocation8 + $0x4c8] sm:$0xff]
    %v708 = vld [vmem:[#allocation8 + $0x4d0] sm:$0xff]
    %v709 = vld [vmem:[#allocation8 + $0x4d8] sm:$0xff]
    %v710 = vld [vmem:[#allocation8 + $0x4e0] sm:$0xff]
    %v711 = vld [vmem:[#allocation8 + $0x4e8] sm:$0xff]
    %v712 = vld [vmem:[#allocation8 + $0x4f0] sm:$0xff]
    %v713 = vld [vmem:[#allocation8 + $0x4f8] sm:$0xff]
    %v714 = vld [vmem:[#allocation8 + $0x500] sm:$0xff]
    %v715 = vld [vmem:[#allocation8 + $0x508] sm:$0xff]
    %v716 = vld [vmem:[#allocation8 + $0x510] sm:$0xff]
    %v717 = vld [vmem:[#allocation8 + $0x518] sm:$0xff]
    %v718 = vld [vmem:[#allocation8 + $0x520] sm:$0xff]
    %v719 = vld [vmem:[#allocation8 + $0x528] sm:$0xff]
    %v720 = vld [vmem:[#allocation8 + $0x530] sm:$0xff]
    %v721 = vld [vmem:[#allocation8 + $0x538] sm:$0xff]
    %v722 = vld [vmem:[#allocation8 + $0x540] sm:$0xff]
    %v723 = vld [vmem:[#allocation8 + $0x548] sm:$0xff]
    %v724 = vld [vmem:[#allocation8 + $0x550] sm:$0xff]
    %v725 = vld [vmem:[#allocation8 + $0x558] sm:$0xff]
    %v726 = vld [vmem:[#allocation8 + $0x560] sm:$0xff]
    %v727 = vld [vmem:[#allocation8 + $0x568] sm:$0xff]
    %v728 = vld [vmem:[#allocation8 + $0x570] sm:$0xff]
    %v729 = vld [vmem:[#allocation8 + $0x578] sm:$0xff]
    %v730 = vld [vmem:[#allocation8 + $0x580] sm:$0xff]
    %v731 = vld [vmem:[#allocation8 + $0x588] sm:$0xff]
    %v732 = vld [vmem:[#allocation8 + $0x590] sm:$0xff]
    %v733 = vld [vmem:[#allocation8 + $0x598] sm:$0xff]
    %v734 = vld [vmem:[#allocation8 + $0x5a0] sm:$0xff]
    %v735 = vld [vmem:[#allocation8 + $0x5a8] sm:$0xff]
    %v736 = vld [vmem:[#allocation8 + $0x5b0] sm:$0xff]
    %v737 = vld [vmem:[#allocation8 + $0x5b8] sm:$0xff]
    %v738 = vld [vmem:[#allocation8 + $0x5c0] sm:$0xff]
    %v739 = vld [vmem:[#allocation8 + $0x5c8] sm:$0xff]
    %v740 = vld [vmem:[#allocation8 + $0x5d0] sm:$0xff]
    %v741 = vld [vmem:[#allocation8 + $0x5d8] sm:$0xff]
    %v742 = vld [vmem:[#allocation8 + $0x5e0] sm:$0xff]
    %v743 = vld [vmem:[#allocation8 + $0x5e8] sm:$0xff]
    %v744 = vld [vmem:[#allocation8 + $0x5f0] sm:$0xff]
    %v745 = vld [vmem:[#allocation8 + $0x5f8] sm:$0xff]
    %v746 = vld [vmem:[#allocation8 + $0x600] sm:$0xff]
    %v747 = vld [vmem:[#allocation8 + $0x608] sm:$0xff]
    %v748 = vld [vmem:[#allocation8 + $0x610] sm:$0xff]
    %v749 = vld [vmem:[#allocation8 + $0x618] sm:$0xff]
    %v750 = vld [vmem:[#allocation8 + $0x620] sm:$0xff]
    %v751 = vld [vmem:[#allocation8 + $0x628] sm:$0xff]
    %v752 = vld [vmem:[#allocation8 + $0x630] sm:$0xff]
    %v753 = vld [vmem:[#allocation8 + $0x638] sm:$0xff]
    %v754 = vld [vmem:[#allocation8 + $0x640] sm:$0xff]
    %v755 = vld [vmem:[#allocation8 + $0x648] sm:$0xff]
    %v756 = vld [vmem:[#allocation8 + $0x650] sm:$0xff]
    %v757 = vld [vmem:[#allocation8 + $0x658] sm:$0xff]
    %v758 = vld [vmem:[#allocation8 + $0x660] sm:$0xff]
    %v759 = vld [vmem:[#allocation8 + $0x668] sm:$0xff]
    %v760 = vld [vmem:[#allocation8 + $0x670] sm:$0xff]
    %v761 = vld [vmem:[#allocation8 + $0x678] sm:$0xff]
    %v762 = vld [vmem:[#allocation8 + $0x680] sm:$0xff]
    %v763 = vld [vmem:[#allocation8 + $0x688] sm:$0xff]
    %v764 = vld [vmem:[#allocation8 + $0x690] sm:$0xff]
    %v765 = vld [vmem:[#allocation8 + $0x698] sm:$0xff]
    %v766 = vld [vmem:[#allocation8 + $0x6a0] sm:$0xff]
    %v767 = vld [vmem:[#allocation8 + $0x6a8] sm:$0xff]
    %v768 = vld [vmem:[#allocation8 + $0x6b0] sm:$0xff]
    %v769 = vld [vmem:[#allocation8 + $0x6b8] sm:$0xff]
    %v770 = vld [vmem:[#allocation8 + $0x6c0] sm:$0xff]
    %v771 = vld [vmem:[#allocation8 + $0x6c8] sm:$0xff]
    %v772 = vld [vmem:[#allocation8 + $0x6d0] sm:$0xff]
    %v773 = vld [vmem:[#allocation8 + $0x6d8] sm:$0xff]
    %v774 = vld [vmem:[#allocation8 + $0x6e0] sm:$0xff]
    %v775 = vld [vmem:[#allocation8 + $0x6e8] sm:$0xff]
    %v776 = vld [vmem:[#allocation8 + $0x6f0] sm:$0xff]
    %v777 = vld [vmem:[#allocation8 + $0x6f8] sm:$0xff]
    %v778 = vld [vmem:[#allocation8 + $0x700] sm:$0xff]
    %v779 = vld [vmem:[#allocation8 + $0x708] sm:$0xff]
    %v780 = vld [vmem:[#allocation8 + $0x710] sm:$0xff]
    %v781 = vld [vmem:[#allocation8 + $0x718] sm:$0xff]
    %v782 = vld [vmem:[#allocation8 + $0x720] sm:$0xff]
    %v783 = vld [vmem:[#allocation8 + $0x728] sm:$0xff]
    %v784 = vld [vmem:[#allocation8 + $0x730] sm:$0xff]
    %v785 = vld [vmem:[#allocation8 + $0x738] sm:$0xff]
    %v786 = vld [vmem:[#allocation8 + $0x740] sm:$0xff]
    %v787 = vld [vmem:[#allocation8 + $0x748] sm:$0xff]
    %v788 = vld [vmem:[#allocation8 + $0x750] sm:$0xff]
    %v789 = vld [vmem:[#allocation8 + $0x758] sm:$0xff]
    %v790 = vld [vmem:[#allocation8 + $0x760] sm:$0xff]
    %v791 = vld [vmem:[#allocation8 + $0x768] sm:$0xff]
    %v792 = vld [vmem:[#allocation8 + $0x770] sm:$0xff]
    %v793 = vld [vmem:[#allocation8 + $0x778] sm:$0xff]
    %v794 = vld [vmem:[#allocation8 + $0x780] sm:$0xff]
    %v795 = vld [vmem:[#allocation8 + $0x788] sm:$0xff]
    %v796 = vld [vmem:[#allocation8 + $0x790] sm:$0xff]
    %v797 = vld [vmem:[#allocation8 + $0x798] sm:$0xff]
    %v798 = vld [vmem:[#allocation8 + $0x7a0] sm:$0xff]
    %v799 = vld [vmem:[#allocation8 + $0x7a8] sm:$0xff]
    %v800 = vld [vmem:[#allocation8 + $0x7b0] sm:$0xff]
    %v801 = vld [vmem:[#allocation8 + $0x7b8] sm:$0xff]
    %v802 = vld [vmem:[#allocation8 + $0x7c0] sm:$0xff]
    %v803 = vld [vmem:[#allocation8 + $0x7c8] sm:$0xff]
    %v804 = vld [vmem:[#allocation8 + $0x7d0] sm:$0xff]
    %v805 = vld [vmem:[#allocation8 + $0x7d8] sm:$0xff]
    %v806 = vld [vmem:[#allocation8 + $0x7e0] sm:$0xff]
    %v807 = vld [vmem:[#allocation8 + $0x7e8] sm:$0xff]
    %v808 = vld [vmem:[#allocation8 + $0x7f0] sm:$0xff]
    %v809 = vld [vmem:[#allocation8 + $0x7f8] sm:$0xff]
    %v810 = vld [vmem:[#allocation8 + $0x800] sm:$0xff]
    %v811 = vld [vmem:[#allocation8 + $0x808] sm:$0xff]
    %v812 = vld [vmem:[#allocation8 + $0x810] sm:$0xff]
    %v813 = vld [vmem:[#allocation8 + $0x818] sm:$0xff]
    %v814 = vld [vmem:[#allocation8 + $0x820] sm:$0xff]
    %v815 = vld [vmem:[#allocation8 + $0x828] sm:$0xff]
    %v816 = vld [vmem:[#allocation8 + $0x830] sm:$0xff]
    %v817 = vld [vmem:[#allocation8 + $0x838] sm:$0xff]
    %v818 = vld [vmem:[#allocation8 + $0x840] sm:$0xff]
    %v819 = vld [vmem:[#allocation8 + $0x848] sm:$0xff]
    %v820 = vld [vmem:[#allocation8 + $0x850] sm:$0xff]
    %v821 = vld [vmem:[#allocation8 + $0x858] sm:$0xff]
    %v822 = vld [vmem:[#allocation8 + $0x860] sm:$0xff]
    %v823 = vld [vmem:[#allocation8 + $0x868] sm:$0xff]
    %v824 = vld [vmem:[#allocation8 + $0x870] sm:$0xff]
    %v825 = vld [vmem:[#allocation8 + $0x878] sm:$0xff]
    %v826 = vld [vmem:[#allocation8 + $0x880] sm:$0xff]
    %v827 = vld [vmem:[#allocation8 + $0x888] sm:$0xff]
    %v828 = vld [vmem:[#allocation8 + $0x890] sm:$0xff]
    %v829 = vld [vmem:[#allocation8 + $0x898] sm:$0xff]
    %v830 = vld [vmem:[#allocation8 + $0x8a0] sm:$0xff]
    %v831 = vld [vmem:[#allocation8 + $0x8a8] sm:$0xff]
    %v832 = vld [vmem:[#allocation8 + $0x8b0] sm:$0xff]
    %v833 = vld [vmem:[#allocation8 + $0x8b8] sm:$0xff]
    %v834 = vld [vmem:[#allocation8 + $0x8c0] sm:$0xff]
    %v835 = vld [vmem:[#allocation8 + $0x8c8] sm:$0xff]
    %v836 = vld [vmem:[#allocation8 + $0x8d0] sm:$0xff]
    %v837 = vld [vmem:[#allocation8 + $0x8d8] sm:$0xff]
    %v838 = vld [vmem:[#allocation8 + $0x8e0] sm:$0xff]
    %v839 = vld [vmem:[#allocation8 + $0x8e8] sm:$0xff]
    %v840 = vld [vmem:[#allocation8 + $0x8f0] sm:$0xff]
    %v841 = vld [vmem:[#allocation8 + $0x8f8] sm:$0xff]
    %v842 = vld [vmem:[#allocation8 + $0x900] sm:$0xff]
    %v843 = vld [vmem:[#allocation8 + $0x908] sm:$0xff]
    %v844 = vld [vmem:[#allocation8 + $0x910] sm:$0xff]
    %v845 = vld [vmem:[#allocation8 + $0x918] sm:$0xff]
    %v846 = vld [vmem:[#allocation8 + $0x920] sm:$0xff]
    %v847 = vld [vmem:[#allocation8 + $0x928] sm:$0xff]
    %v848 = vld [vmem:[#allocation8 + $0x930] sm:$0xff]
    %v849 = vld [vmem:[#allocation8 + $0x938] sm:$0xff]
    %v850 = vld [vmem:[#allocation8 + $0x940] sm:$0xff]
    %v851 = vld [vmem:[#allocation8 + $0x948] sm:$0xff]
    %v852 = vld [vmem:[#allocation8 + $0x950] sm:$0xff]
    %v853 = vld [vmem:[#allocation8 + $0x958] sm:$0xff]
    %v854 = vld [vmem:[#allocation8 + $0x960] sm:$0xff]
    %v855 = vld [vmem:[#allocation8 + $0x968] sm:$0xff]
    %v856 = vld [vmem:[#allocation8 + $0x970] sm:$0xff]
    %v857 = vld [vmem:[#allocation8 + $0x978] sm:$0xff]
    %v858 = vld [vmem:[#allocation8 + $0x980] sm:$0xff]
    %v859 = vld [vmem:[#allocation8 + $0x988] sm:$0xff]
    %v860 = vld [vmem:[#allocation8 + $0x990] sm:$0xff]
    %v861 = vld [vmem:[#allocation8 + $0x998] sm:$0xff]
    %v862 = vld [vmem:[#allocation8 + $0x9a0] sm:$0xff]
    %v863 = vld [vmem:[#allocation8 + $0x9a8] sm:$0xff]
    %v864 = vld [vmem:[#allocation8 + $0x9b0] sm:$0xff]
    %v865 = vld [vmem:[#allocation8 + $0x9b8] sm:$0xff]
    %v866 = vld [vmem:[#allocation8 + $0x9c0] sm:$0xff]
    %v867 = vld [vmem:[#allocation8 + $0x9c8] sm:$0xff]
    %v868 = vld [vmem:[#allocation8 + $0x9d0] sm:$0xff]
    %v869 = vld [vmem:[#allocation8 + $0x9d8] sm:$0xff]
    %v870 = vld [vmem:[#allocation8 + $0x9e0] sm:$0xff]
    %v871 = vld [vmem:[#allocation8 + $0x9e8] sm:$0xff]
    %v872 = vld [vmem:[#allocation8 + $0x9f0] sm:$0xff]
    %v873 = vld [vmem:[#allocation8 + $0x9f8] sm:$0xff]
    %v874 = vld [vmem:[#allocation8 + $0xa00] sm:$0xff]
    %v875 = vld [vmem:[#allocation8 + $0xa08] sm:$0xff]
    %v876 = vld [vmem:[#allocation8 + $0xa10] sm:$0xff]
    %v877 = vld [vmem:[#allocation8 + $0xa18] sm:$0xff]
    %v878 = vld [vmem:[#allocation8 + $0xa20] sm:$0xff]
    %v879 = vld [vmem:[#allocation8 + $0xa28] sm:$0xff]
    %v880 = vld [vmem:[#allocation8 + $0xa30] sm:$0xff]
    %v881 = vld [vmem:[#allocation8 + $0xa38] sm:$0xff]
    %v882 = vld [vmem:[#allocation8 + $0xa40] sm:$0xff]
    %v883 = vld [vmem:[#allocation8 + $0xa48] sm:$0xff]
    %v884 = vld [vmem:[#allocation8 + $0xa50] sm:$0xff]
    %v885 = vld [vmem:[#allocation8 + $0xa58] sm:$0xff]
    %v886 = vld [vmem:[#allocation8 + $0xa60] sm:$0xff]
    %v887 = vld [vmem:[#allocation8 + $0xa68] sm:$0xff]
    %v888 = vld [vmem:[#allocation8 + $0xa70] sm:$0xff]
    %v889 = vld [vmem:[#allocation8 + $0xa78] sm:$0xff]
    %v890 = vld [vmem:[#allocation8 + $0xa80] sm:$0xff]
    %v891 = vld [vmem:[#allocation8 + $0xa88] sm:$0xff]
    %v892 = vld [vmem:[#allocation8 + $0xa90] sm:$0xff]
    %v893 = vld [vmem:[#allocation8 + $0xa98] sm:$0xff]
    %v894 = vld [vmem:[#allocation8 + $0xaa0] sm:$0xff]
    %v895 = vld [vmem:[#allocation8 + $0xaa8] sm:$0xff]
    %v896 = vld [vmem:[#allocation8 + $0xab0] sm:$0xff]
    %v897 = vld [vmem:[#allocation8 + $0xab8] sm:$0xff]
    %v898 = vld [vmem:[#allocation8 + $0xac0] sm:$0xff]
    %v899 = vld [vmem:[#allocation8 + $0xac8] sm:$0xff]
    %v900 = vld [vmem:[#allocation8 + $0xad0] sm:$0xff]
    %v901 = vld [vmem:[#allocation8 + $0xad8] sm:$0xff]
    %v902 = vld [vmem:[#allocation8 + $0xae0] sm:$0xff]
    %v903 = vld [vmem:[#allocation8 + $0xae8] sm:$0xff]
    %v904 = vld [vmem:[#allocation8 + $0xaf0] sm:$0xff]
    %v905 = vld [vmem:[#allocation8 + $0xaf8] sm:$0xff]
    %v906 = vld [vmem:[#allocation8 + $0xb00] sm:$0xff]
    %v907 = vld [vmem:[#allocation8 + $0xb08] sm:$0xff]
    %v908 = vld [vmem:[#allocation8 + $0xb10] sm:$0xff]
    %v909 = vld [vmem:[#allocation8 + $0xb18] sm:$0xff]
    %v910 = vld [vmem:[#allocation8 + $0xb20] sm:$0xff]
    %v911 = vld [vmem:[#allocation8 + $0xb28] sm:$0xff]
    %v912 = vld [vmem:[#allocation8 + $0xb30] sm:$0xff]
    %v913 = vld [vmem:[#allocation8 + $0xb38] sm:$0xff]
    %v914 = vld [vmem:[#allocation8 + $0xb40] sm:$0xff]
    %v915 = vld [vmem:[#allocation8 + $0xb48] sm:$0xff]
    %v916 = vld [vmem:[#allocation8 + $0xb50] sm:$0xff]
    %v917 = vld [vmem:[#allocation8 + $0xb58] sm:$0xff]
    %v918 = vld [vmem:[#allocation8 + $0xb60] sm:$0xff]
    %v919 = vld [vmem:[#allocation8 + $0xb68] sm:$0xff]
    %v920 = vld [vmem:[#allocation8 + $0xb70] sm:$0xff]
    %v921 = vld [vmem:[#allocation8 + $0xb78] sm:$0xff]
    %v922 = vld [vmem:[#allocation8 + $0xb80] sm:$0xff]
    %v923 = vld [vmem:[#allocation8 + $0xb88] sm:$0xff]
    %v924 = vld [vmem:[#allocation8 + $0xb90] sm:$0xff]
    %v925 = vld [vmem:[#allocation8 + $0xb98] sm:$0xff]
    %v926 = vld [vmem:[#allocation8 + $0xba0] sm:$0xff]
    %v927 = vld [vmem:[#allocation8 + $0xba8] sm:$0xff]
    %v928 = vld [vmem:[#allocation8 + $0xbb0] sm:$0xff]
    %v929 = vld [vmem:[#allocation8 + $0xbb8] sm:$0xff]
    %v930 = vld [vmem:[#allocation8 + $0xbc0] sm:$0xff]
    %v931 = vld [vmem:[#allocation8 + $0xbc8] sm:$0xff]
    %v932 = vld [vmem:[#allocation8 + $0xbd0] sm:$0xff]
    %v933 = vld [vmem:[#allocation8 + $0xbd8] sm:$0xff]
    %v934 = vld [vmem:[#allocation8 + $0xbe0] sm:$0xff]
    %v935 = vld [vmem:[#allocation8 + $0xbe8] sm:$0xff]
    %v936 = vld [vmem:[#allocation8 + $0xbf0] sm:$0xff]
    %v937 = vld [vmem:[#allocation8 + $0xbf8] sm:$0xff]
    %v938 = vld [vmem:[#allocation8 + $0xc00] sm:$0xff]
    %v939 = vld [vmem:[#allocation8 + $0xc08] sm:$0xff]
    %v940 = vld [vmem:[#allocation8 + $0xc10] sm:$0xff]
    %v941 = vld [vmem:[#allocation8 + $0xc18] sm:$0xff]
    %v942 = vld [vmem:[#allocation8 + $0xc20] sm:$0xff]
    %v943 = vld [vmem:[#allocation8 + $0xc28] sm:$0xff]
    %v944 = vld [vmem:[#allocation8 + $0xc30] sm:$0xff]
    %v945 = vld [vmem:[#allocation8 + $0xc38] sm:$0xff]
    %v946 = vld [vmem:[#allocation8 + $0xc40] sm:$0xff]
    %v947 = vld [vmem:[#allocation8 + $0xc48] sm:$0xff]
    %v948 = vld [vmem:[#allocation8 + $0xc50] sm:$0xff]
    %v949 = vld [vmem:[#allocation8 + $0xc58] sm:$0xff]
    %v950 = vld [vmem:[#allocation8 + $0xc60] sm:$0xff]
    %v951 = vld [vmem:[#allocation8 + $0xc68] sm:$0xff]
    %v952 = vld [vmem:[#allocation8 + $0xc70] sm:$0xff]
    %v953 = vld [vmem:[#allocation8 + $0xc78] sm:$0xff]
    %v954 = vld [vmem:[#allocation8 + $0xc80] sm:$0xff]
    %v955 = vld [vmem:[#allocation8 + $0xc88] sm:$0xff]
    %v956 = vld [vmem:[#allocation8 + $0xc90] sm:$0xff]
    %v957 = vld [vmem:[#allocation8 + $0xc98] sm:$0xff]
    %v958 = vld [vmem:[#allocation8 + $0xca0] sm:$0xff]
    %v959 = vld [vmem:[#allocation8 + $0xca8] sm:$0xff]
    %v960 = vld [vmem:[#allocation8 + $0xcb0] sm:$0xff]
    %v961 = vld [vmem:[#allocation8 + $0xcb8] sm:$0xff]
    %v962 = vld [vmem:[#allocation8 + $0xcc0] sm:$0xff]
    %v963 = vld [vmem:[#allocation8 + $0xcc8] sm:$0xff]
    %v964 = vld [vmem:[#allocation8 + $0xcd0] sm:$0xff]
    %v965 = vld [vmem:[#allocation8 + $0xcd8] sm:$0xff]
    %v966 = vld [vmem:[#allocation8 + $0xce0] sm:$0xff]
    %v967 = vld [vmem:[#allocation8 + $0xce8] sm:$0xff]
    %v968 = vld [vmem:[#allocation8 + $0xcf0] sm:$0xff]
    %v969 = vld [vmem:[#allocation8 + $0xcf8] sm:$0xff]
    %v970 = vld [vmem:[#allocation8 + $0xd00] sm:$0xff]
    %v971 = vld [vmem:[#allocation8 + $0xd08] sm:$0xff]
    %v972 = vld [vmem:[#allocation8 + $0xd10] sm:$0xff]
    %v973 = vld [vmem:[#allocation8 + $0xd18] sm:$0xff]
    %v974 = vld [vmem:[#allocation8 + $0xd20] sm:$0xff]
    %v975 = vld [vmem:[#allocation8 + $0xd28] sm:$0xff]
    %v976 = vld [vmem:[#allocation8 + $0xd30] sm:$0xff]
    %v977 = vld [vmem:[#allocation8 + $0xd38] sm:$0xff]
    %v978 = vld [vmem:[#allocation8 + $0xd40] sm:$0xff]
    %v979 = vld [vmem:[#allocation8 + $0xd48] sm:$0xff]
    %v980 = vld [vmem:[#allocation8 + $0xd50] sm:$0xff]
    %v981 = vld [vmem:[#allocation8 + $0xd58] sm:$0xff]
    %v982 = vld [vmem:[#allocation8 + $0xd60] sm:$0xff]
    %v983 = vld [vmem:[#allocation8 + $0xd68] sm:$0xff]
    %v984 = vld [vmem:[#allocation8 + $0xd70] sm:$0xff]
    %v985 = vld [vmem:[#allocation8 + $0xd78] sm:$0xff]
    %v986 = vld [vmem:[#allocation8 + $0xd80] sm:$0xff]
    %v987 = vld [vmem:[#allocation8 + $0xd88] sm:$0xff]
    %v988 = vld [vmem:[#allocation8 + $0xd90] sm:$0xff]
    %v989 = vld [vmem:[#allocation8 + $0xd98] sm:$0xff]
    %v990 = vld [vmem:[#allocation8 + $0xda0] sm:$0xff]
    %v991 = vld [vmem:[#allocation8 + $0xda8] sm:$0xff]
    %v992 = vld [vmem:[#allocation8 + $0xdb0] sm:$0xff]
    %v993 = vld [vmem:[#allocation8 + $0xdb8] sm:$0xff]
    %v994 = vld [vmem:[#allocation8 + $0xdc0] sm:$0xff]
    %v995 = vld [vmem:[#allocation8 + $0xdc8] sm:$0xff]
    %v996 = vld [vmem:[#allocation8 + $0xdd0] sm:$0xff]
    %v997 = vld [vmem:[#allocation8 + $0xdd8] sm:$0xff]
    %v998 = vld [vmem:[#allocation8 + $0xde0] sm:$0xff]
    %v999 = vld [vmem:[#allocation8 + $0xde8] sm:$0xff]
    %v1000 = vld [vmem:[#allocation8 + $0xdf0] sm:$0xff]
    %v1001 = vld [vmem:[#allocation8 + $0xdf8] sm:$0xff]
    %v1002 = vld [vmem:[#allocation8 + $0xe00] sm:$0xff]
    %v1003 = vld [vmem:[#allocation8 + $0xe08] sm:$0xff]
    %v1004 = vld [vmem:[#allocation8 + $0xe10] sm:$0xff]
    %v1005 = vld [vmem:[#allocation8 + $0xe18] sm:$0xff]
    %v1006 = vld [vmem:[#allocation8 + $0xe20] sm:$0xff]
    %v1007 = vld [vmem:[#allocation8 + $0xe28] sm:$0xff]
    %v1008 = vld [vmem:[#allocation8 + $0xe30] sm:$0xff]
    %v1009 = vld [vmem:[#allocation8 + $0xe38] sm:$0xff]
    %v1010 = vld [vmem:[#allocation8 + $0xe40] sm:$0xff]
    %v1011 = vld [vmem:[#allocation8 + $0xe48] sm:$0xff]
    %v1012 = vld [vmem:[#allocation8 + $0xe50] sm:$0xff]
    %v1013 = vld [vmem:[#allocation8 + $0xe58] sm:$0xff]
    %v1014 = vld [vmem:[#allocation8 + $0xe60] sm:$0xff]
    %v1015 = vld [vmem:[#allocation8 + $0xe68] sm:$0xff]
    %v1016 = vld [vmem:[#allocation8 + $0xe70] sm:$0xff]
    %v1017 = vld [vmem:[#allocation8 + $0xe78] sm:$0xff]
    %v1018 = vld [vmem:[#allocation8 + $0xe80] sm:$0xff]
    %v1019 = vld [vmem:[#allocation8 + $0xe88] sm:$0xff]
    %v1020 = vld [vmem:[#allocation8 + $0xe90] sm:$0xff]
    %v1021 = vld [vmem:[#allocation8 + $0xe98] sm:$0xff]
    %v1022 = vld [vmem:[#allocation8 + $0xea0] sm:$0xff]
    %v1023 = vld [vmem:[#allocation8 + $0xea8] sm:$0xff]
    %v1024 = vld [vmem:[#allocation8 + $0xeb0] sm:$0xff]
    %v1025 = vld [vmem:[#allocation8 + $0xeb8] sm:$0xff]
    %v1026 = vld [vmem:[#allocation8 + $0xec0] sm:$0xff]
    %v1027 = vld [vmem:[#allocation8 + $0xec8] sm:$0xff]
    %v1028 = vld [vmem:[#allocation8 + $0xed0] sm:$0xff]
    %v1029 = vld [vmem:[#allocation8 + $0xed8] sm:$0xff]
    %v1030 = vld [vmem:[#allocation8 + $0xee0] sm:$0xff]
    %v1031 = vld [vmem:[#allocation8 + $0xee8] sm:$0xff]
    %v1032 = vld [vmem:[#allocation8 + $0xef0] sm:$0xff]
    %v1033 = vld [vmem:[#allocation8 + $0xef8] sm:$0xff]
    %v1034 = vld [vmem:[#allocation8 + $0xf00] sm:$0xff]
    %v1035 = vld [vmem:[#allocation8 + $0xf08] sm:$0xff]
    %v1036 = vld [vmem:[#allocation8 + $0xf10] sm:$0xff]
    %v1037 = vld [vmem:[#allocation8 + $0xf18] sm:$0xff]
    %v1038 = vld [vmem:[#allocation8 + $0xf20] sm:$0xff]
    %v1039 = vld [vmem:[#allocation8 + $0xf28] sm:$0xff]
    %v1040 = vld [vmem:[#allocation8 + $0xf30] sm:$0xff]
    %v1041 = vld [vmem:[#allocation8 + $0xf38] sm:$0xff]
    %v1042 = vld [vmem:[#allocation8 + $0xf40] sm:$0xff]
    %v1043 = vld [vmem:[#allocation8 + $0xf48] sm:$0xff]
    %v1044 = vld [vmem:[#allocation8 + $0xf50] sm:$0xff]
    %v1045 = vld [vmem:[#allocation8 + $0xf58] sm:$0xff]
    %v1046 = vld [vmem:[#allocation8 + $0xf60] sm:$0xff]
    %v1047 = vld [vmem:[#allocation8 + $0xf68] sm:$0xff]
    %v1048 = vld [vmem:[#allocation8 + $0xf70] sm:$0xff]
    %v1049 = vld [vmem:[#allocation8 + $0xf78] sm:$0xff]
    %v1050 = vld [vmem:[#allocation8 + $0xf80] sm:$0xff]
    %v1051 = vld [vmem:[#allocation8 + $0xf88] sm:$0xff]
    %v1052 = vld [vmem:[#allocation8 + $0xf90] sm:$0xff]
    %v1053 = vld [vmem:[#allocation8 + $0xf98] sm:$0xff]
    %v1054 = vld [vmem:[#allocation8 + $0xfa0] sm:$0xff]
    %v1055 = vld [vmem:[#allocation8 + $0xfa8] sm:$0xff]
    %v1056 = vld [vmem:[#allocation8 + $0xfb0] sm:$0xff]
    %v1057 = vld [vmem:[#allocation8 + $0xfb8] sm:$0xff]
    %v1058 = vld [vmem:[#allocation8 + $0xfc0] sm:$0xff]
    %v1059 = vld [vmem:[#allocation8 + $0xfc8] sm:$0xff]
    %v1060 = vld [vmem:[#allocation8 + $0xfd0] sm:$0xff]
    %v1061 = vld [vmem:[#allocation8 + $0xfd8] sm:$0xff]
    %v1062 = vld [vmem:[#allocation8 + $0xfe0] sm:$0xff]
    %v1063 = vld [vmem:[#allocation8 + $0xfe8] sm:$0xff]
    %v1064 = vld [vmem:[#allocation8 + $0xff0] sm:$0xff]
    %v1065 = vld [vmem:[#allocation8 + $0xff8] sm:$0xff]
    %v1066 = vld [vmem:[#allocation8 + $0x1000] sm:$0xff]
    %v1067 = vld [vmem:[#allocation8 + $0x1008] sm:$0xff]
    %v1068 = vld [vmem:[#allocation8 + $0x1010] sm:$0xff]
    %v1069 = vld [vmem:[#allocation8 + $0x1018] sm:$0xff]
    %v1070 = vld [vmem:[#allocation8 + $0x1020] sm:$0xff]
    %v1071 = vld [vmem:[#allocation8 + $0x1028] sm:$0xff]
    %v1072 = vld [vmem:[#allocation8 + $0x1030] sm:$0xff]
    %v1073 = vld [vmem:[#allocation8 + $0x1038] sm:$0xff]
    %v1074 = vld [vmem:[#allocation8 + $0x1040] sm:$0xff]
    %v1075 = vld [vmem:[#allocation8 + $0x1048] sm:$0xff]
    %v1076 = vld [vmem:[#allocation8 + $0x1050] sm:$0xff]
    %v1077 = vld [vmem:[#allocation8 + $0x1058] sm:$0xff]
    %v1078 = vld [vmem:[#allocation8 + $0x1060] sm:$0xff]
    %v1079 = vld [vmem:[#allocation8 + $0x1068] sm:$0xff]
    %v1080 = vld [vmem:[#allocation8 + $0x1070] sm:$0xff]
    %v1081 = vld [vmem:[#allocation8 + $0x1078] sm:$0xff]
    %v1082 = vld [vmem:[#allocation8 + $0x1080] sm:$0xff]
    %v1083 = vld [vmem:[#allocation8 + $0x1088] sm:$0xff]
    %v1084 = vld [vmem:[#allocation8 + $0x1090] sm:$0xff]
    %v1085 = vld [vmem:[#allocation8 + $0x1098] sm:$0xff]
    %v1086 = vld [vmem:[#allocation8 + $0x10a0] sm:$0xff]
    %v1087 = vld [vmem:[#allocation8 + $0x10a8] sm:$0xff]
    %v1088 = vld [vmem:[#allocation8 + $0x10b0] sm:$0xff]
    %v1089 = vld [vmem:[#allocation8 + $0x10b8] sm:$0xff]
    %v1090 = vld [vmem:[#allocation8 + $0x10c0] sm:$0xff]
    %v1091 = vld [vmem:[#allocation8 + $0x10c8] sm:$0xff]
    %v1092 = vld [vmem:[#allocation8 + $0x10d0] sm:$0xff]
    %v1093 = vld [vmem:[#allocation8 + $0x10d8] sm:$0xff]
    %v1094 = vld [vmem:[#allocation8 + $0x10e0] sm:$0xff]
    %v1095 = vld [vmem:[#allocation8 + $0x10e8] sm:$0xff]
    %v1096 = vld [vmem:[#allocation8 + $0x10f0] sm:$0xff]
    %v1097 = vld [vmem:[#allocation8 + $0x10f8] sm:$0xff]
    %v1098 = vld [vmem:[#allocation8 + $0x1100] sm:$0xff]
    %v1099 = vld [vmem:[#allocation8 + $0x1108] sm:$0xff]
    %v1100 = vld [vmem:[#allocation8 + $0x1110] sm:$0xff]
    %v1101 = vld [vmem:[#allocation8 + $0x1118] sm:$0xff]
    %v1102 = vld [vmem:[#allocation8 + $0x1120] sm:$0xff]
    %v1103 = vld [vmem:[#allocation8 + $0x1128] sm:$0xff]
    %v1104 = vld [vmem:[#allocation8 + $0x1130] sm:$0xff]
    %v1105 = vld [vmem:[#allocation8 + $0x1138] sm:$0xff]
    %v1106 = vld [vmem:[#allocation8 + $0x1140] sm:$0xff]
    %v1107 = vld [vmem:[#allocation8 + $0x1148] sm:$0xff]
    %v1108 = vld [vmem:[#allocation8 + $0x1150] sm:$0xff]
    %v1109 = vld [vmem:[#allocation8 + $0x1158] sm:$0xff]
    %v1110 = vld [vmem:[#allocation8 + $0x1160] sm:$0xff]
    %v1111 = vld [vmem:[#allocation8 + $0x1168] sm:$0xff]
    %v1112 = vld [vmem:[#allocation8 + $0x1170] sm:$0xff]
    %v1113 = vld [vmem:[#allocation8 + $0x1178] sm:$0xff]
    %v1114 = vld [vmem:[#allocation10] sm:$0x1f]
    %v1116 = vlaneseq
    %v1117 = vshrl.u32 %v1116, 7
    %v1118 = vsub.s32 0, %v1117
    %v1119 = vrot.slane %v1114, %v1118
    %v1120 = vlaneseq
    %v1121 = vshrl.u32 %v1120, 7
    %v1122 = vsub.s32 1, %v1121
    %v1123 = vrot.slane %v1114, %v1122
    %v1124 = vlaneseq
    %v1125 = vshrl.u32 %v1124, 7
    %v1126 = vsub.s32 2, %v1125
    %v1127 = vrot.slane %v1114, %v1126
    %v1128 = vlaneseq
    %v1129 = vshrl.u32 %v1128, 7
    %v1130 = vsub.s32 3, %v1129
    %v1131 = vrot.slane %v1114, %v1130
    %v1132 = vlaneseq
    %v1133 = vshrl.u32 %v1132, 7
    %v1134 = vsub.s32 4, %v1133
    %v1135 = vrot.slane %v1114, %v1134
    %1141 = vmatprep.subr.mxu0 %v555
    %1142 = vmatpush1.msra.mxu0 %v554
    %1143 = vmatprep.subr.mxu0 %v560
    %1144 = vmatpush1.msra.mxu0 %v559
    %1145 = vmatprep.subr.mxu0 %v565
    %1146 = vmatpush1.msra.mxu0 %v564
    %1147 = vmatprep.subr.mxu0 %v570
    %1148 = vmatpush1.msra.mxu0 %v569
    %1149 = vmatprep.subr.mxu0 %v575
    %1150 = vmatpush1.msra.mxu0 %v574
    %1151 = vmatprep.subr.mxu0 %v580
    %1152 = vmatpush1.msra.mxu0 %v579
    %1153 = vmatprep.subr.mxu0 %v585
    %1154 = vmatpush1.msra.mxu0 %v584
    %1155 = vmatprep.subr.mxu0 %v590
    %1156 = vmatpush1.msra.mxu0 %v589
    %1157 = vmatprep.subr.mxu0 %v595
    %1158 = vmatpush1.msra.mxu0 %v594
    %1159 = vmatprep.subr.mxu0 %v600
    %1160 = vmatpush1.msra.mxu0 %v599
    %1161 = vmatprep.subr.mxu0 %v605
    %1162 = vmatpush1.msra.mxu0 %v604
    %1163 = vmatprep.subr.mxu0 %v610
    %1164 = vmatpush1.msra.mxu0 %v609
    %1165 = vmatprep.subr.mxu0 %v615
    %1166 = vmatpush1.msra.mxu0 %v614
    %1167 = vmatprep.subr.mxu0 %v620
    %1168 = vmatpush1.msra.mxu0 %v619
    %1169 = vmatprep.subr.mxu0 %v625
    %1170 = vmatpush1.msra.mxu0 %v624
    %1171 = vmatprep.subr.mxu0 %v630
    %1172 = vmatpush1.msra.mxu0 %v629
    %1173 = vmatprep.subr.mxu0 %v635
    %1174 = vmatpush1.msra.mxu0 %v634
    %1175 = vmatprep.subr.mxu0 %v640
    %1176 = vmatpush1.msra.mxu0 %v639
    %1177 = vmatprep.subr.mxu0 %v645
    %1178 = vmatpush1.msra.mxu0 %v644
    %1179 = vmatprep.subr.mxu0 %v650
    %1180 = vmatpush1.msra.mxu0 %v649
    %1181 = vmatprep.subr.mxu0 %v655
    %1182 = vmatpush1.msra.mxu0 %v654
    %1183 = vmatprep.subr.mxu0 %v660
    %1184 = vmatpush1.msra.mxu0 %v659
    %1185 = vmatprep.subr.mxu0 %v665
    %1186 = vmatpush1.msra.mxu0 %v664
    %1187 = vmatprep.subr.mxu0 %v670
    %1188 = vmatpush1.msra.mxu0 %v669
    %1189 = vmatprep.subr.mxu0 %v675
    %1190 = vmatpush1.msra.mxu0 %v674
    %1191 = vmatprep.subr.mxu0 %v680
    %1192 = vmatpush1.msra.mxu0 %v679
    %1193 = vmatprep.subr.mxu0 %v685
    %1194 = vmatpush1.msra.mxu0 %v684
    %1195 = vmatprep.subr.mxu0 %v690
    %1196 = vmatpush1.msra.mxu0 %v689
    %1197 = vmatprep.subr.mxu0 %v695
    %1198 = vmatpush1.msra.mxu0 %v694
    %1199 = vmatprep.subr.mxu0 %v700
    %1200 = vmatpush1.msra.mxu0 %v699
    %1201 = vmatprep.subr.mxu0 %v705
    %1202 = vmatpush1.msra.mxu0 %v704
    %1203 = vmatprep.subr.mxu0 %v710
    %1204 = vmatpush1.msra.mxu0 %v709
    %1205 = vmatprep.mubr.f32.mxu0 %v548
    %1206 = vmatmul.mubr.f32.gmra.mrb[0].mxu0 %v547
    %v1207 = vpop.f32.mrb[0].mxu0
    %v1208 = vadd.f32 %v1119, %v1207
    %v1209 = vpop.f32.mrb[0].mxu0
    %v1210 = vadd.f32 %v1123, %v1209
    %1211 = vdwg.mxu0
    %1212 = vmatprep.subr.mxu0 %v715
    %1213 = vmatpush1.msra.mxu0 %v714
    %1214 = vmatprep.subr.mxu0 %v720
    %1215 = vmatpush1.msra.mxu0 %v719
    %1216 = vmatprep.subr.mxu0 %v725
    %1217 = vmatpush1.msra.mxu0 %v724
    %1218 = vmatprep.subr.mxu0 %v730
    %1219 = vmatpush1.msra.mxu0 %v729
    %1220 = vmatprep.subr.mxu0 %v735
    %1221 = vmatpush1.msra.mxu0 %v734
    %1222 = vmatprep.subr.mxu0 %v740
    %1223 = vmatpush1.msra.mxu0 %v739
    %1224 = vmatprep.subr.mxu0 %v745
    %1225 = vmatpush1.msra.mxu0 %v744
    %1226 = vmatprep.subr.mxu0 %v750
    %1227 = vmatpush1.msra.mxu0 %v749
    %1228 = vmatprep.subr.mxu0 %v755
    %1229 = vmatpush1.msra.mxu0 %v754
    %1230 = vmatprep.subr.mxu0 %v760
    %1231 = vmatpush1.msra.mxu0 %v759
    %1232 = vmatprep.subr.mxu0 %v765
    %1233 = vmatpush1.msra.mxu0 %v764
    %1234 = vmatprep.subr.mxu0 %v770
    %1235 = vmatpush1.msra.mxu0 %v769
    %1236 = vmatprep.subr.mxu0 %v775
    %1237 = vmatpush1.msra.mxu0 %v774
    %1238 = vmatprep.subr.mxu0 %v780
    %1239 = vmatpush1.msra.mxu0 %v779
    %1240 = vmatprep.subr.mxu0 %v785
    %1241 = vmatpush1.msra.mxu0 %v784
    %1242 = vmatprep.subr.mxu0 %v790
    %1243 = vmatpush1.msra.mxu0 %v789
    %1244 = vmatprep.subr.mxu0 %v795
    %1245 = vmatpush1.msra.mxu0 %v794
    %1246 = vmatprep.subr.mxu0 %v800
    %1247 = vmatpush1.msra.mxu0 %v799
    %1248 = vmatprep.subr.mxu0 %v805
    %1249 = vmatpush1.msra.mxu0 %v804
    %1250 = vmatprep.subr.mxu0 %v810
    %1251 = vmatpush1.msra.mxu0 %v809
    %1252 = vmatprep.subr.mxu0 %v815
    %1253 = vmatpush1.msra.mxu0 %v814
    %1254 = vmatprep.subr.mxu0 %v820
    %1255 = vmatpush1.msra.mxu0 %v819
    %1256 = vmatprep.subr.mxu0 %v825
    %1257 = vmatpush1.msra.mxu0 %v824
    %1258 = vmatprep.subr.mxu0 %v830
    %1259 = vmatpush1.msra.mxu0 %v829
    %1260 = vmatprep.subr.mxu0 %v835
    %1261 = vmatpush1.msra.mxu0 %v834
    %1262 = vmatprep.subr.mxu0 %v840
    %1263 = vmatpush1.msra.mxu0 %v839
    %1264 = vmatprep.subr.mxu0 %v845
    %1265 = vmatpush1.msra.mxu0 %v844
    %1266 = vmatprep.subr.mxu0 %v850
    %1267 = vmatpush1.msra.mxu0 %v849
    %1268 = vmatprep.subr.mxu0 %v855
    %1269 = vmatpush1.msra.mxu0 %v854
    %1270 = vmatprep.subr.mxu0 %v860
    %1271 = vmatpush1.msra.mxu0 %v859
    %1272 = vmatprep.subr.mxu0 %v865
    %1273 = vmatpush1.msra.mxu0 %v864
    %1274 = vmatprep.subr.mxu0 %v870
    %1275 = vmatpush1.msra.mxu0 %v869
    %1276 = vmatprep.mubr.f32.mxu0 %v550
    %1277 = vmatmul.mubr.f32.gmra.mrb[0].mxu0 %v549
    %v1278 = vpop.f32.mrb[0].mxu0
    %v1279 = vadd.f32 %v1208, %v1278
    %v1280 = vpop.f32.mrb[0].mxu0
    %v1281 = vadd.f32 %v1210, %v1280
    %1282 = vdwg.mxu0
    %1283 = vmatprep.subr.mxu0 %v875
    %1284 = vmatpush1.msra.mxu0 %v874
    %1285 = vmatprep.subr.mxu0 %v880
    %1286 = vmatpush1.msra.mxu0 %v879
    %1287 = vmatprep.subr.mxu0 %v885
    %1288 = vmatpush1.msra.mxu0 %v884
    %1289 = vmatprep.subr.mxu0 %v890
    %1290 = vmatpush1.msra.mxu0 %v889
    %1291 = vmatprep.subr.mxu0 %v895
    %1292 = vmatpush1.msra.mxu0 %v894
    %1293 = vmatprep.subr.mxu0 %v900
    %1294 = vmatpush1.msra.mxu0 %v899
    %1295 = vmatprep.subr.mxu0 %v905
    %1296 = vmatpush1.msra.mxu0 %v904
    %1297 = vmatprep.subr.mxu0 %v910
    %1298 = vmatpush1.msra.mxu0 %v909
    %1299 = vmatprep.subr.mxu0 %v915
    %1300 = vmatpush1.msra.mxu0 %v914
    %1301 = vmatprep.subr.mxu0 %v920
    %1302 = vmatpush1.msra.mxu0 %v919
    %1303 = vmatprep.subr.mxu0 %v925
    %1304 = vmatpush1.msra.mxu0 %v924
    %1305 = vmatprep.subr.mxu0 %v930
    %1306 = vmatpush1.msra.mxu0 %v929
    %1307 = vmatprep.subr.mxu0 %v935
    %1308 = vmatpush1.msra.mxu0 %v934
    %1309 = vmatprep.subr.mxu0 %v940
    %1310 = vmatpush1.msra.mxu0 %v939
    %1311 = vmatprep.subr.mxu0 %v945
    %1312 = vmatpush1.msra.mxu0 %v944
    %1313 = vmatprep.subr.mxu0 %v950
    %1314 = vmatpush1.msra.mxu0 %v949
    %1315 = vmatprep.subr.mxu0 %v955
    %1316 = vmatpush1.msra.mxu0 %v954
    %1317 = vmatprep.subr.mxu0 %v960
    %1318 = vmatpush1.msra.mxu0 %v959
    %1319 = vmatprep.subr.mxu0 %v965
    %1320 = vmatpush1.msra.mxu0 %v964
    %1321 = vmatprep.subr.mxu0 %v970
    %1322 = vmatpush1.msra.mxu0 %v969
    %1323 = vmatprep.subr.mxu0 %v975
    %1324 = vmatpush1.msra.mxu0 %v974
    %1325 = vmatprep.subr.mxu0 %v980
    %1326 = vmatpush1.msra.mxu0 %v979
    %1327 = vmatprep.subr.mxu0 %v985
    %1328 = vmatpush1.msra.mxu0 %v984
    %1329 = vmatprep.subr.mxu0 %v990
    %1330 = vmatpush1.msra.mxu0 %v989
    %1331 = vmatprep.subr.mxu0 %v995
    %1332 = vmatpush1.msra.mxu0 %v994
    %1333 = vmatprep.subr.mxu0 %v1000
    %1334 = vmatpush1.msra.mxu0 %v999
    %1335 = vmatprep.subr.mxu0 %v1005
    %1336 = vmatpush1.msra.mxu0 %v1004
    %1337 = vmatprep.subr.mxu0 %v1010
    %1338 = vmatpush1.msra.mxu0 %v1009
    %1339 = vmatprep.subr.mxu0 %v1015
    %1340 = vmatpush1.msra.mxu0 %v1014
    %1341 = vmatprep.subr.mxu0 %v1020
    %1342 = vmatpush1.msra.mxu0 %v1019
    %1343 = vmatprep.subr.mxu0 %v1025
    %1344 = vmatpush1.msra.mxu0 %v1024
    %1345 = vmatprep.subr.mxu0 %v1030
    %1346 = vmatpush1.msra.mxu0 %v1029
    %1347 = vmatprep.mubr.f32.mxu0 %v552
    %1348 = vmatmul.mubr.f32.gmra.mrb[0].mxu0 %v551
    %v1349 = vpop.f32.mrb[0].mxu0
    %v1350 = vadd.f32 %v1279, %v1349
    %v1351 = vpop.f32.mrb[0].mxu0
    %v1352 = vadd.f32 %v1281, %v1351
    %1353 = vdwg.mxu0
    %1354 = vmatprep.subr.mxu0 %v1035
    %1355 = vmatpush1.msra.mxu0 %v1034
    %1356 = vmatprep.subr.mxu0 %v1040
    %1357 = vmatpush1.msra.mxu0 %v1039
    %1358 = vmatprep.subr.mxu0 %v1045
    %1359 = vmatpush1.msra.mxu0 %v1044
    %1360 = vmatprep.subr.mxu0 %v1050
    %1361 = vmatpush1.msra.mxu0 %v1049
    %1362 = vmatprep.subr.mxu0 %v1055
    %1363 = vmatpush1.msra.mxu0 %v1054
    %1364 = vmatprep.subr.mxu0 %v1060
    %1365 = vmatpush1.msra.mxu0 %v1059
    %1366 = vmatprep.subr.mxu0 %v1065
    %1367 = vmatpush1.msra.mxu0 %v1064
    %1368 = vmatprep.subr.mxu0 %v1070
    %1369 = vmatpush1.msra.mxu0 %v1069
    %1370 = vmatprep.subr.mxu0 %v1075
    %1371 = vmatpush1.msra.mxu0 %v1074
    %1372 = vmatprep.subr.mxu0 %v1080
    %1373 = vmatpush1.msra.mxu0 %v1079
    %1374 = vmatprep.subr.mxu0 %v1085
    %1375 = vmatpush1.msra.mxu0 %v1084
    %1376 = vmatprep.subr.mxu0 %v1090
    %1377 = vmatpush1.msra.mxu0 %v1089
    %1378 = vmatprep.subr.mxu0 %v1095
    %1379 = vmatpush1.msra.mxu0 %v1094
    %1380 = vmatprep.subr.mxu0 %v1100
    %1381 = vmatpush1.msra.mxu0 %v1099
    %1382 = vmatprep.subr.mxu0 %v1105
    %1383 = vmatpush1.msra.mxu0 %v1104
    %1384 = vmatprep.subr.mxu0 %v1110
    %1385 = vmatpush1.msra.mxu0 %v1109
    %1386 = vmatprep.subr.mxu0 0.0
    %1387 = vmatpush1.msra.mxu0 0.0
    %1388 = vmatprep.subr.mxu0 0.0
    %1389 = vmatpush1.msra.mxu0 0.0
    %1390 = vmatprep.subr.mxu0 0.0
    %1391 = vmatpush1.msra.mxu0 0.0
    %1392 = vmatprep.subr.mxu0 0.0
    %1393 = vmatpush1.msra.mxu0 0.0
    %1394 = vmatprep.subr.mxu0 0.0
    %1395 = vmatpush1.msra.mxu0 0.0
    %1396 = vmatprep.subr.mxu0 0.0
    %1397 = vmatpush1.msra.mxu0 0.0
    %1398 = vmatprep.subr.mxu0 0.0
    %1399 = vmatpush1.msra.mxu0 0.0
    %1400 = vmatprep.subr.mxu0 0.0
    %1401 = vmatpush1.msra.mxu0 0.0
    %1402 = vmatprep.subr.mxu0 0.0
    %1403 = vmatpush1.msra.mxu0 0.0
    %1404 = vmatprep.subr.mxu0 0.0
    %1405 = vmatpush1.msra.mxu0 0.0
    %1406 = vmatprep.subr.mxu0 0.0
    %1407 = vmatpush1.msra.mxu0 0.0
    %1408 = vmatprep.subr.mxu0 0.0
    %1409 = vmatpush1.msra.mxu0 0.0
    %1410 = vmatprep.subr.mxu0 0.0
    %1411 = vmatpush1.msra.mxu0 0.0
    %1412 = vmatprep.subr.mxu0 0.0
    %1413 = vmatpush1.msra.mxu0 0.0
    %1414 = vmatprep.subr.mxu0 0.0
    %1415 = vmatpush1.msra.mxu0 0.0
    %1416 = vmatprep.subr.mxu0 0.0
    %1417 = vmatpush1.msra.mxu0 0.0
    %1418 = vmatprep.mubr.f32.mxu0 0.0
    %1419 = vmatmul.mubr.f32.gmra.mrb[0].mxu0 %v553
    %v1420 = vpop.f32.mrb[0].mxu0
    %v1421 = vadd.f32 %v1350, %v1420
    %v1422 = vpop.f32.mrb[0].mxu0
    %v1423 = vadd.f32 %v1352, %v1422
    %1424 = vdwg.mxu0
    %1425 = vmatprep.subr.mxu0 %v557
    %1426 = vmatpush1.msra.mxu0 %v556
    %1427 = vmatprep.subr.mxu0 %v562
    %1428 = vmatpush1.msra.mxu0 %v561
    %1429 = vmatprep.subr.mxu0 %v567
    %1430 = vmatpush1.msra.mxu0 %v566
    %1431 = vmatprep.subr.mxu0 %v572
    %1432 = vmatpush1.msra.mxu0 %v571
    %1433 = vmatprep.subr.mxu0 %v577
    %1434 = vmatpush1.msra.mxu0 %v576
    %1435 = vmatprep.subr.mxu0 %v582
    %1436 = vmatpush1.msra.mxu0 %v581
    %1437 = vmatprep.subr.mxu0 %v587
    %1438 = vmatpush1.msra.mxu0 %v586
    %1439 = vmatprep.subr.mxu0 %v592
    %1440 = vmatpush1.msra.mxu0 %v591
    %1441 = vmatprep.subr.mxu0 %v597
    %1442 = vmatpush1.msra.mxu0 %v596
    %1443 = vmatprep.subr.mxu0 %v602
    %1444 = vmatpush1.msra.mxu0 %v601
    %1445 = vmatprep.subr.mxu0 %v607
    %1446 = vmatpush1.msra.mxu0 %v606
    %1447 = vmatprep.subr.mxu0 %v612
    %1448 = vmatpush1.msra.mxu0 %v611
    %1449 = vmatprep.subr.mxu0 %v617
    %1450 = vmatpush1.msra.mxu0 %v616
    %1451 = vmatprep.subr.mxu0 %v622
    %1452 = vmatpush1.msra.mxu0 %v621
    %1453 = vmatprep.subr.mxu0 %v627
    %1454 = vmatpush1.msra.mxu0 %v626
    %1455 = vmatprep.subr.mxu0 %v632
    %1456 = vmatpush1.msra.mxu0 %v631
    %1457 = vmatprep.subr.mxu0 %v637
    %1458 = vmatpush1.msra.mxu0 %v636
    %1459 = vmatprep.subr.mxu0 %v642
    %1460 = vmatpush1.msra.mxu0 %v641
    %1461 = vmatprep.subr.mxu0 %v647
    %1462 = vmatpush1.msra.mxu0 %v646
    %1463 = vmatprep.subr.mxu0 %v652
    %1464 = vmatpush1.msra.mxu0 %v651
    %1465 = vmatprep.subr.mxu0 %v657
    %1466 = vmatpush1.msra.mxu0 %v656
    %1467 = vmatprep.subr.mxu0 %v662
    %1468 = vmatpush1.msra.mxu0 %v661
    %1469 = vmatprep.subr.mxu0 %v667
    %1470 = vmatpush1.msra.mxu0 %v666
    %1471 = vmatprep.subr.mxu0 %v672
    %1472 = vmatpush1.msra.mxu0 %v671
    %1473 = vmatprep.subr.mxu0 %v677
    %1474 = vmatpush1.msra.mxu0 %v676
    %1475 = vmatprep.subr.mxu0 %v682
    %1476 = vmatpush1.msra.mxu0 %v681
    %1477 = vmatprep.subr.mxu0 %v687
    %1478 = vmatpush1.msra.mxu0 %v686
    %1479 = vmatprep.subr.mxu0 %v692
    %1480 = vmatpush1.msra.mxu0 %v691
    %1481 = vmatprep.subr.mxu0 %v697
    %1482 = vmatpush1.msra.mxu0 %v696
    %1483 = vmatprep.subr.mxu0 %v702
    %1484 = vmatpush1.msra.mxu0 %v701
    %1485 = vmatprep.subr.mxu0 %v707
    %1486 = vmatpush1.msra.mxu0 %v706
    %1487 = vmatprep.subr.mxu0 %v712
    %1488 = vmatpush1.msra.mxu0 %v711
    %1489 = vmatprep.mubr.f32.mxu0 %v548
    %1490 = vmatmul.mubr.f32.gmra.mrb[0].mxu0 %v547
    %v1491 = vpop.f32.mrb[0].mxu0
    %v1492 = vadd.f32 %v1127, %v1491
    %v1493 = vpop.f32.mrb[0].mxu0
    %v1494 = vadd.f32 %v1131, %v1493
    %1495 = vdwg.mxu0
    %1496 = vmatprep.subr.mxu0 %v717
    %1497 = vmatpush1.msra.mxu0 %v716
    %1498 = vmatprep.subr.mxu0 %v722
    %1499 = vmatpush1.msra.mxu0 %v721
    %1500 = vmatprep.subr.mxu0 %v727
    %1501 = vmatpush1.msra.mxu0 %v726
    %1502 = vmatprep.subr.mxu0 %v732
    %1503 = vmatpush1.msra.mxu0 %v731
    %1504 = vmatprep.subr.mxu0 %v737
    %1505 = vmatpush1.msra.mxu0 %v736
    %1506 = vmatprep.subr.mxu0 %v742
    %1507 = vmatpush1.msra.mxu0 %v741
    %1508 = vmatprep.subr.mxu0 %v747
    %1509 = vmatpush1.msra.mxu0 %v746
    %1510 = vmatprep.subr.mxu0 %v752
    %1511 = vmatpush1.msra.mxu0 %v751
    %1512 = vmatprep.subr.mxu0 %v757
    %1513 = vmatpush1.msra.mxu0 %v756
    %1514 = vmatprep.subr.mxu0 %v762
    %1515 = vmatpush1.msra.mxu0 %v761
    %1516 = vmatprep.subr.mxu0 %v767
    %1517 = vmatpush1.msra.mxu0 %v766
    %1518 = vmatprep.subr.mxu0 %v772
    %1519 = vmatpush1.msra.mxu0 %v771
    %1520 = vmatprep.subr.mxu0 %v777
    %1521 = vmatpush1.msra.mxu0 %v776
    %1522 = vmatprep.subr.mxu0 %v782
    %1523 = vmatpush1.msra.mxu0 %v781
    %1524 = vmatprep.subr.mxu0 %v787
    %1525 = vmatpush1.msra.mxu0 %v786
    %1526 = vmatprep.subr.mxu0 %v792
    %1527 = vmatpush1.msra.mxu0 %v791
    %1528 = vmatprep.subr.mxu0 %v797
    %1529 = vmatpush1.msra.mxu0 %v796
    %1530 = vmatprep.subr.mxu0 %v802
    %1531 = vmatpush1.msra.mxu0 %v801
    %1532 = vmatprep.subr.mxu0 %v807
    %1533 = vmatpush1.msra.mxu0 %v806
    %1534 = vmatprep.subr.mxu0 %v812
    %1535 = vmatpush1.msra.mxu0 %v811
    %1536 = vmatprep.subr.mxu0 %v817
    %1537 = vmatpush1.msra.mxu0 %v816
    %1538 = vmatprep.subr.mxu0 %v822
    %1539 = vmatpush1.msra.mxu0 %v821
    %1540 = vmatprep.subr.mxu0 %v827
    %1541 = vmatpush1.msra.mxu0 %v826
    %1542 = vmatprep.subr.mxu0 %v832
    %1543 = vmatpush1.msra.mxu0 %v831
    %1544 = vmatprep.subr.mxu0 %v837
    %1545 = vmatpush1.msra.mxu0 %v836
    %1546 = vmatprep.subr.mxu0 %v842
    %1547 = vmatpush1.msra.mxu0 %v841
    %1548 = vmatprep.subr.mxu0 %v847
    %1549 = vmatpush1.msra.mxu0 %v846
    %1550 = vmatprep.subr.mxu0 %v852
    %1551 = vmatpush1.msra.mxu0 %v851
    %1552 = vmatprep.subr.mxu0 %v857
    %1553 = vmatpush1.msra.mxu0 %v856
    %1554 = vmatprep.subr.mxu0 %v862
    %1555 = vmatpush1.msra.mxu0 %v861
    %1556 = vmatprep.subr.mxu0 %v867
    %1557 = vmatpush1.msra.mxu0 %v866
    %1558 = vmatprep.subr.mxu0 %v872
    %1559 = vmatpush1.msra.mxu0 %v871
    %1560 = vmatprep.mubr.f32.mxu0 %v550
    %1561 = vmatmul.mubr.f32.gmra.mrb[0].mxu0 %v549
    %v1562 = vpop.f32.mrb[0].mxu0
    %v1563 = vadd.f32 %v1492, %v1562
    %v1564 = vpop.f32.mrb[0].mxu0
    %v1565 = vadd.f32 %v1494, %v1564
    %1566 = vdwg.mxu0
    %1567 = vmatprep.subr.mxu0 %v877
    %1568 = vmatpush1.msra.mxu0 %v876
    %1569 = vmatprep.subr.mxu0 %v882
    %1570 = vmatpush1.msra.mxu0 %v881
    %1571 = vmatprep.subr.mxu0 %v887
    %1572 = vmatpush1.msra.mxu0 %v886
    %1573 = vmatprep.subr.mxu0 %v892
    %1574 = vmatpush1.msra.mxu0 %v891
    %1575 = vmatprep.subr.mxu0 %v897
    %1576 = vmatpush1.msra.mxu0 %v896
    %1577 = vmatprep.subr.mxu0 %v902
    %1578 = vmatpush1.msra.mxu0 %v901
    %1579 = vmatprep.subr.mxu0 %v907
    %1580 = vmatpush1.msra.mxu0 %v906
    %1581 = vmatprep.subr.mxu0 %v912
    %1582 = vmatpush1.msra.mxu0 %v911
    %1583 = vmatprep.subr.mxu0 %v917
    %1584 = vmatpush1.msra.mxu0 %v916
    %1585 = vmatprep.subr.mxu0 %v922
    %1586 = vmatpush1.msra.mxu0 %v921
    %1587 = vmatprep.subr.mxu0 %v927
    %1588 = vmatpush1.msra.mxu0 %v926
    %1589 = vmatprep.subr.mxu0 %v932
    %1590 = vmatpush1.msra.mxu0 %v931
    %1591 = vmatprep.subr.mxu0 %v937
    %1592 = vmatpush1.msra.mxu0 %v936
    %1593 = vmatprep.subr.mxu0 %v942
    %1594 = vmatpush1.msra.mxu0 %v941
    %1595 = vmatprep.subr.mxu0 %v947
    %1596 = vmatpush1.msra.mxu0 %v946
    %1597 = vmatprep.subr.mxu0 %v952
    %1598 = vmatpush1.msra.mxu0 %v951
    %1599 = vmatprep.subr.mxu0 %v957
    %1600 = vmatpush1.msra.mxu0 %v956
    %1601 = vmatprep.subr.mxu0 %v962
    %1602 = vmatpush1.msra.mxu0 %v961
    %1603 = vmatprep.subr.mxu0 %v967
    %1604 = vmatpush1.msra.mxu0 %v966
    %1605 = vmatprep.subr.mxu0 %v972
    %1606 = vmatpush1.msra.mxu0 %v971
    %1607 = vmatprep.subr.mxu0 %v977
    %1608 = vmatpush1.msra.mxu0 %v976
    %1609 = vmatprep.subr.mxu0 %v982
    %1610 = vmatpush1.msra.mxu0 %v981
    %1611 = vmatprep.subr.mxu0 %v987
    %1612 = vmatpush1.msra.mxu0 %v986
    %1613 = vmatprep.subr.mxu0 %v992
    %1614 = vmatpush1.msra.mxu0 %v991
    %1615 = vmatprep.subr.mxu0 %v997
    %1616 = vmatpush1.msra.mxu0 %v996
    %1617 = vmatprep.subr.mxu0 %v1002
    %1618 = vmatpush1.msra.mxu0 %v1001
    %1619 = vmatprep.subr.mxu0 %v1007
    %1620 = vmatpush1.msra.mxu0 %v1006
    %1621 = vmatprep.subr.mxu0 %v1012
    %1622 = vmatpush1.msra.mxu0 %v1011
    %1623 = vmatprep.subr.mxu0 %v1017
    %1624 = vmatpush1.msra.mxu0 %v1016
    %1625 = vmatprep.subr.mxu0 %v1022
    %1626 = vmatpush1.msra.mxu0 %v1021
    %1627 = vmatprep.subr.mxu0 %v1027
    %1628 = vmatpush1.msra.mxu0 %v1026
    %1629 = vmatprep.subr.mxu0 %v1032
    %1630 = vmatpush1.msra.mxu0 %v1031
    %1631 = vmatprep.mubr.f32.mxu0 %v552
    %1632 = vmatmul.mubr.f32.gmra.mrb[0].mxu0 %v551
    %v1633 = vpop.f32.mrb[0].mxu0
    %v1634 = vadd.f32 %v1563, %v1633
    %v1635 = vpop.f32.mrb[0].mxu0
    %v1636 = vadd.f32 %v1565, %v1635
    %1637 = vdwg.mxu0
    %1638 = vmatprep.subr.mxu0 %v1037
    %1639 = vmatpush1.msra.mxu0 %v1036
    %1640 = vmatprep.subr.mxu0 %v1042
    %1641 = vmatpush1.msra.mxu0 %v1041
    %1642 = vmatprep.subr.mxu0 %v1047
    %1643 = vmatpush1.msra.mxu0 %v1046
    %1644 = vmatprep.subr.mxu0 %v1052
    %1645 = vmatpush1.msra.mxu0 %v1051
    %1646 = vmatprep.subr.mxu0 %v1057
    %1647 = vmatpush1.msra.mxu0 %v1056
    %1648 = vmatprep.subr.mxu0 %v1062
    %1649 = vmatpush1.msra.mxu0 %v1061
    %1650 = vmatprep.subr.mxu0 %v1067
    %1651 = vmatpush1.msra.mxu0 %v1066
    %1652 = vmatprep.subr.mxu0 %v1072
    %1653 = vmatpush1.msra.mxu0 %v1071
    %1654 = vmatprep.subr.mxu0 %v1077
    %1655 = vmatpush1.msra.mxu0 %v1076
    %1656 = vmatprep.subr.mxu0 %v1082
    %1657 = vmatpush1.msra.mxu0 %v1081
    %1658 = vmatprep.subr.mxu0 %v1087
    %1659 = vmatpush1.msra.mxu0 %v1086
    %1660 = vmatprep.subr.mxu0 %v1092
    %1661 = vmatpush1.msra.mxu0 %v1091
    %1662 = vmatprep.subr.mxu0 %v1097
    %1663 = vmatpush1.msra.mxu0 %v1096
    %1664 = vmatprep.subr.mxu0 %v1102
    %1665 = vmatpush1.msra.mxu0 %v1101
    %1666 = vmatprep.subr.mxu0 %v1107
    %1667 = vmatpush1.msra.mxu0 %v1106
    %1668 = vmatprep.subr.mxu0 %v1112
    %1669 = vmatpush1.msra.mxu0 %v1111
    %1670 = vmatprep.subr.mxu0 0.0
    %1671 = vmatpush1.msra.mxu0 0.0
    %1672 = vmatprep.subr.mxu0 0.0
    %1673 = vmatpush1.msra.mxu0 0.0
    %1674 = vmatprep.subr.mxu0 0.0
    %1675 = vmatpush1.msra.mxu0 0.0
    %1676 = vmatprep.subr.mxu0 0.0
    %1677 = vmatpush1.msra.mxu0 0.0
    %1678 = vmatprep.subr.mxu0 0.0
    %1679 = vmatpush1.msra.mxu0 0.0
    %1680 = vmatprep.subr.mxu0 0.0
    %1681 = vmatpush1.msra.mxu0 0.0
    %1682 = vmatprep.subr.mxu0 0.0
    %1683 = vmatpush1.msra.mxu0 0.0
    %1684 = vmatprep.subr.mxu0 0.0
    %1685 = vmatpush1.msra.mxu0 0.0
    %1686 = vmatprep.subr.mxu0 0.0
    %1687 = vmatpush1.msra.mxu0 0.0
    %1688 = vmatprep.subr.mxu0 0.0
    %1689 = vmatpush1.msra.mxu0 0.0
    %1690 = vmatprep.subr.mxu0 0.0
    %1691 = vmatpush1.msra.mxu0 0.0
    %1692 = vmatprep.subr.mxu0 0.0
    %1693 = vmatpush1.msra.mxu0 0.0
    %1694 = vmatprep.subr.mxu0 0.0
    %1695 = vmatpush1.msra.mxu0 0.0
    %1696 = vmatprep.subr.mxu0 0.0
    %1697 = vmatpush1.msra.mxu0 0.0
    %1698 = vmatprep.subr.mxu0 0.0
    %1699 = vmatpush1.msra.mxu0 0.0
    %1700 = vmatprep.subr.mxu0 0.0
    %1701 = vmatpush1.msra.mxu0 0.0
    %1702 = vmatprep.mubr.f32.mxu0 0.0
    %1703 = vmatmul.mubr.f32.gmra.mrb[0].mxu0 %v553
    %v1704 = vpop.f32.mrb[0].mxu0
    %v1705 = vadd.f32 %v1634, %v1704
    %v1706 = vpop.f32.mrb[0].mxu0
    %v1707 = vadd.f32 %v1636, %v1706
    %1708 = vdwg.mxu0
    %1709 = vmatprep.subr.mxu0 0.0
    %1710 = vmatpush1.msra.mxu0 %v558
    %1711 = vmatprep.subr.mxu0 0.0
    %1712 = vmatpush1.msra.mxu0 %v563
    %1713 = vmatprep.subr.mxu0 0.0
    %1714 = vmatpush1.msra.mxu0 %v568
    %1715 = vmatprep.subr.mxu0 0.0
    %1716 = vmatpush1.msra.mxu0 %v573
    %1717 = vmatprep.subr.mxu0 0.0
    %1718 = vmatpush1.msra.mxu0 %v578
    %1719 = vmatprep.subr.mxu0 0.0
    %1720 = vmatpush1.msra.mxu0 %v583
    %1721 = vmatprep.subr.mxu0 0.0
    %1722 = vmatpush1.msra.mxu0 %v588
    %1723 = vmatprep.subr.mxu0 0.0
    %1724 = vmatpush1.msra.mxu0 %v593
    %1725 = vmatprep.subr.mxu0 0.0
    %1726 = vmatpush1.msra.mxu0 %v598
    %1727 = vmatprep.subr.mxu0 0.0
    %1728 = vmatpush1.msra.mxu0 %v603
    %1729 = vmatprep.subr.mxu0 0.0
    %1730 = vmatpush1.msra.mxu0 %v608
    %1731 = vmatprep.subr.mxu0 0.0
    %1732 = vmatpush1.msra.mxu0 %v613
    %1733 = vmatprep.subr.mxu0 0.0
    %1734 = vmatpush1.msra.mxu0 %v618
    %1735 = vmatprep.subr.mxu0 0.0
    %1736 = vmatpush1.msra.mxu0 %v623
    %1737 = vmatprep.subr.mxu0 0.0
    %1738 = vmatpush1.msra.mxu0 %v628
    %1739 = vmatprep.subr.mxu0 0.0
    %1740 = vmatpush1.msra.mxu0 %v633
    %1741 = vmatprep.subr.mxu0 0.0
    %1742 = vmatpush1.msra.mxu0 %v638
    %1743 = vmatprep.subr.mxu0 0.0
    %1744 = vmatpush1.msra.mxu0 %v643
    %1745 = vmatprep.subr.mxu0 0.0
    %1746 = vmatpush1.msra.mxu0 %v648
    %1747 = vmatprep.subr.mxu0 0.0
    %1748 = vmatpush1.msra.mxu0 %v653
    %1749 = vmatprep.subr.mxu0 0.0
    %1750 = vmatpush1.msra.mxu0 %v658
    %1751 = vmatprep.subr.mxu0 0.0
    %1752 = vmatpush1.msra.mxu0 %v663
    %1753 = vmatprep.subr.mxu0 0.0
    %1754 = vmatpush1.msra.mxu0 %v668
    %1755 = vmatprep.subr.mxu0 0.0
    %1756 = vmatpush1.msra.mxu0 %v673
    %1757 = vmatprep.subr.mxu0 0.0
    %1758 = vmatpush1.msra.mxu0 %v678
    %1759 = vmatprep.subr.mxu0 0.0
    %1760 = vmatpush1.msra.mxu0 %v683
    %1761 = vmatprep.subr.mxu0 0.0
    %1762 = vmatpush1.msra.mxu0 %v688
    %1763 = vmatprep.subr.mxu0 0.0
    %1764 = vmatpush1.msra.mxu0 %v693
    %1765 = vmatprep.subr.mxu0 0.0
    %1766 = vmatpush1.msra.mxu0 %v698
    %1767 = vmatprep.subr.mxu0 0.0
    %1768 = vmatpush1.msra.mxu0 %v703
    %1769 = vmatprep.subr.mxu0 0.0
    %1770 = vmatpush1.msra.mxu0 %v708
    %1771 = vmatprep.subr.mxu0 0.0
    %1772 = vmatpush1.msra.mxu0 %v713
    %1773 = vmatprep.mubr.f32.mxu0 %v548
    %1774 = vmatmul.mubr.f32.gmra.mrb[0].mxu0 %v547
    %v1775 = vpop.f32.mrb[0].mxu0
    %v1776 = vadd.f32 %v1135, %v1775
    %v1777 = vpop.f32.mrb[0].mxu0
    %1778 = vdwg.mxu0
    %1779 = vmatprep.subr.mxu0 0.0
    %1780 = vmatpush1.msra.mxu0 %v718
    %1781 = vmatprep.subr.mxu0 0.0
    %1782 = vmatpush1.msra.mxu0 %v723
    %1783 = vmatprep.subr.mxu0 0.0
    %1784 = vmatpush1.msra.mxu0 %v728
    %1785 = vmatprep.subr.mxu0 0.0
    %1786 = vmatpush1.msra.mxu0 %v733
    %1787 = vmatprep.subr.mxu0 0.0
    %1788 = vmatpush1.msra.mxu0 %v738
    %1789 = vmatprep.subr.mxu0 0.0
    %1790 = vmatpush1.msra.mxu0 %v743
    %1791 = vmatprep.subr.mxu0 0.0
    %1792 = vmatpush1.msra.mxu0 %v748
    %1793 = vmatprep.subr.mxu0 0.0
    %1794 = vmatpush1.msra.mxu0 %v753
    %1795 = vmatprep.subr.mxu0 0.0
    %1796 = vmatpush1.msra.mxu0 %v758
    %1797 = vmatprep.subr.mxu0 0.0
    %1798 = vmatpush1.msra.mxu0 %v763
    %1799 = vmatprep.subr.mxu0 0.0
    %1800 = vmatpush1.msra.mxu0 %v768
    %1801 = vmatprep.subr.mxu0 0.0
    %1802 = vmatpush1.msra.mxu0 %v773
    %1803 = vmatprep.subr.mxu0 0.0
    %1804 = vmatpush1.msra.mxu0 %v778
    %1805 = vmatprep.subr.mxu0 0.0
    %1806 = vmatpush1.msra.mxu0 %v783
    %1807 = vmatprep.subr.mxu0 0.0
    %1808 = vmatpush1.msra.mxu0 %v788
    %1809 = vmatprep.subr.mxu0 0.0
    %1810 = vmatpush1.msra.mxu0 %v793
    %1811 = vmatprep.subr.mxu0 0.0
    %1812 = vmatpush1.msra.mxu0 %v798
    %1813 = vmatprep.subr.mxu0 0.0
    %1814 = vmatpush1.msra.mxu0 %v803
    %1815 = vmatprep.subr.mxu0 0.0
    %1816 = vmatpush1.msra.mxu0 %v808
    %1817 = vmatprep.subr.mxu0 0.0
    %1818 = vmatpush1.msra.mxu0 %v813
    %1819 = vmatprep.subr.mxu0 0.0
    %1820 = vmatpush1.msra.mxu0 %v818
    %1821 = vmatprep.subr.mxu0 0.0
    %1822 = vmatpush1.msra.mxu0 %v823
    %1823 = vmatprep.subr.mxu0 0.0
    %1824 = vmatpush1.msra.mxu0 %v828
    %1825 = vmatprep.subr.mxu0 0.0
    %1826 = vmatpush1.msra.mxu0 %v833
    %1827 = vmatprep.subr.mxu0 0.0
    %1828 = vmatpush1.msra.mxu0 %v838
    %1829 = vmatprep.subr.mxu0 0.0
    %1830 = vmatpush1.msra.mxu0 %v843
    %1831 = vmatprep.subr.mxu0 0.0
    %1832 = vmatpush1.msra.mxu0 %v848
    %1833 = vmatprep.subr.mxu0 0.0
    %1834 = vmatpush1.msra.mxu0 %v853
    %1835 = vmatprep.subr.mxu0 0.0
    %1836 = vmatpush1.msra.mxu0 %v858
    %1837 = vmatprep.subr.mxu0 0.0
    %1838 = vmatpush1.msra.mxu0 %v863
    %1839 = vmatprep.subr.mxu0 0.0
    %1840 = vmatpush1.msra.mxu0 %v868
    %1841 = vmatprep.subr.mxu0 0.0
    %1842 = vmatpush1.msra.mxu0 %v873
    %1843 = vmatprep.mubr.f32.mxu0 %v550
    %1844 = vmatmul.mubr.f32.gmra.mrb[0].mxu0 %v549
    %v1845 = vpop.f32.mrb[0].mxu0
    %v1846 = vadd.f32 %v1776, %v1845
    %v1847 = vpop.f32.mrb[0].mxu0
    %1848 = vdwg.mxu0
    %1849 = vmatprep.subr.mxu0 0.0
    %1850 = vmatpush1.msra.mxu0 %v878
    %1851 = vmatprep.subr.mxu0 0.0
    %1852 = vmatpush1.msra.mxu0 %v883
    %1853 = vmatprep.subr.mxu0 0.0
    %1854 = vmatpush1.msra.mxu0 %v888
    %1855 = vmatprep.subr.mxu0 0.0
    %1856 = vmatpush1.msra.mxu0 %v893
    %1857 = vmatprep.subr.mxu0 0.0
    %1858 = vmatpush1.msra.mxu0 %v898
    %1859 = vmatprep.subr.mxu0 0.0
    %1860 = vmatpush1.msra.mxu0 %v903
    %1861 = vmatprep.subr.mxu0 0.0
    %1862 = vmatpush1.msra.mxu0 %v908
    %1863 = vmatprep.subr.mxu0 0.0
    %1864 = vmatpush1.msra.mxu0 %v913
    %1865 = vmatprep.subr.mxu0 0.0
    %1866 = vmatpush1.msra.mxu0 %v918
    %1867 = vmatprep.subr.mxu0 0.0
    %1868 = vmatpush1.msra.mxu0 %v923
    %1869 = vmatprep.subr.mxu0 0.0
    %1870 = vmatpush1.msra.mxu0 %v928
    %1871 = vmatprep.subr.mxu0 0.0
    %1872 = vmatpush1.msra.mxu0 %v933
    %1873 = vmatprep.subr.mxu0 0.0
    %1874 = vmatpush1.msra.mxu0 %v938
    %1875 = vmatprep.subr.mxu0 0.0
    %1876 = vmatpush1.msra.mxu0 %v943
    %1877 = vmatprep.subr.mxu0 0.0
    %1878 = vmatpush1.msra.mxu0 %v948
    %1879 = vmatprep.subr.mxu0 0.0
    %1880 = vmatpush1.msra.mxu0 %v953
    %1881 = vmatprep.subr.mxu0 0.0
    %1882 = vmatpush1.msra.mxu0 %v958
    %1883 = vmatprep.subr.mxu0 0.0
    %1884 = vmatpush1.msra.mxu0 %v963
    %1885 = vmatprep.subr.mxu0 0.0
    %1886 = vmatpush1.msra.mxu0 %v968
    %1887 = vmatprep.subr.mxu0 0.0
    %1888 = vmatpush1.msra.mxu0 %v973
    %1889 = vmatprep.subr.mxu0 0.0
    %1890 = vmatpush1.msra.mxu0 %v978
    %1891 = vmatprep.subr.mxu0 0.0
    %1892 = vmatpush1.msra.mxu0 %v983
    %1893 = vmatprep.subr.mxu0 0.0
    %1894 = vmatpush1.msra.mxu0 %v988
    %1895 = vmatprep.subr.mxu0 0.0
    %1896 = vmatpush1.msra.mxu0 %v993
    %1897 = vmatprep.subr.mxu0 0.0
    %1898 = vmatpush1.msra.mxu0 %v998
    %1899 = vmatprep.subr.mxu0 0.0
    %1900 = vmatpush1.msra.mxu0 %v1003
    %1901 = vmatprep.subr.mxu0 0.0
    %1902 = vmatpush1.msra.mxu0 %v1008
    %1903 = vmatprep.subr.mxu0 0.0
    %1904 = vmatpush1.msra.mxu0 %v1013
    %1905 = vmatprep.subr.mxu0 0.0
    %1906 = vmatpush1.msra.mxu0 %v1018
    %1907 = vmatprep.subr.mxu0 0.0
    %1908 = vmatpush1.msra.mxu0 %v1023
    %1909 = vmatprep.subr.mxu0 0.0
    %1910 = vmatpush1.msra.mxu0 %v1028
    %1911 = vmatprep.subr.mxu0 0.0
    %1912 = vmatpush1.msra.mxu0 %v1033
    %1913 = vmatprep.mubr.f32.mxu0 %v552
    %1914 = vmatmul.mubr.f32.gmra.mrb[0].mxu0 %v551
    %v1915 = vpop.f32.mrb[0].mxu0
    %v1916 = vadd.f32 %v1846, %v1915
    %v1917 = vpop.f32.mrb[0].mxu0
    %1918 = vdwg.mxu0
    %1919 = vmatprep.subr.mxu0 0.0
    %1920 = vmatpush1.msra.mxu0 %v1038
    %1921 = vmatprep.subr.mxu0 0.0
    %1922 = vmatpush1.msra.mxu0 %v1043
    %1923 = vmatprep.subr.mxu0 0.0
    %1924 = vmatpush1.msra.mxu0 %v1048
    %1925 = vmatprep.subr.mxu0 0.0
    %1926 = vmatpush1.msra.mxu0 %v1053
    %1927 = vmatprep.subr.mxu0 0.0
    %1928 = vmatpush1.msra.mxu0 %v1058
    %1929 = vmatprep.subr.mxu0 0.0
    %1930 = vmatpush1.msra.mxu0 %v1063
    %1931 = vmatprep.subr.mxu0 0.0
    %1932 = vmatpush1.msra.mxu0 %v1068
    %1933 = vmatprep.subr.mxu0 0.0
    %1934 = vmatpush1.msra.mxu0 %v1073
    %1935 = vmatprep.subr.mxu0 0.0
    %1936 = vmatpush1.msra.mxu0 %v1078
    %1937 = vmatprep.subr.mxu0 0.0
    %1938 = vmatpush1.msra.mxu0 %v1083
    %1939 = vmatprep.subr.mxu0 0.0
    %1940 = vmatpush1.msra.mxu0 %v1088
    %1941 = vmatprep.subr.mxu0 0.0
    %1942 = vmatpush1.msra.mxu0 %v1093
    %1943 = vmatprep.subr.mxu0 0.0
    %1944 = vmatpush1.msra.mxu0 %v1098
    %1945 = vmatprep.subr.mxu0 0.0
    %1946 = vmatpush1.msra.mxu0 %v1103
    %1947 = vmatprep.subr.mxu0 0.0
    %1948 = vmatpush1.msra.mxu0 %v1108
    %1949 = vmatprep.subr.mxu0 0.0
    %1950 = vmatpush1.msra.mxu0 %v1113
    %1951 = vmatprep.subr.mxu0 0.0
    %1952 = vmatpush1.msra.mxu0 0.0
    %1953 = vmatprep.subr.mxu0 0.0
    %1954 = vmatpush1.msra.mxu0 0.0
    %1955 = vmatprep.subr.mxu0 0.0
    %1956 = vmatpush1.msra.mxu0 0.0
    %1957 = vmatprep.subr.mxu0 0.0
    %1958 = vmatpush1.msra.mxu0 0.0
    %1959 = vmatprep.subr.mxu0 0.0
    %1960 = vmatpush1.msra.mxu0 0.0
    %1961 = vmatprep.subr.mxu0 0.0
    %1962 = vmatpush1.msra.mxu0 0.0
    %1963 = vmatprep.subr.mxu0 0.0
    %1964 = vmatpush1.msra.mxu0 0.0
    %1965 = vmatprep.subr.mxu0 0.0
    %1966 = vmatpush1.msra.mxu0 0.0
    %1967 = vmatprep.subr.mxu0 0.0
    %1968 = vmatpush1.msra.mxu0 0.0
    %1969 = vmatprep.subr.mxu0 0.0
    %1970 = vmatpush1.msra.mxu0 0.0
    %1971 = vmatprep.subr.mxu0 0.0
    %1972 = vmatpush1.msra.mxu0 0.0
    %1973 = vmatprep.subr.mxu0 0.0
    %1974 = vmatpush1.msra.mxu0 0.0
    %1975 = vmatprep.subr.mxu0 0.0
    %1976 = vmatpush1.msra.mxu0 0.0
    %1977 = vmatprep.subr.mxu0 0.0
    %1978 = vmatpush1.msra.mxu0 0.0
    %1979 = vmatprep.subr.mxu0 0.0
    %1980 = vmatpush1.msra.mxu0 0.0
    %1981 = vmatprep.subr.mxu0 0.0
    %1982 = vmatpush1.msra.mxu0 0.0
    %1983 = vmatprep.mubr.f32.mxu0 0.0
    %1984 = vmatmul.mubr.f32.gmra.mrb[0].mxu0 %v553
    %v1985 = vpop.f32.mrb[0].mxu0
    %v1986 = vadd.f32 %v1916, %v1985
    %v1987 = vpop.f32.mrb[0].mxu0
    %1988 = vdwg.mxu0
    %v1989 = vmax.f32 %v1421, 0.0
    %v1990 = vmax.f32 %v1423, 0.0
    %v1991 = vmax.f32 %v1705, 0.0
    %v1992 = vmax.f32 %v1707, 0.0
    %v1993 = vmax.f32 %v1986, 0.0
    %v1994 = vld [vmem:[#allocation11] sm:$0xff]
    %v1995 = vld [vmem:[#allocation11 + $0x8] sm:$0xff]
    %v1996 = vld [vmem:[#allocation11 + $0x10] sm:$0xff]
    %v1997 = vld [vmem:[#allocation11 + $0x18] sm:$0xff]
    %v1998 = vld [vmem:[#allocation11 + $0x20] sm:$0xff]
    %v1999 = vld [vmem:[#allocation11 + $0x28] sm:$0xff]
    %v2000 = vld [vmem:[#allocation11 + $0x30] sm:$0xff]
    %v2001 = vld [vmem:[#allocation11 + $0x38] sm:$0xff]
    %v2002 = vld [vmem:[#allocation11 + $0x40] sm:$0xff]
    %v2003 = vld [vmem:[#allocation11 + $0x48] sm:$0xff]
    %v2004 = vld [vmem:[#allocation11 + $0x50] sm:$0xff]
    %v2005 = vld [vmem:[#allocation11 + $0x58] sm:$0xff]
    %v2006 = vld [vmem:[#allocation11 + $0x60] sm:$0xff]
    %v2007 = vld [vmem:[#allocation11 + $0x68] sm:$0xff]
    %v2008 = vld [vmem:[#allocation11 + $0x70] sm:$0xff]
    %v2009 = vld [vmem:[#allocation11 + $0x78] sm:$0xff]
    %v2010 = vld [vmem:[#allocation11 + $0x80] sm:$0xff]
    %v2011 = vld [vmem:[#allocation11 + $0x88] sm:$0xff]
    %v2012 = vld [vmem:[#allocation11 + $0x90] sm:$0xff]
    %v2013 = vld [vmem:[#allocation11 + $0x98] sm:$0xff]
    %v2014 = vld [vmem:[#allocation11 + $0xa0] sm:$0xff]
    %v2015 = vld [vmem:[#allocation11 + $0xa8] sm:$0xff]
    %v2016 = vld [vmem:[#allocation11 + $0xb0] sm:$0xff]
    %v2017 = vld [vmem:[#allocation11 + $0xb8] sm:$0xff]
    %v2018 = vld [vmem:[#allocation11 + $0xc0] sm:$0xff]
    %v2019 = vld [vmem:[#allocation11 + $0xc8] sm:$0xff]
    %v2020 = vld [vmem:[#allocation11 + $0xd0] sm:$0xff]
    %v2021 = vld [vmem:[#allocation11 + $0xd8] sm:$0xff]
    %v2022 = vld [vmem:[#allocation11 + $0xe0] sm:$0xff]
    %v2023 = vld [vmem:[#allocation11 + $0xe8] sm:$0xff]
    %v2024 = vld [vmem:[#allocation11 + $0xf0] sm:$0xff]
    %v2025 = vld [vmem:[#allocation11 + $0xf8] sm:$0xff]
    %v2026 = vld [vmem:[#allocation11 + $0x100] sm:$0xff]
    %v2027 = vld [vmem:[#allocation11 + $0x108] sm:$0xff]
    %v2028 = vld [vmem:[#allocation11 + $0x110] sm:$0xff]
    %v2029 = vld [vmem:[#allocation11 + $0x118] sm:$0xff]
    %v2030 = vld [vmem:[#allocation11 + $0x120] sm:$0xff]
    %v2031 = vld [vmem:[#allocation11 + $0x128] sm:$0xff]
    %v2032 = vld [vmem:[#allocation11 + $0x130] sm:$0xff]
    %v2033 = vld [vmem:[#allocation11 + $0x138] sm:$0xff]
    %v2034 = vld [vmem:[#allocation11 + $0x140] sm:$0xff]
    %v2035 = vld [vmem:[#allocation11 + $0x148] sm:$0xff]
    %v2036 = vld [vmem:[#allocation11 + $0x150] sm:$0xff]
    %v2037 = vld [vmem:[#allocation11 + $0x158] sm:$0xff]
    %v2038 = vld [vmem:[#allocation11 + $0x160] sm:$0xff]
    %v2039 = vld [vmem:[#allocation11 + $0x168] sm:$0xff]
    %v2040 = vld [vmem:[#allocation11 + $0x170] sm:$0xff]
    %v2041 = vld [vmem:[#allocation11 + $0x178] sm:$0xff]
    %v2042 = vld [vmem:[#allocation11 + $0x180] sm:$0xff]
    %v2043 = vld [vmem:[#allocation11 + $0x188] sm:$0xff]
    %v2044 = vld [vmem:[#allocation11 + $0x190] sm:$0xff]
    %v2045 = vld [vmem:[#allocation11 + $0x198] sm:$0xff]
    %v2046 = vld [vmem:[#allocation11 + $0x1a0] sm:$0xff]
    %v2047 = vld [vmem:[#allocation11 + $0x1a8] sm:$0xff]
    %v2048 = vld [vmem:[#allocation11 + $0x1b0] sm:$0xff]
    %v2049 = vld [vmem:[#allocation11 + $0x1b8] sm:$0xff]
    %v2050 = vld [vmem:[#allocation11 + $0x1c0] sm:$0xff]
    %v2051 = vld [vmem:[#allocation11 + $0x1c8] sm:$0xff]
    %v2052 = vld [vmem:[#allocation11 + $0x1d0] sm:$0xff]
    %v2053 = vld [vmem:[#allocation11 + $0x1d8] sm:$0xff]
    %v2054 = vld [vmem:[#allocation11 + $0x1e0] sm:$0xff]
    %v2055 = vld [vmem:[#allocation11 + $0x1e8] sm:$0xff]
    %v2056 = vld [vmem:[#allocation11 + $0x1f0] sm:$0xff]
    %v2057 = vld [vmem:[#allocation11 + $0x1f8] sm:$0xff]
    %v2058 = vld [vmem:[#allocation11 + $0x200] sm:$0xff]
    %v2059 = vld [vmem:[#allocation11 + $0x208] sm:$0xff]
    %v2060 = vld [vmem:[#allocation11 + $0x210] sm:$0xff]
    %v2061 = vld [vmem:[#allocation11 + $0x218] sm:$0xff]
    %v2062 = vld [vmem:[#allocation11 + $0x220] sm:$0xff]
    %v2063 = vld [vmem:[#allocation11 + $0x228] sm:$0xff]
    %v2064 = vld [vmem:[#allocation11 + $0x230] sm:$0xff]
    %v2065 = vld [vmem:[#allocation11 + $0x238] sm:$0xff]
    %v2066 = vld [vmem:[#allocation11 + $0x240] sm:$0xff]
    %v2067 = vld [vmem:[#allocation11 + $0x248] sm:$0xff]
    %v2068 = vld [vmem:[#allocation11 + $0x250] sm:$0xff]
    %v2069 = vld [vmem:[#allocation11 + $0x258] sm:$0xff]
    %v2070 = vld [vmem:[#allocation11 + $0x260] sm:$0xff]
    %v2071 = vld [vmem:[#allocation11 + $0x268] sm:$0xff]
    %v2072 = vld [vmem:[#allocation11 + $0x270] sm:$0xff]
    %v2073 = vld [vmem:[#allocation11 + $0x278] sm:$0xff]
    %v2074 = vld [vmem:[#allocation13] sm:$0x1]
    %v2076 = vlaneseq
    %v2077 = vshrl.u32 %v2076, 7
    %v2078 = vsub.s32 0, %v2077
    %v2079 = vrot.slane %v2074, %v2078
    %2081 = vmatprep.subr.mxu0 0.0
    %2082 = vmatpush1.msra.mxu0 %v1994
    %2083 = vmatprep.subr.mxu0 0.0
    %2084 = vmatpush1.msra.mxu0 %v1995
    %2085 = vmatprep.subr.mxu0 0.0
    %2086 = vmatpush1.msra.mxu0 %v1996
    %2087 = vmatprep.subr.mxu0 0.0
    %2088 = vmatpush1.msra.mxu0 %v1997
    %2089 = vmatprep.subr.mxu0 0.0
    %2090 = vmatpush1.msra.mxu0 %v1998
    %2091 = vmatprep.subr.mxu0 0.0
    %2092 = vmatpush1.msra.mxu0 %v1999
    %2093 = vmatprep.subr.mxu0 0.0
    %2094 = vmatpush1.msra.mxu0 %v2000
    %2095 = vmatprep.subr.mxu0 0.0
    %2096 = vmatpush1.msra.mxu0 %v2001
    %2097 = vmatprep.subr.mxu0 0.0
    %2098 = vmatpush1.msra.mxu0 %v2002
    %2099 = vmatprep.subr.mxu0 0.0
    %2100 = vmatpush1.msra.mxu0 %v2003
    %2101 = vmatprep.subr.mxu0 0.0
    %2102 = vmatpush1.msra.mxu0 %v2004
    %2103 = vmatprep.subr.mxu0 0.0
    %2104 = vmatpush1.msra.mxu0 %v2005
    %2105 = vmatprep.subr.mxu0 0.0
    %2106 = vmatpush1.msra.mxu0 %v2006
    %2107 = vmatprep.subr.mxu0 0.0
    %2108 = vmatpush1.msra.mxu0 %v2007
    %2109 = vmatprep.subr.mxu0 0.0
    %2110 = vmatpush1.msra.mxu0 %v2008
    %2111 = vmatprep.subr.mxu0 0.0
    %2112 = vmatpush1.msra.mxu0 %v2009
    %2113 = vmatprep.subr.mxu0 0.0
    %2114 = vmatpush1.msra.mxu0 %v2010
    %2115 = vmatprep.subr.mxu0 0.0
    %2116 = vmatpush1.msra.mxu0 %v2011
    %2117 = vmatprep.subr.mxu0 0.0
    %2118 = vmatpush1.msra.mxu0 %v2012
    %2119 = vmatprep.subr.mxu0 0.0
    %2120 = vmatpush1.msra.mxu0 %v2013
    %2121 = vmatprep.subr.mxu0 0.0
    %2122 = vmatpush1.msra.mxu0 %v2014
    %2123 = vmatprep.subr.mxu0 0.0
    %2124 = vmatpush1.msra.mxu0 %v2015
    %2125 = vmatprep.subr.mxu0 0.0
    %2126 = vmatpush1.msra.mxu0 %v2016
    %2127 = vmatprep.subr.mxu0 0.0
    %2128 = vmatpush1.msra.mxu0 %v2017
    %2129 = vmatprep.subr.mxu0 0.0
    %2130 = vmatpush1.msra.mxu0 %v2018
    %2131 = vmatprep.subr.mxu0 0.0
    %2132 = vmatpush1.msra.mxu0 %v2019
    %2133 = vmatprep.subr.mxu0 0.0
    %2134 = vmatpush1.msra.mxu0 %v2020
    %2135 = vmatprep.subr.mxu0 0.0
    %2136 = vmatpush1.msra.mxu0 %v2021
    %2137 = vmatprep.subr.mxu0 0.0
    %2138 = vmatpush1.msra.mxu0 %v2022
    %2139 = vmatprep.subr.mxu0 0.0
    %2140 = vmatpush1.msra.mxu0 %v2023
    %2141 = vmatprep.subr.mxu0 0.0
    %2142 = vmatpush1.msra.mxu0 %v2024
    %2143 = vmatprep.subr.mxu0 0.0
    %2144 = vmatpush1.msra.mxu0 %v2025
    %2145 = vmatprep.mubr.f32.mxu0 %v1990
    %2146 = vmatmul.mubr.f32.gmra.mrb[0].mxu0 %v1989
    %v2147 = vpop.f32.mrb[0].mxu0
    %v2148 = vadd.f32 %v2079, %v2147
    %v2149 = vpop.f32.mrb[0].mxu0
    %2150 = vdwg.mxu0
    %2151 = vmatprep.subr.mxu0 0.0
    %2152 = vmatpush1.msra.mxu0 %v2026
    %2153 = vmatprep.subr.mxu0 0.0
    %2154 = vmatpush1.msra.mxu0 %v2027
    %2155 = vmatprep.subr.mxu0 0.0
    %2156 = vmatpush1.msra.mxu0 %v2028
    %2157 = vmatprep.subr.mxu0 0.0
    %2158 = vmatpush1.msra.mxu0 %v2029
    %2159 = vmatprep.subr.mxu0 0.0
    %2160 = vmatpush1.msra.mxu0 %v2030
    %2161 = vmatprep.subr.mxu0 0.0
    %2162 = vmatpush1.msra.mxu0 %v2031
    %2163 = vmatprep.subr.mxu0 0.0
    %2164 = vmatpush1.msra.mxu0 %v2032
    %2165 = vmatprep.subr.mxu0 0.0
    %2166 = vmatpush1.msra.mxu0 %v2033
    %2167 = vmatprep.subr.mxu0 0.0
    %2168 = vmatpush1.msra.mxu0 %v2034
    %2169 = vmatprep.subr.mxu0 0.0
    %2170 = vmatpush1.msra.mxu0 %v2035
    %2171 = vmatprep.subr.mxu0 0.0
    %2172 = vmatpush1.msra.mxu0 %v2036
    %2173 = vmatprep.subr.mxu0 0.0
    %2174 = vmatpush1.msra.mxu0 %v2037
    %2175 = vmatprep.subr.mxu0 0.0
    %2176 = vmatpush1.msra.mxu0 %v2038
    %2177 = vmatprep.subr.mxu0 0.0
    %2178 = vmatpush1.msra.mxu0 %v2039
    %2179 = vmatprep.subr.mxu0 0.0
    %2180 = vmatpush1.msra.mxu0 %v2040
    %2181 = vmatprep.subr.mxu0 0.0
    %2182 = vmatpush1.msra.mxu0 %v2041
    %2183 = vmatprep.subr.mxu0 0.0
    %2184 = vmatpush1.msra.mxu0 %v2042
    %2185 = vmatprep.subr.mxu0 0.0
    %2186 = vmatpush1.msra.mxu0 %v2043
    %2187 = vmatprep.subr.mxu0 0.0
    %2188 = vmatpush1.msra.mxu0 %v2044
    %2189 = vmatprep.subr.mxu0 0.0
    %2190 = vmatpush1.msra.mxu0 %v2045
    %2191 = vmatprep.subr.mxu0 0.0
    %2192 = vmatpush1.msra.mxu0 %v2046
    %2193 = vmatprep.subr.mxu0 0.0
    %2194 = vmatpush1.msra.mxu0 %v2047
    %2195 = vmatprep.subr.mxu0 0.0
    %2196 = vmatpush1.msra.mxu0 %v2048
    %2197 = vmatprep.subr.mxu0 0.0
    %2198 = vmatpush1.msra.mxu0 %v2049
    %2199 = vmatprep.subr.mxu0 0.0
    %2200 = vmatpush1.msra.mxu0 %v2050
    %2201 = vmatprep.subr.mxu0 0.0
    %2202 = vmatpush1.msra.mxu0 %v2051
    %2203 = vmatprep.subr.mxu0 0.0
    %2204 = vmatpush1.msra.mxu0 %v2052
    %2205 = vmatprep.subr.mxu0 0.0
    %2206 = vmatpush1.msra.mxu0 %v2053
    %2207 = vmatprep.subr.mxu0 0.0
    %2208 = vmatpush1.msra.mxu0 %v2054
    %2209 = vmatprep.subr.mxu0 0.0
    %2210 = vmatpush1.msra.mxu0 %v2055
    %2211 = vmatprep.subr.mxu0 0.0
    %2212 = vmatpush1.msra.mxu0 %v2056
    %2213 = vmatprep.subr.mxu0 0.0
    %2214 = vmatpush1.msra.mxu0 %v2057
    %2215 = vmatprep.mubr.f32.mxu0 %v1992
    %2216 = vmatmul.mubr.f32.gmra.mrb[0].mxu0 %v1991
    %v2217 = vpop.f32.mrb[0].mxu0
    %v2218 = vadd.f32 %v2148, %v2217
    %v2219 = vpop.f32.mrb[0].mxu0
    %2220 = vdwg.mxu0
    %2221 = vmatprep.subr.mxu0 0.0
    %2222 = vmatpush1.msra.mxu0 %v2058
    %2223 = vmatprep.subr.mxu0 0.0
    %2224 = vmatpush1.msra.mxu0 %v2059
    %2225 = vmatprep.subr.mxu0 0.0
    %2226 = vmatpush1.msra.mxu0 %v2060
    %2227 = vmatprep.subr.mxu0 0.0
    %2228 = vmatpush1.msra.mxu0 %v2061
    %2229 = vmatprep.subr.mxu0 0.0
    %2230 = vmatpush1.msra.mxu0 %v2062
    %2231 = vmatprep.subr.mxu0 0.0
    %2232 = vmatpush1.msra.mxu0 %v2063
    %2233 = vmatprep.subr.mxu0 0.0
    %2234 = vmatpush1.msra.mxu0 %v2064
    %2235 = vmatprep.subr.mxu0 0.0
    %2236 = vmatpush1.msra.mxu0 %v2065
    %2237 = vmatprep.subr.mxu0 0.0
    %2238 = vmatpush1.msra.mxu0 %v2066
    %2239 = vmatprep.subr.mxu0 0.0
    %2240 = vmatpush1.msra.mxu0 %v2067
    %2241 = vmatprep.subr.mxu0 0.0
    %2242 = vmatpush1.msra.mxu0 %v2068
    %2243 = vmatprep.subr.mxu0 0.0
    %2244 = vmatpush1.msra.mxu0 %v2069
    %2245 = vmatprep.subr.mxu0 0.0
    %2246 = vmatpush1.msra.mxu0 %v2070
    %2247 = vmatprep.subr.mxu0 0.0
    %2248 = vmatpush1.msra.mxu0 %v2071
    %2249 = vmatprep.subr.mxu0 0.0
    %2250 = vmatpush1.msra.mxu0 %v2072
    %2251 = vmatprep.subr.mxu0 0.0
    %2252 = vmatpush1.msra.mxu0 %v2073
    %2253 = vmatprep.subr.mxu0 0.0
    %2254 = vmatpush1.msra.mxu0 0.0
    %2255 = vmatprep.subr.mxu0 0.0
    %2256 = vmatpush1.msra.mxu0 0.0
    %2257 = vmatprep.subr.mxu0 0.0
    %2258 = vmatpush1.msra.mxu0 0.0
    %2259 = vmatprep.subr.mxu0 0.0
    %2260 = vmatpush1.msra.mxu0 0.0
    %2261 = vmatprep.subr.mxu0 0.0
    %2262 = vmatpush1.msra.mxu0 0.0
    %2263 = vmatprep.subr.mxu0 0.0
    %2264 = vmatpush1.msra.mxu0 0.0
    %2265 = vmatprep.subr.mxu0 0.0
    %2266 = vmatpush1.msra.mxu0 0.0
    %2267 = vmatprep.subr.mxu0 0.0
    %2268 = vmatpush1.msra.mxu0 0.0
    %2269 = vmatprep.subr.mxu0 0.0
    %2270 = vmatpush1.msra.mxu0 0.0
    %2271 = vmatprep.subr.mxu0 0.0
    %2272 = vmatpush1.msra.mxu0 0.0
    %2273 = vmatprep.subr.mxu0 0.0
    %2274 = vmatpush1.msra.mxu0 0.0
    %2275 = vmatprep.subr.mxu0 0.0
    %2276 = vmatpush1.msra.mxu0 0.0
    %2277 = vmatprep.subr.mxu0 0.0
    %2278 = vmatpush1.msra.mxu0 0.0
    %2279 = vmatprep.subr.mxu0 0.0
    %2280 = vmatpush1.msra.mxu0 0.0
    %2281 = vmatprep.subr.mxu0 0.0
    %2282 = vmatpush1.msra.mxu0 0.0
    %2283 = vmatprep.subr.mxu0 0.0
    %2284 = vmatpush1.msra.mxu0 0.0
    %2285 = vmatprep.mubr.f32.mxu0 0.0
    %2286 = vmatmul.mubr.f32.gmra.mrb[0].mxu0 %v1993
    %v2287 = vpop.f32.mrb[0].mxu0
    %v2288 = vadd.f32 %v2218, %v2287
    %v2289 = vpop.f32.mrb[0].mxu0
    %2290 = vdwg.mxu0
    %v2291 = vtanh.pop %v2288
    %2292 = vst [vmem:[#allocation14] sm:$0xff] %v2291
    // Predicated region
    $region58: #{tpu_custom_call.1} parent=1 // pred_check
      _
    $region59: #{tpu_custom_call.1} parent=1 // pred_check_branch
      %2294 = sbr.rel (0) target = $region61
    $region60: #{tpu_custom_call.1} parent=1 // pred_region
      %s2296 = ssub.s32 128, 128
      %2297 = vsyncadd [#allocation4], %s2296
      %s2299 = sshll.u32 [#allocation14], 4
      %s2300 = int_to_ptr.vmem [resolvable:$true] %s2299
      %2302 = dma.vmem_to_hbm [thread:$0]  %s2300, 128, %s7, [#allocation4]
    $region61: #{tpu_custom_call.1} parent=1 // pred_fallthru
      _
    // Predicated region
    $region62: #{tpu_custom_call.1} parent=1 // pred_check
      _
    $region63: #{tpu_custom_call.1} parent=1 // pred_check_branch
      %2304 = sbr.rel (0) target = $region65
    $region64: #{tpu_custom_call.1} parent=1 // pred_region
      %2305 = dma.done [#allocation4], 128
    $region65: #{tpu_custom_call.1} parent=1 // pred_fallthru
      _
    %2306 = vsyncpa [#allocation3], 1
    %2307 = vsyncpa [#allocation6], 1
    %2308 = vsyncpa [#allocation9], 1
    %2309 = vsyncpa [#allocation12], 1
    %2310 = vsyncpa [#allocation4], 1

// kernel: tpu_custom_call.1
$region0: #{tpu_custom_call.1}
  #allocation0 [shape = 'u32[]', space=smem, size = 0x4, offset = 0x4, fixed_abs, tag = 'smem constant byte address 0x4 - core index']
  #allocation1 [shape = 'u32[144,128]{1,0:T(1,128)}', space=vmem, size = 0x12000, scoped, tag = 'internal scratch']
  %s0 = inlined_call_operand.hbm [shape: f32[8,128], index: 0, kind: input, shape index: {}]
  %s1 = inlined_call_operand.hbm [shape: f32[128,896], index: 1, kind: input, shape index: {}]
  %s2 = inlined_call_operand.hbm [shape: f32[1,896], index: 2, kind: input, shape index: {}]
  %s3 = inlined_call_operand.hbm [shape: f32[896,640], index: 3, kind: input, shape index: {}]
  %s4 = inlined_call_operand.hbm [shape: f32[1,640], index: 4, kind: input, shape index: {}]
  %s5 = inlined_call_operand.hbm [shape: f32[640,128], index: 5, kind: input, shape index: {}]
  %s6 = inlined_call_operand.hbm [shape: f32[1,128], index: 6, kind: input, shape index: {}]
  %s7 = inlined_call_operand.hbm [shape: f32[8,128], index: 7, kind: output, shape index: {}]
  %s8 = sld [smem:[#allocation0]]
  $region66: #{tpu_custom_call.1} parent=0
    _
  %s10 = ssub.s32 1, %s8
  %s11 = scalar_select 0, %s10, %s8
  $region1: #{tpu_custom_call.1} parent=0
    #allocation2 [shape = 'u8[4096]{0}', space=vmem, size = 0x1000, scoped, tag = 'input window, operand 0, single buffered']
    #allocation3 [shape = 's32[1]{0}', space=sflag, size = 0x4, scoped, tag = 'scoped memory for tpu_custom_call.1']
    #allocation4 [shape = 's32[1]{0}', space=sflag, size = 0x4, scoped, tag = 'scoped memory for tpu_custom_call.1']
    #allocation5 [shape = 'u8[458752]{0}', space=vmem, size = 0x70000, scoped, tag = 'input window, operand 1, single buffered']
    #allocation6 [shape = 's32[1]{0}', space=sflag, size = 0x4, scoped, tag = 'scoped memory for tpu_custom_call.1']
    #allocation7 [shape = 'u8[3584]{0}', space=vmem, size = 0x1000, scoped, tag = 'input window, operand 2, single buffered']
    #allocation8 [shape = 'u8[2293760]{0}', space=vmem, size = 0x230000, scoped, tag = 'input window, operand 3, single buffered']
    #allocation9 [shape = 's32[1]{0}', space=sflag, size = 0x4, scoped, tag = 'scoped memory for tpu_custom_call.1']
    #allocation10 [shape = 'u8[2560]{0}', space=vmem, size = 0xc00, scoped, tag = 'input window, operand 4, single buffered']
    #allocation11 [shape = 'u8[327680]{0}', space=vmem, size = 0x50000, scoped, tag = 'input window, operand 5, single buffered']
    #allocation12 [shape = 's32[1]{0}', space=sflag, size = 0x4, scoped, tag = 'scoped memory for tpu_custom_call.1']
    #allocation13 [shape = 'u8[512]{0}', space=vmem, size = 0x400, scoped, tag = 'input window, operand 6, single buffered']
    #allocation14 [shape = 'u8[4096]{0}', space=vmem, size = 0x1000, scoped, tag = 'output window, operand 0, single buffered']
    %12 = vsyncpa [#allocation3], 0
    %13 = vsyncpa [#allocation6], 0
    %14 = vsyncpa [#allocation9], 0
    %15 = vsyncpa [#allocation12], 0
    %16 = vsyncpa [#allocation4], 0
    // Predicated region
    $region2: #{tpu_custom_call.1} parent=1 // pred_check
      _
    $region3: #{tpu_custom_call.1} parent=1 // pred_check_branch
      %18 = sbr.rel (0) target = $region5
    $region4: #{tpu_custom_call.1} parent=1 // pred_region
      %s20 = ssub.s32 128, 128
      %21 = vsyncadd [#allocation3], %s20
      %s23 = sshll.u32 [#allocation2], 4
      %s24 = int_to_ptr.vmem [resolvable:$true] %s23
      %26 = dma.hbm_to_vmem [thread:$0]  %s0, 128, %s24, [#allocation3]
    $region5: #{tpu_custom_call.1} parent=1 // pred_fallthru
      _
    // Predicated region
    $region6: #{tpu_custom_call.1} parent=1 // pred_check
      _
    $region7: #{tpu_custom_call.1} parent=1 // pred_check_branch
      %28 = sbr.rel (0) target = $region9
    $region8: #{tpu_custom_call.1} parent=1 // pred_region
      %s30 = ssub.s32 14336, 14336
      %31 = vsyncadd [#allocation6], %s30
      %s32 = sshll.u32 [#allocation5], 4
      %s33 = int_to_ptr.vmem [resolvable:$true] %s32
      %38 = dma.hbm_to_vmem [thread:$0]  %s1, 14336, %s33, [#allocation6], 896, 896, 56
    $region9: #{tpu_custom_call.1} parent=1 // pred_fallthru
      _
    // Predicated region
    $region10: #{tpu_custom_call.1} parent=1 // pred_check
      _
    $region11: #{tpu_custom_call.1} parent=1 // pred_check_branch
      %40 = sbr.rel (0) target = $region13
    $region12: #{tpu_custom_call.1} parent=1 // pred_region
      %s42 = ssub.s32 112, 112
      %43 = vsyncadd [#allocation6], %s42
      %s45 = sshll.u32 [#allocation7], 4
      %s46 = int_to_ptr.vmem [resolvable:$true] %s45
      %48 = dma.hbm_to_vmem [thread:$0]  %s2, 112, %s46, [#allocation6]
    $region13: #{tpu_custom_call.1} parent=1 // pred_fallthru
      _
    // Predicated region
    $region14: #{tpu_custom_call.1} parent=1 // pred_check
      _
    $region15: #{tpu_custom_call.1} parent=1 // pred_check_branch
      %50 = sbr.rel (0) target = $region17
    $region16: #{tpu_custom_call.1} parent=1 // pred_region
      %s52 = ssub.s32 71680, 71680
      %53 = vsyncadd [#allocation9], %s52
      %s54 = sshll.u32 [#allocation8], 4
      %s55 = int_to_ptr.vmem [resolvable:$true] %s54
      %60 = dma.hbm_to_vmem [thread:$0]  %s3, 71680, %s55, [#allocation9], 640, 640, 40
    $region17: #{tpu_custom_call.1} parent=1 // pred_fallthru
      _
    // Predicated region
    $region18: #{tpu_custom_call.1} parent=1 // pred_check
      _
    $region19: #{tpu_custom_call.1} parent=1 // pred_check_branch
      %62 = sbr.rel (0) target = $region21
    $region20: #{tpu_custom_call.1} parent=1 // pred_region
      %s64 = ssub.s32 80, 80
      %65 = vsyncadd [#allocation9], %s64
      %s67 = sshll.u32 [#allocation10], 4
      %s68 = int_to_ptr.vmem [resolvable:$true] %s67
      %70 = dma.hbm_to_vmem [thread:$0]  %s4, 80, %s68, [#allocation9]
    $region21: #{tpu_custom_call.1} parent=1 // pred_fallthru
      _
    // Predicated region
    $region22: #{tpu_custom_call.1} parent=1 // pred_check
      _
    $region23: #{tpu_custom_call.1} parent=1 // pred_check_branch
      %72 = sbr.rel (0) target = $region25
    $region24: #{tpu_custom_call.1} parent=1 // pred_region
      %s74 = ssub.s32 10240, 10240
      %75 = vsyncadd [#allocation12], %s74
      %s76 = sshll.u32 [#allocation11], 4
      %s77 = int_to_ptr.vmem [resolvable:$true] %s76
      %82 = dma.hbm_to_vmem [thread:$0]  %s5, 10240, %s77, [#allocation12], 128, 128, 8
    $region25: #{tpu_custom_call.1} parent=1 // pred_fallthru
      _
    // Predicated region
    $region26: #{tpu_custom_call.1} parent=1 // pred_check
      _
    $region27: #{tpu_custom_call.1} parent=1 // pred_check_branch
      %84 = sbr.rel (0) target = $region29
    $region28: #{tpu_custom_call.1} parent=1 // pred_region
      %s86 = ssub.s32 16, 16
      %87 = vsyncadd [#allocation12], %s86
      %s89 = sshll.u32 [#allocation13], 4
      %s90 = int_to_ptr.vmem [resolvable:$true] %s89
      %92 = dma.hbm_to_vmem [thread:$0]  %s6, 16, %s90, [#allocation12]
    $region29: #{tpu_custom_call.1} parent=1 // pred_fallthru
      _
    // Predicated region
    $region30: #{tpu_custom_call.1} parent=1 // pred_check
      _
    $region31: #{tpu_custom_call.1} parent=1 // pred_check_branch
      %94 = sbr.rel (0) target = $region33
    $region32: #{tpu_custom_call.1} parent=1 // pred_region
      %95 = dma.done [#allocation3], 128
    $region33: #{tpu_custom_call.1} parent=1 // pred_fallthru
      _
    // Predicated region
    $region34: #{tpu_custom_call.1} parent=1 // pred_check
      _
    $region35: #{tpu_custom_call.1} parent=1 // pred_check_branch
      %97 = sbr.rel (0) target = $region37
    $region36: #{tpu_custom_call.1} parent=1 // pred_region
      %98 = dma.done [#allocation6], 14336
    $region37: #{tpu_custom_call.1} parent=1 // pred_fallthru
      _
    // Predicated region
    $region38: #{tpu_custom_call.1} parent=1 // pred_check
      _
    $region39: #{tpu_custom_call.1} parent=1 // pred_check_branch
      %100 = sbr.rel (0) target = $region41
    $region40: #{tpu_custom_call.1} parent=1 // pred_region
      %101 = dma.done [#allocation6], 112
    $region41: #{tpu_custom_call.1} parent=1 // pred_fallthru
      _
    // Predicated region
    $region42: #{tpu_custom_call.1} parent=1 // pred_check
      _
    $region43: #{tpu_custom_call.1} parent=1 // pred_check_branch
      %103 = sbr.rel (0) target = $region45
    $region44: #{tpu_custom_call.1} parent=1 // pred_region
      %104 = dma.done [#allocation9], 71680
    $region45: #{tpu_custom_call.1} parent=1 // pred_fallthru
      _
    // Predicated region
    $region46: #{tpu_custom_call.1} parent=1 // pred_check
      _
    $region47: #{tpu_custom_call.1} parent=1 // pred_check_branch
      %106 = sbr.rel (0) target = $region49
    $region48: #{tpu_custom_call.1} parent=1 // pred_region
      %107 = dma.done [#allocation9], 80
    $region49: #{tpu_custom_call.1} parent=1 // pred_fallthru
      _
    // Predicated region
    $region50: #{tpu_custom_call.1} parent=1 // pred_check
      _
    $region51: #{tpu_custom_call.1} parent=1 // pred_check_branch
      %109 = sbr.rel (0) target = $region53
    $region52: #{tpu_custom_call.1} parent=1 // pred_region
      %110 = dma.done [#allocation12], 10240
    $region53: #{tpu_custom_call.1} parent=1 // pred_fallthru
      _
    // Predicated region
    $region54: #{tpu_custom_call.1} parent=1 // pred_check
      _
    $region55: #{tpu_custom_call.1} parent=1 // pred_check_branch
      %112 = sbr.rel (0) target = $region57
    $region56: #{tpu_custom_call.1} parent=1 // pred_region
      %113 = dma.done [#allocation12], 16
    $region57: #{tpu_custom_call.1} parent=1 // pred_fallthru
      _
    %v114 = vld [vmem:[#allocation2] sm:$0xff]
    %v115 = vld [vmem:[#allocation5] sm:$0xff]
    %v116 = vld [vmem:[#allocation5 + $0x8] sm:$0xff]
    %v117 = vld [vmem:[#allocation5 + $0x10] sm:$0xff]
    %v118 = vld [vmem:[#allocation5 + $0x18] sm:$0xff]
    %v119 = vld [vmem:[#allocation5 + $0x20] sm:$0xff]
    %v120 = vld [vmem:[#allocation5 + $0x28] sm:$0xff]
    %v121 = vld [vmem:[#allocation5 + $0x30] sm:$0xff]
    %v122 = vld [vmem:[#allocation5 + $0x38] sm:$0xff]
    %v123 = vld [vmem:[#allocation5 + $0x40] sm:$0xff]
    %v124 = vld [vmem:[#allocation5 + $0x48] sm:$0xff]
    %v125 = vld [vmem:[#allocation5 + $0x50] sm:$0xff]
    %v126 = vld [vmem:[#allocation5 + $0x58] sm:$0xff]
    %v127 = vld [vmem:[#allocation5 + $0x60] sm:$0xff]
    %v128 = vld [vmem:[#allocation5 + $0x68] sm:$0xff]
    %v129 = vld [vmem:[#allocation5 + $0x70] sm:$0xff]
    %v130 = vld [vmem:[#allocation5 + $0x78] sm:$0xff]
    %v131 = vld [vmem:[#allocation5 + $0x80] sm:$0xff]
    %v132 = vld [vmem:[#allocation5 + $0x88] sm:$0xff]
    %v133 = vld [vmem:[#allocation5 + $0x90] sm:$0xff]
    %v134 = vld [vmem:[#allocation5 + $0x98] sm:$0xff]
    %v135 = vld [vmem:[#allocation5 + $0xa0] sm:$0xff]
    %v136 = vld [vmem:[#allocation5 + $0xa8] sm:$0xff]
    %v137 = vld [vmem:[#allocation5 + $0xb0] sm:$0xff]
    %v138 = vld [vmem:[#allocation5 + $0xb8] sm:$0xff]
    %v139 = vld [vmem:[#allocation5 + $0xc0] sm:$0xff]
    %v140 = vld [vmem:[#allocation5 + $0xc8] sm:$0xff]
    %v141 = vld [vmem:[#allocation5 + $0xd0] sm:$0xff]
    %v142 = vld [vmem:[#allocation5 + $0xd8] sm:$0xff]
    %v143 = vld [vmem:[#allocation5 + $0xe0] sm:$0xff]
    %v144 = vld [vmem:[#allocation5 + $0xe8] sm:$0xff]
    %v145 = vld [vmem:[#allocation5 + $0xf0] sm:$0xff]
    %v146 = vld [vmem:[#allocation5 + $0xf8] sm:$0xff]
    %v147 = vld [vmem:[#allocation5 + $0x100] sm:$0xff]
    %v148 = vld [vmem:[#allocation5 + $0x108] sm:$0xff]
    %v149 = vld [vmem:[#allocation5 + $0x110] sm:$0xff]
    %v150 = vld [vmem:[#allocation5 + $0x118] sm:$0xff]
    %v151 = vld [vmem:[#allocation5 + $0x120] sm:$0xff]
    %v152 = vld [vmem:[#allocation5 + $0x128] sm:$0xff]
    %v153 = vld [vmem:[#allocation5 + $0x130] sm:$0xff]
    %v154 = vld [vmem:[#allocation5 + $0x138] sm:$0xff]
    %v155 = vld [vmem:[#allocation5 + $0x140] sm:$0xff]
    %v156 = vld [vmem:[#allocation5 + $0x148] sm:$0xff]
    %v157 = vld [vmem:[#allocation5 + $0x150] sm:$0xff]
    %v158 = vld [vmem:[#allocation5 + $0x158] sm:$0xff]
    %v159 = vld [vmem:[#allocation5 + $0x160] sm:$0xff]
    %v160 = vld [vmem:[#allocation5 + $0x168] sm:$0xff]
    %v161 = vld [vmem:[#allocation5 + $0x170] sm:$0xff]
    %v162 = vld [vmem:[#allocation5 + $0x178] sm:$0xff]
    %v163 = vld [vmem:[#allocation5 + $0x180] sm:$0xff]
    %v164 = vld [vmem:[#allocation5 + $0x188] sm:$0xff]
    %v165 = vld [vmem:[#allocation5 + $0x190] sm:$0xff]
    %v166 = vld [vmem:[#allocation5 + $0x198] sm:$0xff]
    %v167 = vld [vmem:[#allocation5 + $0x1a0] sm:$0xff]
    %v168 = vld [vmem:[#allocation5 + $0x1a8] sm:$0xff]
    %v169 = vld [vmem:[#allocation5 + $0x1b0] sm:$0xff]
    %v170 = vld [vmem:[#allocation5 + $0x1b8] sm:$0xff]
    %v171 = vld [vmem:[#allocation5 + $0x1c0] sm:$0xff]
    %v172 = vld [vmem:[#allocation5 + $0x1c8] sm:$0xff]
    %v173 = vld [vmem:[#allocation5 + $0x1d0] sm:$0xff]
    %v174 = vld [vmem:[#allocation5 + $0x1d8] sm:$0xff]
    %v175 = vld [vmem:[#allocation5 + $0x1e0] sm:$0xff]
    %v176 = vld [vmem:[#allocation5 + $0x1e8] sm:$0xff]
    %v177 = vld [vmem:[#allocation5 + $0x1f0] sm:$0xff]
    %v178 = vld [vmem:[#allocation5 + $0x1f8] sm:$0xff]
    %v179 = vld [vmem:[#allocation5 + $0x200] sm:$0xff]
    %v180 = vld [vmem:[#allocation5 + $0x208] sm:$0xff]
    %v181 = vld [vmem:[#allocation5 + $0x210] sm:$0xff]
    %v182 = vld [vmem:[#allocation5 + $0x218] sm:$0xff]
    %v183 = vld [vmem:[#allocation5 + $0x220] sm:$0xff]
    %v184 = vld [vmem:[#allocation5 + $0x228] sm:$0xff]
    %v185 = vld [vmem:[#allocation5 + $0x230] sm:$0xff]
    %v186 = vld [vmem:[#allocation5 + $0x238] sm:$0xff]
    %v187 = vld [vmem:[#allocation5 + $0x240] sm:$0xff]
    %v188 = vld [vmem:[#allocation5 + $0x248] sm:$0xff]
    %v189 = vld [vmem:[#allocation5 + $0x250] sm:$0xff]
    %v190 = vld [vmem:[#allocation5 + $0x258] sm:$0xff]
    %v191 = vld [vmem:[#allocation5 + $0x260] sm:$0xff]
    %v192 = vld [vmem:[#allocation5 + $0x268] sm:$0xff]
    %v193 = vld [vmem:[#allocation5 + $0x270] sm:$0xff]
    %v194 = vld [vmem:[#allocation5 + $0x278] sm:$0xff]
    %v195 = vld [vmem:[#allocation5 + $0x280] sm:$0xff]
    %v196 = vld [vmem:[#allocation5 + $0x288] sm:$0xff]
    %v197 = vld [vmem:[#allocation5 + $0x290] sm:$0xff]
    %v198 = vld [vmem:[#allocation5 + $0x298] sm:$0xff]
    %v199 = vld [vmem:[#allocation5 + $0x2a0] sm:$0xff]
    %v200 = vld [vmem:[#allocation5 + $0x2a8] sm:$0xff]
    %v201 = vld [vmem:[#allocation5 + $0x2b0] sm:$0xff]
    %v202 = vld [vmem:[#allocation5 + $0x2b8] sm:$0xff]
    %v203 = vld [vmem:[#allocation5 + $0x2c0] sm:$0xff]
    %v204 = vld [vmem:[#allocation5 + $0x2c8] sm:$0xff]
    %v205 = vld [vmem:[#allocation5 + $0x2d0] sm:$0xff]
    %v206 = vld [vmem:[#allocation5 + $0x2d8] sm:$0xff]
    %v207 = vld [vmem:[#allocation5 + $0x2e0] sm:$0xff]
    %v208 = vld [vmem:[#allocation5 + $0x2e8] sm:$0xff]
    %v209 = vld [vmem:[#allocation5 + $0x2f0] sm:$0xff]
    %v210 = vld [vmem:[#allocation5 + $0x2f8] sm:$0xff]
    %v211 = vld [vmem:[#allocation5 + $0x300] sm:$0xff]
    %v212 = vld [vmem:[#allocation5 + $0x308] sm:$0xff]
    %v213 = vld [vmem:[#allocation5 + $0x310] sm:$0xff]
    %v214 = vld [vmem:[#allocation5 + $0x318] sm:$0xff]
    %v215 = vld [vmem:[#allocation5 + $0x320] sm:$0xff]
    %v216 = vld [vmem:[#allocation5 + $0x328] sm:$0xff]
    %v217 = vld [vmem:[#allocation5 + $0x330] sm:$0xff]
    %v218 = vld [vmem:[#allocation5 + $0x338] sm:$0xff]
    %v219 = vld [vmem:[#allocation5 + $0x340] sm:$0xff]
    %v220 = vld [vmem:[#allocation5 + $0x348] sm:$0xff]
    %v221 = vld [vmem:[#allocation5 + $0x350] sm:$0xff]
    %v222 = vld [vmem:[#allocation5 + $0x358] sm:$0xff]
    %v223 = vld [vmem:[#allocation5 + $0x360] sm:$0xff]
    %v224 = vld [vmem:[#allocation5 + $0x368] sm:$0xff]
    %v225 = vld [vmem:[#allocation5 + $0x370] sm:$0xff]
    %v226 = vld [vmem:[#allocation5 + $0x378] sm:$0xff]
    %v227 = vld [vmem:[#allocation7] sm:$0xff]
    %v229 = vlaneseq
    %v230 = vshrl.u32 %v229, 7
    %v231 = vsub.s32 0, %v230
    %v232 = vrot.slane %v227, %v231
    %v233 = vlaneseq
    %v234 = vshrl.u32 %v233, 7
    %v235 = vsub.s32 1, %v234
    %v236 = vrot.slane %v227, %v235
    %v237 = vlaneseq
    %v238 = vshrl.u32 %v237, 7
    %v239 = vsub.s32 2, %v238
    %v240 = vrot.slane %v227, %v239
    %v241 = vlaneseq
    %v242 = vshrl.u32 %v241, 7
    %v243 = vsub.s32 3, %v242
    %v244 = vrot.slane %v227, %v243
    %v245 = vlaneseq
    %v246 = vshrl.u32 %v245, 7
    %v247 = vsub.s32 4, %v246
    %v248 = vrot.slane %v227, %v247
    %v249 = vlaneseq
    %v250 = vshrl.u32 %v249, 7
    %v251 = vsub.s32 5, %v250
    %v252 = vrot.slane %v227, %v251
    %v253 = vlaneseq
    %v254 = vshrl.u32 %v253, 7
    %v255 = vsub.s32 6, %v254
    %v256 = vrot.slane %v227, %v255
    %264 = vmatprep.subr.mxu0 %v116
    %265 = vmatpush1.msra.mxu0 %v115
    %266 = vmatprep.subr.mxu0 %v123
    %267 = vmatpush1.msra.mxu0 %v122
    %268 = vmatprep.subr.mxu0 %v130
    %269 = vmatpush1.msra.mxu0 %v129
    %270 = vmatprep.subr.mxu0 %v137
    %271 = vmatpush1.msra.mxu0 %v136
    %272 = vmatprep.subr.mxu0 %v144
    %273 = vmatpush1.msra.mxu0 %v143
    %274 = vmatprep.subr.mxu0 %v151
    %275 = vmatpush1.msra.mxu0 %v150
    %276 = vmatprep.subr.mxu0 %v158
    %277 = vmatpush1.msra.mxu0 %v157
    %278 = vmatprep.subr.mxu0 %v165
    %279 = vmatpush1.msra.mxu0 %v164
    %280 = vmatprep.subr.mxu0 %v172
    %281 = vmatpush1.msra.mxu0 %v171
    %282 = vmatprep.subr.mxu0 %v179
    %283 = vmatpush1.msra.mxu0 %v178
    %284 = vmatprep.subr.mxu0 %v186
    %285 = vmatpush1.msra.mxu0 %v185
    %286 = vmatprep.subr.mxu0 %v193
    %287 = vmatpush1.msra.mxu0 %v192
    %288 = vmatprep.subr.mxu0 %v200
    %289 = vmatpush1.msra.mxu0 %v199
    %290 = vmatprep.subr.mxu0 %v207
    %291 = vmatpush1.msra.mxu0 %v206
    %292 = vmatprep.subr.mxu0 %v214
    %293 = vmatpush1.msra.mxu0 %v213
    %294 = vmatprep.subr.mxu0 %v221
    %295 = vmatpush1.msra.mxu0 %v220
    %296 = vmatprep.subr.mxu0 0.0
    %297 = vmatpush1.msra.mxu0 0.0
    %298 = vmatprep.subr.mxu0 0.0
    %299 = vmatpush1.msra.mxu0 0.0
    %300 = vmatprep.subr.mxu0 0.0
    %301 = vmatpush1.msra.mxu0 0.0
    %302 = vmatprep.subr.mxu0 0.0
    %303 = vmatpush1.msra.mxu0 0.0
    %304 = vmatprep.subr.mxu0 0.0
    %305 = vmatpush1.msra.mxu0 0.0
    %306 = vmatprep.subr.mxu0 0.0
    %307 = vmatpush1.msra.mxu0 0.0
    %308 = vmatprep.subr.mxu0 0.0
    %309 = vmatpush1.msra.mxu0 0.0
    %310 = vmatprep.subr.mxu0 0.0
    %311 = vmatpush1.msra.mxu0 0.0
    %312 = vmatprep.subr.mxu0 0.0
    %313 = vmatpush1.msra.mxu0 0.0
    %314 = vmatprep.subr.mxu0 0.0
    %315 = vmatpush1.msra.mxu0 0.0
    %316 = vmatprep.subr.mxu0 0.0
    %317 = vmatpush1.msra.mxu0 0.0
    %318 = vmatprep.subr.mxu0 0.0
    %319 = vmatpush1.msra.mxu0 0.0
    %320 = vmatprep.subr.mxu0 0.0
    %321 = vmatpush1.msra.mxu0 0.0
    %322 = vmatprep.subr.mxu0 0.0
    %323 = vmatpush1.msra.mxu0 0.0
    %324 = vmatprep.subr.mxu0 0.0
    %325 = vmatpush1.msra.mxu0 0.0
    %326 = vmatprep.subr.mxu0 0.0
    %327 = vmatpush1.msra.mxu0 0.0
    %328 = vmatprep.mubr.f32.mxu0 0.0
    %329 = vmatmul.mubr.f32.gmra.mrb[0].mxu0 %v114
    %v330 = vpop.f32.mrb[0].mxu0
    %v331 = vadd.f32 %v232, %v330
    %v332 = vpop.f32.mrb[0].mxu0
    %v333 = vadd.f32 %v236, %v332
    %334 = vdwg.mxu0
    %335 = vmatprep.subr.mxu0 %v118
    %336 = vmatpush1.msra.mxu0 %v117
    %337 = vmatprep.subr.mxu0 %v125
    %338 = vmatpush1.msra.mxu0 %v124
    %339 = vmatprep.subr.mxu0 %v132
    %340 = vmatpush1.msra.mxu0 %v131
    %341 = vmatprep.subr.mxu0 %v139
    %342 = vmatpush1.msra.mxu0 %v138
    %343 = vmatprep.subr.mxu0 %v146
    %344 = vmatpush1.msra.mxu0 %v145
    %345 = vmatprep.subr.mxu0 %v153
    %346 = vmatpush1.msra.mxu0 %v152
    %347 = vmatprep.subr.mxu0 %v160
    %348 = vmatpush1.msra.mxu0 %v159
    %349 = vmatprep.subr.mxu0 %v167
    %350 = vmatpush1.msra.mxu0 %v166
    %351 = vmatprep.subr.mxu0 %v174
    %352 = vmatpush1.msra.mxu0 %v173
    %353 = vmatprep.subr.mxu0 %v181
    %354 = vmatpush1.msra.mxu0 %v180
    %355 = vmatprep.subr.mxu0 %v188
    %356 = vmatpush1.msra.mxu0 %v187
    %357 = vmatprep.subr.mxu0 %v195
    %358 = vmatpush1.msra.mxu0 %v194
    %359 = vmatprep.subr.mxu0 %v202
    %360 = vmatpush1.msra.mxu0 %v201
    %361 = vmatprep.subr.mxu0 %v209
    %362 = vmatpush1.msra.mxu0 %v208
    %363 = vmatprep.subr.mxu0 %v216
    %364 = vmatpush1.msra.mxu0 %v215
    %365 = vmatprep.subr.mxu0 %v223
    %366 = vmatpush1.msra.mxu0 %v222
    %367 = vmatprep.subr.mxu0 0.0
    %368 = vmatpush1.msra.mxu0 0.0
    %369 = vmatprep.subr.mxu0 0.0
    %370 = vmatpush1.msra.mxu0 0.0
    %371 = vmatprep.subr.mxu0 0.0
    %372 = vmatpush1.msra.mxu0 0.0
    %373 = vmatprep.subr.mxu0 0.0
    %374 = vmatpush1.msra.mxu0 0.0
    %375 = vmatprep.subr.mxu0 0.0
    %376 = vmatpush1.msra.mxu0 0.0
    %377 = vmatprep.subr.mxu0 0.0
    %378 = vmatpush1.msra.mxu0 0.0
    %379 = vmatprep.subr.mxu0 0.0
    %380 = vmatpush1.msra.mxu0 0.0
    %381 = vmatprep.subr.mxu0 0.0
    %382 = vmatpush1.msra.mxu0 0.0
    %383 = vmatprep.subr.mxu0 0.0
    %384 = vmatpush1.msra.mxu0 0.0
    %385 = vmatprep.subr.mxu0 0.0
    %386 = vmatpush1.msra.mxu0 0.0
    %387 = vmatprep.subr.mxu0 0.0
    %388 = vmatpush1.msra.mxu0 0.0
    %389 = vmatprep.subr.mxu0 0.0
    %390 = vmatpush1.msra.mxu0 0.0
    %391 = vmatprep.subr.mxu0 0.0
    %392 = vmatpush1.msra.mxu0 0.0
    %393 = vmatprep.subr.mxu0 0.0
    %394 = vmatpush1.msra.mxu0 0.0
    %395 = vmatprep.subr.mxu0 0.0
    %396 = vmatpush1.msra.mxu0 0.0
    %397 = vmatprep.subr.mxu0 0.0
    %398 = vmatpush1.msra.mxu0 0.0
    %399 = vmatprep.mubr.f32.mxu0 0.0
    %400 = vmatmul.mubr.f32.gmra.mrb[0].mxu0 %v114
    %v401 = vpop.f32.mrb[0].mxu0
    %v402 = vadd.f32 %v240, %v401
    %v403 = vpop.f32.mrb[0].mxu0
    %v404 = vadd.f32 %v244, %v403
    %405 = vdwg.mxu0
    %406 = vmatprep.subr.mxu0 %v120
    %407 = vmatpush1.msra.mxu0 %v119
    %408 = vmatprep.subr.mxu0 %v127
    %409 = vmatpush1.msra.mxu0 %v126
    %410 = vmatprep.subr.mxu0 %v134
    %411 = vmatpush1.msra.mxu0 %v133
    %412 = vmatprep.subr.mxu0 %v141
    %413 = vmatpush1.msra.mxu0 %v140
    %414 = vmatprep.subr.mxu0 %v148
    %415 = vmatpush1.msra.mxu0 %v147
    %416 = vmatprep.subr.mxu0 %v155
    %417 = vmatpush1.msra.mxu0 %v154
    %418 = vmatprep.subr.mxu0 %v162
    %419 = vmatpush1.msra.mxu0 %v161
    %420 = vmatprep.subr.mxu0 %v169
    %421 = vmatpush1.msra.mxu0 %v168
    %422 = vmatprep.subr.mxu0 %v176
    %423 = vmatpush1.msra.mxu0 %v175
    %424 = vmatprep.subr.mxu0 %v183
    %425 = vmatpush1.msra.mxu0 %v182
    %426 = vmatprep.subr.mxu0 %v190
    %427 = vmatpush1.msra.mxu0 %v189
    %428 = vmatprep.subr.mxu0 %v197
    %429 = vmatpush1.msra.mxu0 %v196
    %430 = vmatprep.subr.mxu0 %v204
    %431 = vmatpush1.msra.mxu0 %v203
    %432 = vmatprep.subr.mxu0 %v211
    %433 = vmatpush1.msra.mxu0 %v210
    %434 = vmatprep.subr.mxu0 %v218
    %435 = vmatpush1.msra.mxu0 %v217
    %436 = vmatprep.subr.mxu0 %v225
    %437 = vmatpush1.msra.mxu0 %v224
    %438 = vmatprep.subr.mxu0 0.0
    %439 = vmatpush1.msra.mxu0 0.0
    %440 = vmatprep.subr.mxu0 0.0
    %441 = vmatpush1.msra.mxu0 0.0
    %442 = vmatprep.subr.mxu0 0.0
    %443 = vmatpush1.msra.mxu0 0.0
    %444 = vmatprep.subr.mxu0 0.0
    %445 = vmatpush1.msra.mxu0 0.0
    %446 = vmatprep.subr.mxu0 0.0
    %447 = vmatpush1.msra.mxu0 0.0
    %448 = vmatprep.subr.mxu0 0.0
    %449 = vmatpush1.msra.mxu0 0.0
    %450 = vmatprep.subr.mxu0 0.0
    %451 = vmatpush1.msra.mxu0 0.0
    %452 = vmatprep.subr.mxu0 0.0
    %453 = vmatpush1.msra.mxu0 0.0
    %454 = vmatprep.subr.mxu0 0.0
    %455 = vmatpush1.msra.mxu0 0.0
    %456 = vmatprep.subr.mxu0 0.0
    %457 = vmatpush1.msra.mxu0 0.0
    %458 = vmatprep.subr.mxu0 0.0
    %459 = vmatpush1.msra.mxu0 0.0
    %460 = vmatprep.subr.mxu0 0.0
    %461 = vmatpush1.msra.mxu0 0.0
    %462 = vmatprep.subr.mxu0 0.0
    %463 = vmatpush1.msra.mxu0 0.0
    %464 = vmatprep.subr.mxu0 0.0
    %465 = vmatpush1.msra.mxu0 0.0
    %466 = vmatprep.subr.mxu0 0.0
    %467 = vmatpush1.msra.mxu0 0.0
    %468 = vmatprep.subr.mxu0 0.0
    %469 = vmatpush1.msra.mxu0 0.0
    %470 = vmatprep.mubr.f32.mxu0 0.0
    %471 = vmatmul.mubr.f32.gmra.mrb[0].mxu0 %v114
    %v472 = vpop.f32.mrb[0].mxu0
    %v473 = vadd.f32 %v248, %v472
    %v474 = vpop.f32.mrb[0].mxu0
    %v475 = vadd.f32 %v252, %v474
    %476 = vdwg.mxu0
    %477 = vmatprep.subr.mxu0 0.0
    %478 = vmatpush1.msra.mxu0 %v121
    %479 = vmatprep.subr.mxu0 0.0
    %480 = vmatpush1.msra.mxu0 %v128
    %481 = vmatprep.subr.mxu0 0.0
    %482 = vmatpush1.msra.mxu0 %v135
    %483 = vmatprep.subr.mxu0 0.0
    %484 = vmatpush1.msra.mxu0 %v142
    %485 = vmatprep.subr.mxu0 0.0
    %486 = vmatpush1.msra.mxu0 %v149
    %487 = vmatprep.subr.mxu0 0.0
    %488 = vmatpush1.msra.mxu0 %v156
    %489 = vmatprep.subr.mxu0 0.0
    %490 = vmatpush1.msra.mxu0 %v163
    %491 = vmatprep.subr.mxu0 0.0
    %492 = vmatpush1.msra.mxu0 %v170
    %493 = vmatprep.subr.mxu0 0.0
    %494 = vmatpush1.msra.mxu0 %v177
    %495 = vmatprep.subr.mxu0 0.0
    %496 = vmatpush1.msra.mxu0 %v184
    %497 = vmatprep.subr.mxu0 0.0
    %498 = vmatpush1.msra.mxu0 %v191
    %499 = vmatprep.subr.mxu0 0.0
    %500 = vmatpush1.msra.mxu0 %v198
    %501 = vmatprep.subr.mxu0 0.0
    %502 = vmatpush1.msra.mxu0 %v205
    %503 = vmatprep.subr.mxu0 0.0
    %504 = vmatpush1.msra.mxu0 %v212
    %505 = vmatprep.subr.mxu0 0.0
    %506 = vmatpush1.msra.mxu0 %v219
    %507 = vmatprep.subr.mxu0 0.0
    %508 = vmatpush1.msra.mxu0 %v226
    %509 = vmatprep.subr.mxu0 0.0
    %510 = vmatpush1.msra.mxu0 0.0
    %511 = vmatprep.subr.mxu0 0.0
    %512 = vmatpush1.msra.mxu0 0.0
    %513 = vmatprep.subr.mxu0 0.0
    %514 = vmatpush1.msra.mxu0 0.0
    %515 = vmatprep.subr.mxu0 0.0
    %516 = vmatpush1.msra.mxu0 0.0
    %517 = vmatprep.subr.mxu0 0.0
    %518 = vmatpush1.msra.mxu0 0.0
    %519 = vmatprep.subr.mxu0 0.0
    %520 = vmatpush1.msra.mxu0 0.0
    %521 = vmatprep.subr.mxu0 0.0
    %522 = vmatpush1.msra.mxu0 0.0
    %523 = vmatprep.subr.mxu0 0.0
    %524 = vmatpush1.msra.mxu0 0.0
    %525 = vmatprep.subr.mxu0 0.0
    %526 = vmatpush1.msra.mxu0 0.0
    %527 = vmatprep.subr.mxu0 0.0
    %528 = vmatpush1.msra.mxu0 0.0
    %529 = vmatprep.subr.mxu0 0.0
    %530 = vmatpush1.msra.mxu0 0.0
    %531 = vmatprep.subr.mxu0 0.0
    %532 = vmatpush1.msra.mxu0 0.0
    %533 = vmatprep.subr.mxu0 0.0
    %534 = vmatpush1.msra.mxu0 0.0
    %535 = vmatprep.subr.mxu0 0.0
    %536 = vmatpush1.msra.mxu0 0.0
    %537 = vmatprep.subr.mxu0 0.0
    %538 = vmatpush1.msra.mxu0 0.0
    %539 = vmatprep.subr.mxu0 0.0
    %540 = vmatpush1.msra.mxu0 0.0
    %541 = vmatprep.mubr.f32.mxu0 0.0
    %542 = vmatmul.mubr.f32.gmra.mrb[0].mxu0 %v114
    %v543 = vpop.f32.mrb[0].mxu0
    %v544 = vadd.f32 %v256, %v543
    %v545 = vpop.f32.mrb[0].mxu0
    %546 = vdwg.mxu0
    %v547 = vmax.f32 %v331, 0.0
    %v548 = vmax.f32 %v333, 0.0
    %v549 = vmax.f32 %v402, 0.0
    %v550 = vmax.f32 %v404, 0.0
    %v551 = vmax.f32 %v473, 0.0
    %v552 = vmax.f32 %v475, 0.0
    %v553 = vmax.f32 %v544, 0.0
    %v554 = vld [vmem:[#allocation8] sm:$0xff]
    %v555 = vld [vmem:[#allocation8 + $0x8] sm:$0xff]
    %v556 = vld [vmem:[#allocation8 + $0x10] sm:$0xff]
    %v557 = vld [vmem:[#allocation8 + $0x18] sm:$0xff]
    %v558 = vld [vmem:[#allocation8 + $0x20] sm:$0xff]
    %v559 = vld [vmem:[#allocation8 + $0x28] sm:$0xff]
    %v560 = vld [vmem:[#allocation8 + $0x30] sm:$0xff]
    %v561 = vld [vmem:[#allocation8 + $0x38] sm:$0xff]
    %v562 = vld [vmem:[#allocation8 + $0x40] sm:$0xff]
    %v563 = vld [vmem:[#allocation8 + $0x48] sm:$0xff]
    %v564 = vld [vmem:[#allocation8 + $0x50] sm:$0xff]
    %v565 = vld [vmem:[#allocation8 + $0x58] sm:$0xff]
    %v566 = vld [vmem:[#allocation8 + $0x60] sm:$0xff]
    %v567 = vld [vmem:[#allocation8 + $0x68] sm:$0xff]
    %v568 = vld [vmem:[#allocation8 + $0x70] sm:$0xff]
    %v569 = vld [vmem:[#allocation8 + $0x78] sm:$0xff]
    %v570 = vld [vmem:[#allocation8 + $0x80] sm:$0xff]
    %v571 = vld [vmem:[#allocation8 + $0x88] sm:$0xff]
    %v572 = vld [vmem:[#allocation8 + $0x90] sm:$0xff]
    %v573 = vld [vmem:[#allocation8 + $0x98] sm:$0xff]
    %v574 = vld [vmem:[#allocation8 + $0xa0] sm:$0xff]
    %v575 = vld [vmem:[#allocation8 + $0xa8] sm:$0xff]
    %v576 = vld [vmem:[#allocation8 + $0xb0] sm:$0xff]
    %v577 = vld [vmem:[#allocation8 + $0xb8] sm:$0xff]
    %v578 = vld [vmem:[#allocation8 + $0xc0] sm:$0xff]
    %v579 = vld [vmem:[#allocation8 + $0xc8] sm:$0xff]
    %v580 = vld [vmem:[#allocation8 + $0xd0] sm:$0xff]
    %v581 = vld [vmem:[#allocation8 + $0xd8] sm:$0xff]
    %v582 = vld [vmem:[#allocation8 + $0xe0] sm:$0xff]
    %v583 = vld [vmem:[#allocation8 + $0xe8] sm:$0xff]
    %v584 = vld [vmem:[#allocation8 + $0xf0] sm:$0xff]
    %v585 = vld [vmem:[#allocation8 + $0xf8] sm:$0xff]
    %v586 = vld [vmem:[#allocation8 + $0x100] sm:$0xff]
    %v587 = vld [vmem:[#allocation8 + $0x108] sm:$0xff]
    %v588 = vld [vmem:[#allocation8 + $0x110] sm:$0xff]
    %v589 = vld [vmem:[#allocation8 + $0x118] sm:$0xff]
    %v590 = vld [vmem:[#allocation8 + $0x120] sm:$0xff]
    %v591 = vld [vmem:[#allocation8 + $0x128] sm:$0xff]
    %v592 = vld [vmem:[#allocation8 + $0x130] sm:$0xff]
    %v593 = vld [vmem:[#allocation8 + $0x138] sm:$0xff]
    %v594 = vld [vmem:[#allocation8 + $0x140] sm:$0xff]
    %v595 = vld [vmem:[#allocation8 + $0x148] sm:$0xff]
    %v596 = vld [vmem:[#allocation8 + $0x150] sm:$0xff]
    %v597 = vld [vmem:[#allocation8 + $0x158] sm:$0xff]
    %v598 = vld [vmem:[#allocation8 + $0x160] sm:$0xff]
    %v599 = vld [vmem:[#allocation8 + $0x168] sm:$0xff]
    %v600 = vld [vmem:[#allocation8 + $0x170] sm:$0xff]
    %v601 = vld [vmem:[#allocation8 + $0x178] sm:$0xff]
    %v602 = vld [vmem:[#allocation8 + $0x180] sm:$0xff]
    %v603 = vld [vmem:[#allocation8 + $0x188] sm:$0xff]
    %v604 = vld [vmem:[#allocation8 + $0x190] sm:$0xff]
    %v605 = vld [vmem:[#allocation8 + $0x198] sm:$0xff]
    %v606 = vld [vmem:[#allocation8 + $0x1a0] sm:$0xff]
    %v607 = vld [vmem:[#allocation8 + $0x1a8] sm:$0xff]
    %v608 = vld [vmem:[#allocation8 + $0x1b0] sm:$0xff]
    %v609 = vld [vmem:[#allocation8 + $0x1b8] sm:$0xff]
    %v610 = vld [vmem:[#allocation8 + $0x1c0] sm:$0xff]
    %v611 = vld [vmem:[#allocation8 + $0x1c8] sm:$0xff]
    %v612 = vld [vmem:[#allocation8 + $0x1d0] sm:$0xff]
    %v613 = vld [vmem:[#allocation8 + $0x1d8] sm:$0xff]
    %v614 = vld [vmem:[#allocation8 + $0x1e0] sm:$0xff]
    %v615 = vld [vmem:[#allocation8 + $0x1e8] sm:$0xff]
    %v616 = vld [vmem:[#allocation8 + $0x1f0] sm:$0xff]
    %v617 = vld [vmem:[#allocation8 + $0x1f8] sm:$0xff]
    %v618 = vld [vmem:[#allocation8 + $0x200] sm:$0xff]
    %v619 = vld [vmem:[#allocation8 + $0x208] sm:$0xff]
    %v620 = vld [vmem:[#allocation8 + $0x210] sm:$0xff]
    %v621 = vld [vmem:[#allocation8 + $0x218] sm:$0xff]
    %v622 = vld [vmem:[#allocation8 + $0x220] sm:$0xff]
    %v623 = vld [vmem:[#allocation8 + $0x228] sm:$0xff]
    %v624 = vld [vmem:[#allocation8 + $0x230] sm:$0xff]
    %v625 = vld [vmem:[#allocation8 + $0x238] sm:$0xff]
    %v626 = vld [vmem:[#allocation8 + $0x240] sm:$0xff]
    %v627 = vld [vmem:[#allocation8 + $0x248] sm:$0xff]
    %v628 = vld [vmem:[#allocation8 + $0x250] sm:$0xff]
    %v629 = vld [vmem:[#allocation8 + $0x258] sm:$0xff]
    %v630 = vld [vmem:[#allocation8 + $0x260] sm:$0xff]
    %v631 = vld [vmem:[#allocation8 + $0x268] sm:$0xff]
    %v632 = vld [vmem:[#allocation8 + $0x270] sm:$0xff]
    %v633 = vld [vmem:[#allocation8 + $0x278] sm:$0xff]
    %v634 = vld [vmem:[#allocation8 + $0x280] sm:$0xff]
    %v635 = vld [vmem:[#allocation8 + $0x288] sm:$0xff]
    %v636 = vld [vmem:[#allocation8 + $0x290] sm:$0xff]
    %v637 = vld [vmem:[#allocation8 + $0x298] sm:$0xff]
    %v638 = vld [vmem:[#allocation8 + $0x2a0] sm:$0xff]
    %v639 = vld [vmem:[#allocation8 + $0x2a8] sm:$0xff]
    %v640 = vld [vmem:[#allocation8 + $0x2b0] sm:$0xff]
    %v641 = vld [vmem:[#allocation8 + $0x2b8] sm:$0xff]
    %v642 = vld [vmem:[#allocation8 + $0x2c0] sm:$0xff]
    %v643 = vld [vmem:[#allocation8 + $0x2c8] sm:$0xff]
    %v644 = vld [vmem:[#allocation8 + $0x2d0] sm:$0xff]
    %v645 = vld [vmem:[#allocation8 + $0x2d8] sm:$0xff]
    %v646 = vld [vmem:[#allocation8 + $0x2e0] sm:$0xff]
    %v647 = vld [vmem:[#allocation8 + $0x2e8] sm:$0xff]
    %v648 = vld [vmem:[#allocation8 + $0x2f0] sm:$0xff]
    %v649 = vld [vmem:[#allocation8 + $0x2f8] sm:$0xff]
    %v650 = vld [vmem:[#allocation8 + $0x300] sm:$0xff]
    %v651 = vld [vmem:[#allocation8 + $0x308] sm:$0xff]
    %v652 = vld [vmem:[#allocation8 + $0x310] sm:$0xff]
    %v653 = vld [vmem:[#allocation8 + $0x318] sm:$0xff]
    %v654 = vld [vmem:[#allocation8 + $0x320] sm:$0xff]
    %v655 = vld [vmem:[#allocation8 + $0x328] sm:$0xff]
    %v656 = vld [vmem:[#allocation8 + $0x330] sm:$0xff]
    %v657 = vld [vmem:[#allocation8 + $0x338] sm:$0xff]
    %v658 = vld [vmem:[#allocation8 + $0x340] sm:$0xff]
    %v659 = vld [vmem:[#allocation8 + $0x348] sm:$0xff]
    %v660 = vld [vmem:[#allocation8 + $0x350] sm:$0xff]
    %v661 = vld [vmem:[#allocation8 + $0x358] sm:$0xff]
    %v662 = vld [vmem:[#allocation8 + $0x360] sm:$0xff]
    %v663 = vld [vmem:[#allocation8 + $0x368] sm:$0xff]
    %v664 = vld [vmem:[#allocation8 + $0x370] sm:$0xff]
    %v665 = vld [vmem:[#allocation8 + $0x378] sm:$0xff]
    %v666 = vld [vmem:[#allocation8 + $0x380] sm:$0xff]
    %v667 = vld [vmem:[#allocation8 + $0x388] sm:$0xff]
    %v668 = vld [vmem:[#allocation8 + $0x390] sm:$0xff]
    %v669 = vld [vmem:[#allocation8 + $0x398] sm:$0xff]
    %v670 = vld [vmem:[#allocation8 + $0x3a0] sm:$0xff]
    %v671 = vld [vmem:[#allocation8 + $0x3a8] sm:$0xff]
    %v672 = vld [vmem:[#allocation8 + $0x3b0] sm:$0xff]
    %v673 = vld [vmem:[#allocation8 + $0x3b8] sm:$0xff]
    %v674 = vld [vmem:[#allocation8 + $0x3c0] sm:$0xff]
    %v675 = vld [vmem:[#allocation8 + $0x3c8] sm:$0xff]
    %v676 = vld [vmem:[#allocation8 + $0x3d0] sm:$0xff]
    %v677 = vld [vmem:[#allocation8 + $0x3d8] sm:$0xff]
    %v678 = vld [vmem:[#allocation8 + $0x3e0] sm:$0xff]
    %v679 = vld [vmem:[#allocation8 + $0x3e8] sm:$0xff]
    %v680 = vld [vmem:[#allocation8 + $0x3f0] sm:$0xff]
    %v681 = vld [vmem:[#allocation8 + $0x3f8] sm:$0xff]
    %v682 = vld [vmem:[#allocation8 + $0x400] sm:$0xff]
    %v683 = vld [vmem:[#allocation8 + $0x408] sm:$0xff]
    %v684 = vld [vmem:[#allocation8 + $0x410] sm:$0xff]
    %v685 = vld [vmem:[#allocation8 + $0x418] sm:$0xff]
    %v686 = vld [vmem:[#allocation8 + $0x420] sm:$0xff]
    %v687 = vld [vmem:[#allocation8 + $0x428] sm:$0xff]
    %v688 = vld [vmem:[#allocation8 + $0x430] sm:$0xff]
    %v689 = vld [vmem:[#allocation8 + $0x438] sm:$0xff]
    %v690 = vld [vmem:[#allocation8 + $0x440] sm:$0xff]
    %v691 = vld [vmem:[#allocation8 + $0x448] sm:$0xff]
    %v692 = vld [vmem:[#allocation8 + $0x450] sm:$0xff]
    %v693 = vld [vmem:[#allocation8 + $0x458] sm:$0xff]
    %v694 = vld [vmem:[#allocation8 + $0x460] sm:$0xff]
    %v695 = vld [vmem:[#allocation8 + $0x468] sm:$0xff]
    %v696 = vld [vmem:[#allocation8 + $0x470] sm:$0xff]
    %v697 = vld [vmem:[#allocation8 + $0x478] sm:$0xff]
    %v698 = vld [vmem:[#allocation8 + $0x480] sm:$0xff]
    %v699 = vld [vmem:[#allocation8 + $0x488] sm:$0xff]
    %v700 = vld [vmem:[#allocation8 + $0x490] sm:$0xff]
    %v701 = vld [vmem:[#allocation8 + $0x498] sm:$0xff]
    %v702 = vld [vmem:[#allocation8 + $0x4a0] sm:$0xff]
    %v703 = vld [vmem:[#allocation8 + $0x4a8] sm:$0xff]
    %v704 = vld [vmem:[#allocation8 + $0x4b0] sm:$0xff]
    %v705 = vld [vmem:[#allocation8 + $0x4b8] sm:$0xff]
    %v706 = vld [vmem:[#allocation8 + $0x4c0] sm:$0xff]
    %v707 = vld [vmem:[#allocation8 + $0x4c8] sm:$0xff]
    %v708 = vld [vmem:[#allocation8 + $0x4d0] sm:$0xff]
    %v709 = vld [vmem:[#allocation8 + $0x4d8] sm:$0xff]
    %v710 = vld [vmem:[#allocation8 + $0x4e0] sm:$0xff]
    %v711 = vld [vmem:[#allocation8 + $0x4e8] sm:$0xff]
    %v712 = vld [vmem:[#allocation8 + $0x4f0] sm:$0xff]
    %v713 = vld [vmem:[#allocation8 + $0x4f8] sm:$0xff]
    %v714 = vld [vmem:[#allocation8 + $0x500] sm:$0xff]
    %v715 = vld [vmem:[#allocation8 + $0x508] sm:$0xff]
    %v716 = vld [vmem:[#allocation8 + $0x510] sm:$0xff]
    %v717 = vld [vmem:[#allocation8 + $0x518] sm:$0xff]
    %v718 = vld [vmem:[#allocation8 + $0x520] sm:$0xff]
    %v719 = vld [vmem:[#allocation8 + $0x528] sm:$0xff]
    %v720 = vld [vmem:[#allocation8 + $0x530] sm:$0xff]
    %v721 = vld [vmem:[#allocation8 + $0x538] sm:$0xff]
    %v722 = vld [vmem:[#allocation8 + $0x540] sm:$0xff]
    %v723 = vld [vmem:[#allocation8 + $0x548] sm:$0xff]
    %v724 = vld [vmem:[#allocation8 + $0x550] sm:$0xff]
    %v725 = vld [vmem:[#allocation8 + $0x558] sm:$0xff]
    %v726 = vld [vmem:[#allocation8 + $0x560] sm:$0xff]
    %v727 = vld [vmem:[#allocation8 + $0x568] sm:$0xff]
    %v728 = vld [vmem:[#allocation8 + $0x570] sm:$0xff]
    %v729 = vld [vmem:[#allocation8 + $0x578] sm:$0xff]
    %v730 = vld [vmem:[#allocation8 + $0x580] sm:$0xff]
    %v731 = vld [vmem:[#allocation8 + $0x588] sm:$0xff]
    %v732 = vld [vmem:[#allocation8 + $0x590] sm:$0xff]
    %v733 = vld [vmem:[#allocation8 + $0x598] sm:$0xff]
    %v734 = vld [vmem:[#allocation8 + $0x5a0] sm:$0xff]
    %v735 = vld [vmem:[#allocation8 + $0x5a8] sm:$0xff]
    %v736 = vld [vmem:[#allocation8 + $0x5b0] sm:$0xff]
    %v737 = vld [vmem:[#allocation8 + $0x5b8] sm:$0xff]
    %v738 = vld [vmem:[#allocation8 + $0x5c0] sm:$0xff]
    %v739 = vld [vmem:[#allocation8 + $0x5c8] sm:$0xff]
    %v740 = vld [vmem:[#allocation8 + $0x5d0] sm:$0xff]
    %v741 = vld [vmem:[#allocation8 + $0x5d8] sm:$0xff]
    %v742 = vld [vmem:[#allocation8 + $0x5e0] sm:$0xff]
    %v743 = vld [vmem:[#allocation8 + $0x5e8] sm:$0xff]
    %v744 = vld [vmem:[#allocation8 + $0x5f0] sm:$0xff]
    %v745 = vld [vmem:[#allocation8 + $0x5f8] sm:$0xff]
    %v746 = vld [vmem:[#allocation8 + $0x600] sm:$0xff]
    %v747 = vld [vmem:[#allocation8 + $0x608] sm:$0xff]
    %v748 = vld [vmem:[#allocation8 + $0x610] sm:$0xff]
    %v749 = vld [vmem:[#allocation8 + $0x618] sm:$0xff]
    %v750 = vld [vmem:[#allocation8 + $0x620] sm:$0xff]
    %v751 = vld [vmem:[#allocation8 + $0x628] sm:$0xff]
    %v752 = vld [vmem:[#allocation8 + $0x630] sm:$0xff]
    %v753 = vld [vmem:[#allocation8 + $0x638] sm:$0xff]
    %v754 = vld [vmem:[#allocation8 + $0x640] sm:$0xff]
    %v755 = vld [vmem:[#allocation8 + $0x648] sm:$0xff]
    %v756 = vld [vmem:[#allocation8 + $0x650] sm:$0xff]
    %v757 = vld [vmem:[#allocation8 + $0x658] sm:$0xff]
    %v758 = vld [vmem:[#allocation8 + $0x660] sm:$0xff]
    %v759 = vld [vmem:[#allocation8 + $0x668] sm:$0xff]
    %v760 = vld [vmem:[#allocation8 + $0x670] sm:$0xff]
    %v761 = vld [vmem:[#allocation8 + $0x678] sm:$0xff]
    %v762 = vld [vmem:[#allocation8 + $0x680] sm:$0xff]
    %v763 = vld [vmem:[#allocation8 + $0x688] sm:$0xff]
    %v764 = vld [vmem:[#allocation8 + $0x690] sm:$0xff]
    %v765 = vld [vmem:[#allocation8 + $0x698] sm:$0xff]
    %v766 = vld [vmem:[#allocation8 + $0x6a0] sm:$0xff]
    %v767 = vld [vmem:[#allocation8 + $0x6a8] sm:$0xff]
    %v768 = vld [vmem:[#allocation8 + $0x6b0] sm:$0xff]
    %v769 = vld [vmem:[#allocation8 + $0x6b8] sm:$0xff]
    %v770 = vld [vmem:[#allocation8 + $0x6c0] sm:$0xff]
    %v771 = vld [vmem:[#allocation8 + $0x6c8] sm:$0xff]
    %v772 = vld [vmem:[#allocation8 + $0x6d0] sm:$0xff]
    %v773 = vld [vmem:[#allocation8 + $0x6d8] sm:$0xff]
    %v774 = vld [vmem:[#allocation8 + $0x6e0] sm:$0xff]
    %v775 = vld [vmem:[#allocation8 + $0x6e8] sm:$0xff]
    %v776 = vld [vmem:[#allocation8 + $0x6f0] sm:$0xff]
    %v777 = vld [vmem:[#allocation8 + $0x6f8] sm:$0xff]
    %v778 = vld [vmem:[#allocation8 + $0x700] sm:$0xff]
    %v779 = vld [vmem:[#allocation8 + $0x708] sm:$0xff]
    %v780 = vld [vmem:[#allocation8 + $0x710] sm:$0xff]
    %v781 = vld [vmem:[#allocation8 + $0x718] sm:$0xff]
    %v782 = vld [vmem:[#allocation8 + $0x720] sm:$0xff]
    %v783 = vld [vmem:[#allocation8 + $0x728] sm:$0xff]
    %v784 = vld [vmem:[#allocation8 + $0x730] sm:$0xff]
    %v785 = vld [vmem:[#allocation8 + $0x738] sm:$0xff]
    %v786 = vld [vmem:[#allocation8 + $0x740] sm:$0xff]
    %v787 = vld [vmem:[#allocation8 + $0x748] sm:$0xff]
    %v788 = vld [vmem:[#allocation8 + $0x750] sm:$0xff]
    %v789 = vld [vmem:[#allocation8 + $0x758] sm:$0xff]
    %v790 = vld [vmem:[#allocation8 + $0x760] sm:$0xff]
    %v791 = vld [vmem:[#allocation8 + $0x768] sm:$0xff]
    %v792 = vld [vmem:[#allocation8 + $0x770] sm:$0xff]
    %v793 = vld [vmem:[#allocation8 + $0x778] sm:$0xff]
    %v794 = vld [vmem:[#allocation8 + $0x780] sm:$0xff]
    %v795 = vld [vmem:[#allocation8 + $0x788] sm:$0xff]
    %v796 = vld [vmem:[#allocation8 + $0x790] sm:$0xff]
    %v797 = vld [vmem:[#allocation8 + $0x798] sm:$0xff]
    %v798 = vld [vmem:[#allocation8 + $0x7a0] sm:$0xff]
    %v799 = vld [vmem:[#allocation8 + $0x7a8] sm:$0xff]
    %v800 = vld [vmem:[#allocation8 + $0x7b0] sm:$0xff]
    %v801 = vld [vmem:[#allocation8 + $0x7b8] sm:$0xff]
    %v802 = vld [vmem:[#allocation8 + $0x7c0] sm:$0xff]
    %v803 = vld [vmem:[#allocation8 + $0x7c8] sm:$0xff]
    %v804 = vld [vmem:[#allocation8 + $0x7d0] sm:$0xff]
    %v805 = vld [vmem:[#allocation8 + $0x7d8] sm:$0xff]
    %v806 = vld [vmem:[#allocation8 + $0x7e0] sm:$0xff]
    %v807 = vld [vmem:[#allocation8 + $0x7e8] sm:$0xff]
    %v808 = vld [vmem:[#allocation8 + $0x7f0] sm:$0xff]
    %v809 = vld [vmem:[#allocation8 + $0x7f8] sm:$0xff]
    %v810 = vld [vmem:[#allocation8 + $0x800] sm:$0xff]
    %v811 = vld [vmem:[#allocation8 + $0x808] sm:$0xff]
    %v812 = vld [vmem:[#allocation8 + $0x810] sm:$0xff]
    %v813 = vld [vmem:[#allocation8 + $0x818] sm:$0xff]
    %v814 = vld [vmem:[#allocation8 + $0x820] sm:$0xff]
    %v815 = vld [vmem:[#allocation8 + $0x828] sm:$0xff]
    %v816 = vld [vmem:[#allocation8 + $0x830] sm:$0xff]
    %v817 = vld [vmem:[#allocation8 + $0x838] sm:$0xff]
    %v818 = vld [vmem:[#allocation8 + $0x840] sm:$0xff]
    %v819 = vld [vmem:[#allocation8 + $0x848] sm:$0xff]
    %v820 = vld [vmem:[#allocation8 + $0x850] sm:$0xff]
    %v821 = vld [vmem:[#allocation8 + $0x858] sm:$0xff]
    %v822 = vld [vmem:[#allocation8 + $0x860] sm:$0xff]
    %v823 = vld [vmem:[#allocation8 + $0x868] sm:$0xff]
    %v824 = vld [vmem:[#allocation8 + $0x870] sm:$0xff]
    %v825 = vld [vmem:[#allocation8 + $0x878] sm:$0xff]
    %v826 = vld [vmem:[#allocation8 + $0x880] sm:$0xff]
    %v827 = vld [vmem:[#allocation8 + $0x888] sm:$0xff]
    %v828 = vld [vmem:[#allocation8 + $0x890] sm:$0xff]
    %v829 = vld [vmem:[#allocation8 + $0x898] sm:$0xff]
    %v830 = vld [vmem:[#allocation8 + $0x8a0] sm:$0xff]
    %v831 = vld [vmem:[#allocation8 + $0x8a8] sm:$0xff]
    %v832 = vld [vmem:[#allocation8 + $0x8b0] sm:$0xff]
    %v833 = vld [vmem:[#allocation8 + $0x8b8] sm:$0xff]
    %v834 = vld [vmem:[#allocation8 + $0x8c0] sm:$0xff]
    %v835 = vld [vmem:[#allocation8 + $0x8c8] sm:$0xff]
    %v836 = vld [vmem:[#allocation8 + $0x8d0] sm:$0xff]
    %v837 = vld [vmem:[#allocation8 + $0x8d8] sm:$0xff]
    %v838 = vld [vmem:[#allocation8 + $0x8e0] sm:$0xff]
    %v839 = vld [vmem:[#allocation8 + $0x8e8] sm:$0xff]
    %v840 = vld [vmem:[#allocation8 + $0x8f0] sm:$0xff]
    %v841 = vld [vmem:[#allocation8 + $0x8f8] sm:$0xff]
    %v842 = vld [vmem:[#allocation8 + $0x900] sm:$0xff]
    %v843 = vld [vmem:[#allocation8 + $0x908] sm:$0xff]
    %v844 = vld [vmem:[#allocation8 + $0x910] sm:$0xff]
    %v845 = vld [vmem:[#allocation8 + $0x918] sm:$0xff]
    %v846 = vld [vmem:[#allocation8 + $0x920] sm:$0xff]
    %v847 = vld [vmem:[#allocation8 + $0x928] sm:$0xff]
    %v848 = vld [vmem:[#allocation8 + $0x930] sm:$0xff]
    %v849 = vld [vmem:[#allocation8 + $0x938] sm:$0xff]
    %v850 = vld [vmem:[#allocation8 + $0x940] sm:$0xff]
    %v851 = vld [vmem:[#allocation8 + $0x948] sm:$0xff]
    %v852 = vld [vmem:[#allocation8 + $0x950] sm:$0xff]
    %v853 = vld [vmem:[#allocation8 + $0x958] sm:$0xff]
    %v854 = vld [vmem:[#allocation8 + $0x960] sm:$0xff]
    %v855 = vld [vmem:[#allocation8 + $0x968] sm:$0xff]
    %v856 = vld [vmem:[#allocation8 + $0x970] sm:$0xff]
    %v857 = vld [vmem:[#allocation8 + $0x978] sm:$0xff]
    %v858 = vld [vmem:[#allocation8 + $0x980] sm:$0xff]
    %v859 = vld [vmem:[#allocation8 + $0x988] sm:$0xff]
    %v860 = vld [vmem:[#allocation8 + $0x990] sm:$0xff]
    %v861 = vld [vmem:[#allocation8 + $0x998] sm:$0xff]
    %v862 = vld [vmem:[#allocation8 + $0x9a0] sm:$0xff]
    %v863 = vld [vmem:[#allocation8 + $0x9a8] sm:$0xff]
    %v864 = vld [vmem:[#allocation8 + $0x9b0] sm:$0xff]
    %v865 = vld [vmem:[#allocation8 + $0x9b8] sm:$0xff]
    %v866 = vld [vmem:[#allocation8 + $0x9c0] sm:$0xff]
    %v867 = vld [vmem:[#allocation8 + $0x9c8] sm:$0xff]
    %v868 = vld [vmem:[#allocation8 + $0x9d0] sm:$0xff]
    %v869 = vld [vmem:[#allocation8 + $0x9d8] sm:$0xff]
    %v870 = vld [vmem:[#allocation8 + $0x9e0] sm:$0xff]
    %v871 = vld [vmem:[#allocation8 + $0x9e8] sm:$0xff]
    %v872 = vld [vmem:[#allocation8 + $0x9f0] sm:$0xff]
    %v873 = vld [vmem:[#allocation8 + $0x9f8] sm:$0xff]
    %v874 = vld [vmem:[#allocation8 + $0xa00] sm:$0xff]
    %v875 = vld [vmem:[#allocation8 + $0xa08] sm:$0xff]
    %v876 = vld [vmem:[#allocation8 + $0xa10] sm:$0xff]
    %v877 = vld [vmem:[#allocation8 + $0xa18] sm:$0xff]
    %v878 = vld [vmem:[#allocation8 + $0xa20] sm:$0xff]
    %v879 = vld [vmem:[#allocation8 + $0xa28] sm:$0xff]
    %v880 = vld [vmem:[#allocation8 + $0xa30] sm:$0xff]
    %v881 = vld [vmem:[#allocation8 + $0xa38] sm:$0xff]
    %v882 = vld [vmem:[#allocation8 + $0xa40] sm:$0xff]
    %v883 = vld [vmem:[#allocation8 + $0xa48] sm:$0xff]
    %v884 = vld [vmem:[#allocation8 + $0xa50] sm:$0xff]
    %v885 = vld [vmem:[#allocation8 + $0xa58] sm:$0xff]
    %v886 = vld [vmem:[#allocation8 + $0xa60] sm:$0xff]
    %v887 = vld [vmem:[#allocation8 + $0xa68] sm:$0xff]
    %v888 = vld [vmem:[#allocation8 + $0xa70] sm:$0xff]
    %v889 = vld [vmem:[#allocation8 + $0xa78] sm:$0xff]
    %v890 = vld [vmem:[#allocation8 + $0xa80] sm:$0xff]
    %v891 = vld [vmem:[#allocation8 + $0xa88] sm:$0xff]
    %v892 = vld [vmem:[#allocation8 + $0xa90] sm:$0xff]
    %v893 = vld [vmem:[#allocation8 + $0xa98] sm:$0xff]
    %v894 = vld [vmem:[#allocation8 + $0xaa0] sm:$0xff]
    %v895 = vld [vmem:[#allocation8 + $0xaa8] sm:$0xff]
    %v896 = vld [vmem:[#allocation8 + $0xab0] sm:$0xff]
    %v897 = vld [vmem:[#allocation8 + $0xab8] sm:$0xff]
    %v898 = vld [vmem:[#allocation8 + $0xac0] sm:$0xff]
    %v899 = vld [vmem:[#allocation8 + $0xac8] sm:$0xff]
    %v900 = vld [vmem:[#allocation8 + $0xad0] sm:$0xff]
    %v901 = vld [vmem:[#allocation8 + $0xad8] sm:$0xff]
    %v902 = vld [vmem:[#allocation8 + $0xae0] sm:$0xff]
    %v903 = vld [vmem:[#allocation8 + $0xae8] sm:$0xff]
    %v904 = vld [vmem:[#allocation8 + $0xaf0] sm:$0xff]
    %v905 = vld [vmem:[#allocation8 + $0xaf8] sm:$0xff]
    %v906 = vld [vmem:[#allocation8 + $0xb00] sm:$0xff]
    %v907 = vld [vmem:[#allocation8 + $0xb08] sm:$0xff]
    %v908 = vld [vmem:[#allocation8 + $0xb10] sm:$0xff]
    %v909 = vld [vmem:[#allocation8 + $0xb18] sm:$0xff]
    %v910 = vld [vmem:[#allocation8 + $0xb20] sm:$0xff]
    %v911 = vld [vmem:[#allocation8 + $0xb28] sm:$0xff]
    %v912 = vld [vmem:[#allocation8 + $0xb30] sm:$0xff]
    %v913 = vld [vmem:[#allocation8 + $0xb38] sm:$0xff]
    %v914 = vld [vmem:[#allocation8 + $0xb40] sm:$0xff]
    %v915 = vld [vmem:[#allocation8 + $0xb48] sm:$0xff]
    %v916 = vld [vmem:[#allocation8 + $0xb50] sm:$0xff]
    %v917 = vld [vmem:[#allocation8 + $0xb58] sm:$0xff]
    %v918 = vld [vmem:[#allocation8 + $0xb60] sm:$0xff]
    %v919 = vld [vmem:[#allocation8 + $0xb68] sm:$0xff]
    %v920 = vld [vmem:[#allocation8 + $0xb70] sm:$0xff]
    %v921 = vld [vmem:[#allocation8 + $0xb78] sm:$0xff]
    %v922 = vld [vmem:[#allocation8 + $0xb80] sm:$0xff]
    %v923 = vld [vmem:[#allocation8 + $0xb88] sm:$0xff]
    %v924 = vld [vmem:[#allocation8 + $0xb90] sm:$0xff]
    %v925 = vld [vmem:[#allocation8 + $0xb98] sm:$0xff]
    %v926 = vld [vmem:[#allocation8 + $0xba0] sm:$0xff]
    %v927 = vld [vmem:[#allocation8 + $0xba8] sm:$0xff]
    %v928 = vld [vmem:[#allocation8 + $0xbb0] sm:$0xff]
    %v929 = vld [vmem:[#allocation8 + $0xbb8] sm:$0xff]
    %v930 = vld [vmem:[#allocation8 + $0xbc0] sm:$0xff]
    %v931 = vld [vmem:[#allocation8 + $0xbc8] sm:$0xff]
    %v932 = vld [vmem:[#allocation8 + $0xbd0] sm:$0xff]
    %v933 = vld [vmem:[#allocation8 + $0xbd8] sm:$0xff]
    %v934 = vld [vmem:[#allocation8 + $0xbe0] sm:$0xff]
    %v935 = vld [vmem:[#allocation8 + $0xbe8] sm:$0xff]
    %v936 = vld [vmem:[#allocation8 + $0xbf0] sm:$0xff]
    %v937 = vld [vmem:[#allocation8 + $0xbf8] sm:$0xff]
    %v938 = vld [vmem:[#allocation8 + $0xc00] sm:$0xff]
    %v939 = vld [vmem:[#allocation8 + $0xc08] sm:$0xff]
    %v940 = vld [vmem:[#allocation8 + $0xc10] sm:$0xff]
    %v941 = vld [vmem:[#allocation8 + $0xc18] sm:$0xff]
    %v942 = vld [vmem:[#allocation8 + $0xc20] sm:$0xff]
    %v943 = vld [vmem:[#allocation8 + $0xc28] sm:$0xff]
    %v944 = vld [vmem:[#allocation8 + $0xc30] sm:$0xff]
    %v945 = vld [vmem:[#allocation8 + $0xc38] sm:$0xff]
    %v946 = vld [vmem:[#allocation8 + $0xc40] sm:$0xff]
    %v947 = vld [vmem:[#allocation8 + $0xc48] sm:$0xff]
    %v948 = vld [vmem:[#allocation8 + $0xc50] sm:$0xff]
    %v949 = vld [vmem:[#allocation8 + $0xc58] sm:$0xff]
    %v950 = vld [vmem:[#allocation8 + $0xc60] sm:$0xff]
    %v951 = vld [vmem:[#allocation8 + $0xc68] sm:$0xff]
    %v952 = vld [vmem:[#allocation8 + $0xc70] sm:$0xff]
    %v953 = vld [vmem:[#allocation8 + $0xc78] sm:$0xff]
    %v954 = vld [vmem:[#allocation8 + $0xc80] sm:$0xff]
    %v955 = vld [vmem:[#allocation8 + $0xc88] sm:$0xff]
    %v956 = vld [vmem:[#allocation8 + $0xc90] sm:$0xff]
    %v957 = vld [vmem:[#allocation8 + $0xc98] sm:$0xff]
    %v958 = vld [vmem:[#allocation8 + $0xca0] sm:$0xff]
    %v959 = vld [vmem:[#allocation8 + $0xca8] sm:$0xff]
    %v960 = vld [vmem:[#allocation8 + $0xcb0] sm:$0xff]
    %v961 = vld [vmem:[#allocation8 + $0xcb8] sm:$0xff]
    %v962 = vld [vmem:[#allocation8 + $0xcc0] sm:$0xff]
    %v963 = vld [vmem:[#allocation8 + $0xcc8] sm:$0xff]
    %v964 = vld [vmem:[#allocation8 + $0xcd0] sm:$0xff]
    %v965 = vld [vmem:[#allocation8 + $0xcd8] sm:$0xff]
    %v966 = vld [vmem:[#allocation8 + $0xce0] sm:$0xff]
    %v967 = vld [vmem:[#allocation8 + $0xce8] sm:$0xff]
    %v968 = vld [vmem:[#allocation8 + $0xcf0] sm:$0xff]
    %v969 = vld [vmem:[#allocation8 + $0xcf8] sm:$0xff]
    %v970 = vld [vmem:[#allocation8 + $0xd00] sm:$0xff]
    %v971 = vld [vmem:[#allocation8 + $0xd08] sm:$0xff]
    %v972 = vld [vmem:[#allocation8 + $0xd10] sm:$0xff]
    %v973 = vld [vmem:[#allocation8 + $0xd18] sm:$0xff]
    %v974 = vld [vmem:[#allocation8 + $0xd20] sm:$0xff]
    %v975 = vld [vmem:[#allocation8 + $0xd28] sm:$0xff]
    %v976 = vld [vmem:[#allocation8 + $0xd30] sm:$0xff]
    %v977 = vld [vmem:[#allocation8 + $0xd38] sm:$0xff]
    %v978 = vld [vmem:[#allocation8 + $0xd40] sm:$0xff]
    %v979 = vld [vmem:[#allocation8 + $0xd48] sm:$0xff]
    %v980 = vld [vmem:[#allocation8 + $0xd50] sm:$0xff]
    %v981 = vld [vmem:[#allocation8 + $0xd58] sm:$0xff]
    %v982 = vld [vmem:[#allocation8 + $0xd60] sm:$0xff]
    %v983 = vld [vmem:[#allocation8 + $0xd68] sm:$0xff]
    %v984 = vld [vmem:[#allocation8 + $0xd70] sm:$0xff]
    %v985 = vld [vmem:[#allocation8 + $0xd78] sm:$0xff]
    %v986 = vld [vmem:[#allocation8 + $0xd80] sm:$0xff]
    %v987 = vld [vmem:[#allocation8 + $0xd88] sm:$0xff]
    %v988 = vld [vmem:[#allocation8 + $0xd90] sm:$0xff]
    %v989 = vld [vmem:[#allocation8 + $0xd98] sm:$0xff]
    %v990 = vld [vmem:[#allocation8 + $0xda0] sm:$0xff]
    %v991 = vld [vmem:[#allocation8 + $0xda8] sm:$0xff]
    %v992 = vld [vmem:[#allocation8 + $0xdb0] sm:$0xff]
    %v993 = vld [vmem:[#allocation8 + $0xdb8] sm:$0xff]
    %v994 = vld [vmem:[#allocation8 + $0xdc0] sm:$0xff]
    %v995 = vld [vmem:[#allocation8 + $0xdc8] sm:$0xff]
    %v996 = vld [vmem:[#allocation8 + $0xdd0] sm:$0xff]
    %v997 = vld [vmem:[#allocation8 + $0xdd8] sm:$0xff]
    %v998 = vld [vmem:[#allocation8 + $0xde0] sm:$0xff]
    %v999 = vld [vmem:[#allocation8 + $0xde8] sm:$0xff]
    %v1000 = vld [vmem:[#allocation8 + $0xdf0] sm:$0xff]
    %v1001 = vld [vmem:[#allocation8 + $0xdf8] sm:$0xff]
    %v1002 = vld [vmem:[#allocation8 + $0xe00] sm:$0xff]
    %v1003 = vld [vmem:[#allocation8 + $0xe08] sm:$0xff]
    %v1004 = vld [vmem:[#allocation8 + $0xe10] sm:$0xff]
    %v1005 = vld [vmem:[#allocation8 + $0xe18] sm:$0xff]
    %v1006 = vld [vmem:[#allocation8 + $0xe20] sm:$0xff]
    %v1007 = vld [vmem:[#allocation8 + $0xe28] sm:$0xff]
    %v1008 = vld [vmem:[#allocation8 + $0xe30] sm:$0xff]
    %v1009 = vld [vmem:[#allocation8 + $0xe38] sm:$0xff]
    %v1010 = vld [vmem:[#allocation8 + $0xe40] sm:$0xff]
    %v1011 = vld [vmem:[#allocation8 + $0xe48] sm:$0xff]
    %v1012 = vld [vmem:[#allocation8 + $0xe50] sm:$0xff]
    %v1013 = vld [vmem:[#allocation8 + $0xe58] sm:$0xff]
    %v1014 = vld [vmem:[#allocation8 + $0xe60] sm:$0xff]
    %v1015 = vld [vmem:[#allocation8 + $0xe68] sm:$0xff]
    %v1016 = vld [vmem:[#allocation8 + $0xe70] sm:$0xff]
    %v1017 = vld [vmem:[#allocation8 + $0xe78] sm:$0xff]
    %v1018 = vld [vmem:[#allocation8 + $0xe80] sm:$0xff]
    %v1019 = vld [vmem:[#allocation8 + $0xe88] sm:$0xff]
    %v1020 = vld [vmem:[#allocation8 + $0xe90] sm:$0xff]
    %v1021 = vld [vmem:[#allocation8 + $0xe98] sm:$0xff]
    %v1022 = vld [vmem:[#allocation8 + $0xea0] sm:$0xff]
    %v1023 = vld [vmem:[#allocation8 + $0xea8] sm:$0xff]
    %v1024 = vld [vmem:[#allocation8 + $0xeb0] sm:$0xff]
    %v1025 = vld [vmem:[#allocation8 + $0xeb8] sm:$0xff]
    %v1026 = vld [vmem:[#allocation8 + $0xec0] sm:$0xff]
    %v1027 = vld [vmem:[#allocation8 + $0xec8] sm:$0xff]
    %v1028 = vld [vmem:[#allocation8 + $0xed0] sm:$0xff]
    %v1029 = vld [vmem:[#allocation8 + $0xed8] sm:$0xff]
    %v1030 = vld [vmem:[#allocation8 + $0xee0] sm:$0xff]
    %v1031 = vld [vmem:[#allocation8 + $0xee8] sm:$0xff]
    %v1032 = vld [vmem:[#allocation8 + $0xef0] sm:$0xff]
    %v1033 = vld [vmem:[#allocation8 + $0xef8] sm:$0xff]
    %v1034 = vld [vmem:[#allocation8 + $0xf00] sm:$0xff]
    %v1035 = vld [vmem:[#allocation8 + $0xf08] sm:$0xff]
    %v1036 = vld [vmem:[#allocation8 + $0xf10] sm:$0xff]
    %v1037 = vld [vmem:[#allocation8 + $0xf18] sm:$0xff]
    %v1038 = vld [vmem:[#allocation8 + $0xf20] sm:$0xff]
    %v1039 = vld [vmem:[#allocation8 + $0xf28] sm:$0xff]
    %v1040 = vld [vmem:[#allocation8 + $0xf30] sm:$0xff]
    %v1041 = vld [vmem:[#allocation8 + $0xf38] sm:$0xff]
    %v1042 = vld [vmem:[#allocation8 + $0xf40] sm:$0xff]
    %v1043 = vld [vmem:[#allocation8 + $0xf48] sm:$0xff]
    %v1044 = vld [vmem:[#allocation8 + $0xf50] sm:$0xff]
    %v1045 = vld [vmem:[#allocation8 + $0xf58] sm:$0xff]
    %v1046 = vld [vmem:[#allocation8 + $0xf60] sm:$0xff]
    %v1047 = vld [vmem:[#allocation8 + $0xf68] sm:$0xff]
    %v1048 = vld [vmem:[#allocation8 + $0xf70] sm:$0xff]
    %v1049 = vld [vmem:[#allocation8 + $0xf78] sm:$0xff]
    %v1050 = vld [vmem:[#allocation8 + $0xf80] sm:$0xff]
    %v1051 = vld [vmem:[#allocation8 + $0xf88] sm:$0xff]
    %v1052 = vld [vmem:[#allocation8 + $0xf90] sm:$0xff]
    %v1053 = vld [vmem:[#allocation8 + $0xf98] sm:$0xff]
    %v1054 = vld [vmem:[#allocation8 + $0xfa0] sm:$0xff]
    %v1055 = vld [vmem:[#allocation8 + $0xfa8] sm:$0xff]
    %v1056 = vld [vmem:[#allocation8 + $0xfb0] sm:$0xff]
    %v1057 = vld [vmem:[#allocation8 + $0xfb8] sm:$0xff]
    %v1058 = vld [vmem:[#allocation8 + $0xfc0] sm:$0xff]
    %v1059 = vld [vmem:[#allocation8 + $0xfc8] sm:$0xff]
    %v1060 = vld [vmem:[#allocation8 + $0xfd0] sm:$0xff]
    %v1061 = vld [vmem:[#allocation8 + $0xfd8] sm:$0xff]
    %v1062 = vld [vmem:[#allocation8 + $0xfe0] sm:$0xff]
    %v1063 = vld [vmem:[#allocation8 + $0xfe8] sm:$0xff]
    %v1064 = vld [vmem:[#allocation8 + $0xff0] sm:$0xff]
    %v1065 = vld [vmem:[#allocation8 + $0xff8] sm:$0xff]
    %v1066 = vld [vmem:[#allocation8 + $0x1000] sm:$0xff]
    %v1067 = vld [vmem:[#allocation8 + $0x1008] sm:$0xff]
    %v1068 = vld [vmem:[#allocation8 + $0x1010] sm:$0xff]
    %v1069 = vld [vmem:[#allocation8 + $0x1018] sm:$0xff]
    %v1070 = vld [vmem:[#allocation8 + $0x1020] sm:$0xff]
    %v1071 = vld [vmem:[#allocation8 + $0x1028] sm:$0xff]
    %v1072 = vld [vmem:[#allocation8 + $0x1030] sm:$0xff]
    %v1073 = vld [vmem:[#allocation8 + $0x1038] sm:$0xff]
    %v1074 = vld [vmem:[#allocation8 + $0x1040] sm:$0xff]
    %v1075 = vld [vmem:[#allocation8 + $0x1048] sm:$0xff]
    %v1076 = vld [vmem:[#allocation8 + $0x1050] sm:$0xff]
    %v1077 = vld [vmem:[#allocation8 + $0x1058] sm:$0xff]
    %v1078 = vld [vmem:[#allocation8 + $0x1060] sm:$0xff]
    %v1079 = vld [vmem:[#allocation8 + $0x1068] sm:$0xff]
    %v1080 = vld [vmem:[#allocation8 + $0x1070] sm:$0xff]
    %v1081 = vld [vmem:[#allocation8 + $0x1078] sm:$0xff]
    %v1082 = vld [vmem:[#allocation8 + $0x1080] sm:$0xff]
    %v1083 = vld [vmem:[#allocation8 + $0x1088] sm:$0xff]
    %v1084 = vld [vmem:[#allocation8 + $0x1090] sm:$0xff]
    %v1085 = vld [vmem:[#allocation8 + $0x1098] sm:$0xff]
    %v1086 = vld [vmem:[#allocation8 + $0x10a0] sm:$0xff]
    %v1087 = vld [vmem:[#allocation8 + $0x10a8] sm:$0xff]
    %v1088 = vld [vmem:[#allocation8 + $0x10b0] sm:$0xff]
    %v1089 = vld [vmem:[#allocation8 + $0x10b8] sm:$0xff]
    %v1090 = vld [vmem:[#allocation8 + $0x10c0] sm:$0xff]
    %v1091 = vld [vmem:[#allocation8 + $0x10c8] sm:$0xff]
    %v1092 = vld [vmem:[#allocation8 + $0x10d0] sm:$0xff]
    %v1093 = vld [vmem:[#allocation8 + $0x10d8] sm:$0xff]
    %v1094 = vld [vmem:[#allocation8 + $0x10e0] sm:$0xff]
    %v1095 = vld [vmem:[#allocation8 + $0x10e8] sm:$0xff]
    %v1096 = vld [vmem:[#allocation8 + $0x10f0] sm:$0xff]
    %v1097 = vld [vmem:[#allocation8 + $0x10f8] sm:$0xff]
    %v1098 = vld [vmem:[#allocation8 + $0x1100] sm:$0xff]
    %v1099 = vld [vmem:[#allocation8 + $0x1108] sm:$0xff]
    %v1100 = vld [vmem:[#allocation8 + $0x1110] sm:$0xff]
    %v1101 = vld [vmem:[#allocation8 + $0x1118] sm:$0xff]
    %v1102 = vld [vmem:[#allocation8 + $0x1120] sm:$0xff]
    %v1103 = vld [vmem:[#allocation8 + $0x1128] sm:$0xff]
    %v1104 = vld [vmem:[#allocation8 + $0x1130] sm:$0xff]
    %v1105 = vld [vmem:[#allocation8 + $0x1138] sm:$0xff]
    %v1106 = vld [vmem:[#allocation8 + $0x1140] sm:$0xff]
    %v1107 = vld [vmem:[#allocation8 + $0x1148] sm:$0xff]
    %v1108 = vld [vmem:[#allocation8 + $0x1150] sm:$0xff]
    %v1109 = vld [vmem:[#allocation8 + $0x1158] sm:$0xff]
    %v1110 = vld [vmem:[#allocation8 + $0x1160] sm:$0xff]
    %v1111 = vld [vmem:[#allocation8 + $0x1168] sm:$0xff]
    %v1112 = vld [vmem:[#allocation8 + $0x1170] sm:$0xff]
    %v1113 = vld [vmem:[#allocation8 + $0x1178] sm:$0xff]
    %v1114 = vld [vmem:[#allocation10] sm:$0x1f]
    %v1116 = vlaneseq
    %v1117 = vshrl.u32 %v1116, 7
    %v1118 = vsub.s32 0, %v1117
    %v1119 = vrot.slane %v1114, %v1118
    %v1120 = vlaneseq
    %v1121 = vshrl.u32 %v1120, 7
    %v1122 = vsub.s32 1, %v1121
    %v1123 = vrot.slane %v1114, %v1122
    %v1124 = vlaneseq
    %v1125 = vshrl.u32 %v1124, 7
    %v1126 = vsub.s32 2, %v1125
    %v1127 = vrot.slane %v1114, %v1126
    %v1128 = vlaneseq
    %v1129 = vshrl.u32 %v1128, 7
    %v1130 = vsub.s32 3, %v1129
    %v1131 = vrot.slane %v1114, %v1130
    %v1132 = vlaneseq
    %v1133 = vshrl.u32 %v1132, 7
    %v1134 = vsub.s32 4, %v1133
    %v1135 = vrot.slane %v1114, %v1134
    %1141 = vmatprep.subr.mxu0 %v555
    %1142 = vmatpush1.msra.mxu0 %v554
    %1143 = vmatprep.subr.mxu0 %v560
    %1144 = vmatpush1.msra.mxu0 %v559
    %1145 = vmatprep.subr.mxu0 %v565
    %1146 = vmatpush1.msra.mxu0 %v564
    %1147 = vmatprep.subr.mxu0 %v570
    %1148 = vmatpush1.msra.mxu0 %v569
    %1149 = vmatprep.subr.mxu0 %v575
    %1150 = vmatpush1.msra.mxu0 %v574
    %1151 = vmatprep.subr.mxu0 %v580
    %1152 = vmatpush1.msra.mxu0 %v579
    %1153 = vmatprep.subr.mxu0 %v585
    %1154 = vmatpush1.msra.mxu0 %v584
    %1155 = vmatprep.subr.mxu0 %v590
    %1156 = vmatpush1.msra.mxu0 %v589
    %1157 = vmatprep.subr.mxu0 %v595
    %1158 = vmatpush1.msra.mxu0 %v594
    %1159 = vmatprep.subr.mxu0 %v600
    %1160 = vmatpush1.msra.mxu0 %v599
    %1161 = vmatprep.subr.mxu0 %v605
    %1162 = vmatpush1.msra.mxu0 %v604
    %1163 = vmatprep.subr.mxu0 %v610
    %1164 = vmatpush1.msra.mxu0 %v609
    %1165 = vmatprep.subr.mxu0 %v615
    %1166 = vmatpush1.msra.mxu0 %v614
    %1167 = vmatprep.subr.mxu0 %v620
    %1168 = vmatpush1.msra.mxu0 %v619
    %1169 = vmatprep.subr.mxu0 %v625
    %1170 = vmatpush1.msra.mxu0 %v624
    %1171 = vmatprep.subr.mxu0 %v630
    %1172 = vmatpush1.msra.mxu0 %v629
    %1173 = vmatprep.subr.mxu0 %v635
    %1174 = vmatpush1.msra.mxu0 %v634
    %1175 = vmatprep.subr.mxu0 %v640
    %1176 = vmatpush1.msra.mxu0 %v639
    %1177 = vmatprep.subr.mxu0 %v645
    %1178 = vmatpush1.msra.mxu0 %v644
    %1179 = vmatprep.subr.mxu0 %v650
    %1180 = vmatpush1.msra.mxu0 %v649
    %1181 = vmatprep.subr.mxu0 %v655
    %1182 = vmatpush1.msra.mxu0 %v654
    %1183 = vmatprep.subr.mxu0 %v660
    %1184 = vmatpush1.msra.mxu0 %v659
    %1185 = vmatprep.subr.mxu0 %v665
    %1186 = vmatpush1.msra.mxu0 %v664
    %1187 = vmatprep.subr.mxu0 %v670
    %1188 = vmatpush1.msra.mxu0 %v669
    %1189 = vmatprep.subr.mxu0 %v675
    %1190 = vmatpush1.msra.mxu0 %v674
    %1191 = vmatprep.subr.mxu0 %v680
    %1192 = vmatpush1.msra.mxu0 %v679
    %1193 = vmatprep.subr.mxu0 %v685
    %1194 = vmatpush1.msra.mxu0 %v684
    %1195 = vmatprep.subr.mxu0 %v690
    %1196 = vmatpush1.msra.mxu0 %v689
    %1197 = vmatprep.subr.mxu0 %v695
    %1198 = vmatpush1.msra.mxu0 %v694
    %1199 = vmatprep.subr.mxu0 %v700
    %1200 = vmatpush1.msra.mxu0 %v699
    %1201 = vmatprep.subr.mxu0 %v705
    %1202 = vmatpush1.msra.mxu0 %v704
    %1203 = vmatprep.subr.mxu0 %v710
    %1204 = vmatpush1.msra.mxu0 %v709
    %1205 = vmatprep.mubr.f32.mxu0 %v548
    %1206 = vmatmul.mubr.f32.gmra.mrb[0].mxu0 %v547
    %v1207 = vpop.f32.mrb[0].mxu0
    %v1208 = vadd.f32 %v1119, %v1207
    %v1209 = vpop.f32.mrb[0].mxu0
    %v1210 = vadd.f32 %v1123, %v1209
    %1211 = vdwg.mxu0
    %1212 = vmatprep.subr.mxu0 %v715
    %1213 = vmatpush1.msra.mxu0 %v714
    %1214 = vmatprep.subr.mxu0 %v720
    %1215 = vmatpush1.msra.mxu0 %v719
    %1216 = vmatprep.subr.mxu0 %v725
    %1217 = vmatpush1.msra.mxu0 %v724
    %1218 = vmatprep.subr.mxu0 %v730
    %1219 = vmatpush1.msra.mxu0 %v729
    %1220 = vmatprep.subr.mxu0 %v735
    %1221 = vmatpush1.msra.mxu0 %v734
    %1222 = vmatprep.subr.mxu0 %v740
    %1223 = vmatpush1.msra.mxu0 %v739
    %1224 = vmatprep.subr.mxu0 %v745
    %1225 = vmatpush1.msra.mxu0 %v744
    %1226 = vmatprep.subr.mxu0 %v750
    %1227 = vmatpush1.msra.mxu0 %v749
    %1228 = vmatprep.subr.mxu0 %v755
    %1229 = vmatpush1.msra.mxu0 %v754
    %1230 = vmatprep.subr.mxu0 %v760
    %1231 = vmatpush1.msra.mxu0 %v759
    %1232 = vmatprep.subr.mxu0 %v765
    %1233 = vmatpush1.msra.mxu0 %v764
    %1234 = vmatprep.subr.mxu0 %v770
    %1235 = vmatpush1.msra.mxu0 %v769
    %1236 = vmatprep.subr.mxu0 %v775
    %1237 = vmatpush1.msra.mxu0 %v774
    %1238 = vmatprep.subr.mxu0 %v780
    %1239 = vmatpush1.msra.mxu0 %v779
    %1240 = vmatprep.subr.mxu0 %v785
    %1241 = vmatpush1.msra.mxu0 %v784
    %1242 = vmatprep.subr.mxu0 %v790
    %1243 = vmatpush1.msra.mxu0 %v789
    %1244 = vmatprep.subr.mxu0 %v795
    %1245 = vmatpush1.msra.mxu0 %v794
    %1246 = vmatprep.subr.mxu0 %v800
    %1247 = vmatpush1.msra.mxu0 %v799
    %1248 = vmatprep.subr.mxu0 %v805
    %1249 = vmatpush1.msra.mxu0 %v804
    %1250 = vmatprep.subr.mxu0 %v810
    %1251 = vmatpush1.msra.mxu0 %v809
    %1252 = vmatprep.subr.mxu0 %v815
    %1253 = vmatpush1.msra.mxu0 %v814
    %1254 = vmatprep.subr.mxu0 %v820
    %1255 = vmatpush1.msra.mxu0 %v819
    %1256 = vmatprep.subr.mxu0 %v825
    %1257 = vmatpush1.msra.mxu0 %v824
    %1258 = vmatprep.subr.mxu0 %v830
    %1259 = vmatpush1.msra.mxu0 %v829
    %1260 = vmatprep.subr.mxu0 %v835
    %1261 = vmatpush1.msra.mxu0 %v834
    %1262 = vmatprep.subr.mxu0 %v840
    %1263 = vmatpush1.msra.mxu0 %v839
    %1264 = vmatprep.subr.mxu0 %v845
    %1265 = vmatpush1.msra.mxu0 %v844
    %1266 = vmatprep.subr.mxu0 %v850
    %1267 = vmatpush1.msra.mxu0 %v849
    %1268 = vmatprep.subr.mxu0 %v855
    %1269 = vmatpush1.msra.mxu0 %v854
    %1270 = vmatprep.subr.mxu0 %v860
    %1271 = vmatpush1.msra.mxu0 %v859
    %1272 = vmatprep.subr.mxu0 %v865
    %1273 = vmatpush1.msra.mxu0 %v864
    %1274 = vmatprep.subr.mxu0 %v870
    %1275 = vmatpush1.msra.mxu0 %v869
    %1276 = vmatprep.mubr.f32.mxu0 %v550
    %1277 = vmatmul.mubr.f32.gmra.mrb[0].mxu0 %v549
    %v1278 = vpop.f32.mrb[0].mxu0
    %v1279 = vadd.f32 %v1208, %v1278
    %v1280 = vpop.f32.mrb[0].mxu0
    %v1281 = vadd.f32 %v1210, %v1280
    %1282 = vdwg.mxu0
    %1283 = vmatprep.subr.mxu0 %v875
    %1284 = vmatpush1.msra.mxu0 %v874
    %1285 = vmatprep.subr.mxu0 %v880
    %1286 = vmatpush1.msra.mxu0 %v879
    %1287 = vmatprep.subr.mxu0 %v885
    %1288 = vmatpush1.msra.mxu0 %v884
    %1289 = vmatprep.subr.mxu0 %v890
    %1290 = vmatpush1.msra.mxu0 %v889
    %1291 = vmatprep.subr.mxu0 %v895
    %1292 = vmatpush1.msra.mxu0 %v894
    %1293 = vmatprep.subr.mxu0 %v900
    %1294 = vmatpush1.msra.mxu0 %v899
    %1295 = vmatprep.subr.mxu0 %v905
    %1296 = vmatpush1.msra.mxu0 %v904
    %1297 = vmatprep.subr.mxu0 %v910
    %1298 = vmatpush1.msra.mxu0 %v909
    %1299 = vmatprep.subr.mxu0 %v915
    %1300 = vmatpush1.msra.mxu0 %v914
    %1301 = vmatprep.subr.mxu0 %v920
    %1302 = vmatpush1.msra.mxu0 %v919
    %1303 = vmatprep.subr.mxu0 %v925
    %1304 = vmatpush1.msra.mxu0 %v924
    %1305 = vmatprep.subr.mxu0 %v930
    %1306 = vmatpush1.msra.mxu0 %v929
    %1307 = vmatprep.subr.mxu0 %v935
    %1308 = vmatpush1.msra.mxu0 %v934
    %1309 = vmatprep.subr.mxu0 %v940
    %1310 = vmatpush1.msra.mxu0 %v939
    %1311 = vmatprep.subr.mxu0 %v945
    %1312 = vmatpush1.msra.mxu0 %v944
    %1313 = vmatprep.subr.mxu0 %v950
    %1314 = vmatpush1.msra.mxu0 %v949
    %1315 = vmatprep.subr.mxu0 %v955
    %1316 = vmatpush1.msra.mxu0 %v954
    %1317 = vmatprep.subr.mxu0 %v960
    %1318 = vmatpush1.msra.mxu0 %v959
    %1319 = vmatprep.subr.mxu0 %v965
    %1320 = vmatpush1.msra.mxu0 %v964
    %1321 = vmatprep.subr.mxu0 %v970
    %1322 = vmatpush1.msra.mxu0 %v969
    %1323 = vmatprep.subr.mxu0 %v975
    %1324 = vmatpush1.msra.mxu0 %v974
    %1325 = vmatprep.subr.mxu0 %v980
    %1326 = vmatpush1.msra.mxu0 %v979
    %1327 = vmatprep.subr.mxu0 %v985
    %1328 = vmatpush1.msra.mxu0 %v984
    %1329 = vmatprep.subr.mxu0 %v990
    %1330 = vmatpush1.msra.mxu0 %v989
    %1331 = vmatprep.subr.mxu0 %v995
    %1332 = vmatpush1.msra.mxu0 %v994
    %1333 = vmatprep.subr.mxu0 %v1000
    %1334 = vmatpush1.msra.mxu0 %v999
    %1335 = vmatprep.subr.mxu0 %v1005
    %1336 = vmatpush1.msra.mxu0 %v1004
    %1337 = vmatprep.subr.mxu0 %v1010
    %1338 = vmatpush1.msra.mxu0 %v1009
    %1339 = vmatprep.subr.mxu0 %v1015
    %1340 = vmatpush1.msra.mxu0 %v1014
    %1341 = vmatprep.subr.mxu0 %v1020
    %1342 = vmatpush1.msra.mxu0 %v1019
    %1343 = vmatprep.subr.mxu0 %v1025
    %1344 = vmatpush1.msra.mxu0 %v1024
    %1345 = vmatprep.subr.mxu0 %v1030
    %1346 = vmatpush1.msra.mxu0 %v1029
    %1347 = vmatprep.mubr.f32.mxu0 %v552
    %1348 = vmatmul.mubr.f32.gmra.mrb[0].mxu0 %v551
    %v1349 = vpop.f32.mrb[0].mxu0
    %v1350 = vadd.f32 %v1279, %v1349
    %v1351 = vpop.f32.mrb[0].mxu0
    %v1352 = vadd.f32 %v1281, %v1351
    %1353 = vdwg.mxu0
    %1354 = vmatprep.subr.mxu0 %v1035
    %1355 = vmatpush1.msra.mxu0 %v1034
    %1356 = vmatprep.subr.mxu0 %v1040
    %1357 = vmatpush1.msra.mxu0 %v1039
    %1358 = vmatprep.subr.mxu0 %v1045
    %1359 = vmatpush1.msra.mxu0 %v1044
    %1360 = vmatprep.subr.mxu0 %v1050
    %1361 = vmatpush1.msra.mxu0 %v1049
    %1362 = vmatprep.subr.mxu0 %v1055
    %1363 = vmatpush1.msra.mxu0 %v1054
    %1364 = vmatprep.subr.mxu0 %v1060
    %1365 = vmatpush1.msra.mxu0 %v1059
    %1366 = vmatprep.subr.mxu0 %v1065
    %1367 = vmatpush1.msra.mxu0 %v1064
    %1368 = vmatprep.subr.mxu0 %v1070
    %1369 = vmatpush1.msra.mxu0 %v1069
    %1370 = vmatprep.subr.mxu0 %v1075
    %1371 = vmatpush1.msra.mxu0 %v1074
    %1372 = vmatprep.subr.mxu0 %v1080
    %1373 = vmatpush1.msra.mxu0 %v1079
    %1374 = vmatprep.subr.mxu0 %v1085
    %1375 = vmatpush1.msra.mxu0 %v1084
    %1376 = vmatprep.subr.mxu0 %v1090
    %1377 = vmatpush1.msra.mxu0 %v1089
    %1378 = vmatprep.subr.mxu0 %v1095
    %1379 = vmatpush1.msra.mxu0 %v1094
    %1380 = vmatprep.subr.mxu0 %v1100
    %1381 = vmatpush1.msra.mxu0 %v1099
    %1382 = vmatprep.subr.mxu0 %v1105
    %1383 = vmatpush1.msra.mxu0 %v1104
    %1384 = vmatprep.subr.mxu0 %v1110
    %1385 = vmatpush1.msra.mxu0 %v1109
    %1386 = vmatprep.subr.mxu0 0.0
    %1387 = vmatpush1.msra.mxu0 0.0
    %1388 = vmatprep.subr.mxu0 0.0
    %1389 = vmatpush1.msra.mxu0 0.0
    %1390 = vmatprep.subr.mxu0 0.0
    %1391 = vmatpush1.msra.mxu0 0.0
    %1392 = vmatprep.subr.mxu0 0.0
    %1393 = vmatpush1.msra.mxu0 0.0
    %1394 = vmatprep.subr.mxu0 0.0
    %1395 = vmatpush1.msra.mxu0 0.0
    %1396 = vmatprep.subr.mxu0 0.0
    %1397 = vmatpush1.msra.mxu0 0.0
    %1398 = vmatprep.subr.mxu0 0.0
    %1399 = vmatpush1.msra.mxu0 0.0
    %1400 = vmatprep.subr.mxu0 0.0
    %1401 = vmatpush1.msra.mxu0 0.0
    %1402 = vmatprep.subr.mxu0 0.0
    %1403 = vmatpush1.msra.mxu0 0.0
    %1404 = vmatprep.subr.mxu0 0.0
    %1405 = vmatpush1.msra.mxu0 0.0
    %1406 = vmatprep.subr.mxu0 0.0
    %1407 = vmatpush1.msra.mxu0 0.0
    %1408 = vmatprep.subr.mxu0 0.0
    %1409 = vmatpush1.msra.mxu0 0.0
    %1410 = vmatprep.subr.mxu0 0.0
    %1411 = vmatpush1.msra.mxu0 0.0
    %1412 = vmatprep.subr.mxu0 0.0
    %1413 = vmatpush1.msra.mxu0 0.0
    %1414 = vmatprep.subr.mxu0 0.0
    %1415 = vmatpush1.msra.mxu0 0.0
    %1416 = vmatprep.subr.mxu0 0.0
    %1417 = vmatpush1.msra.mxu0 0.0
    %1418 = vmatprep.mubr.f32.mxu0 0.0
    %1419 = vmatmul.mubr.f32.gmra.mrb[0].mxu0 %v553
    %v1420 = vpop.f32.mrb[0].mxu0
    %v1421 = vadd.f32 %v1350, %v1420
    %v1422 = vpop.f32.mrb[0].mxu0
    %v1423 = vadd.f32 %v1352, %v1422
    %1424 = vdwg.mxu0
    %1425 = vmatprep.subr.mxu0 %v557
    %1426 = vmatpush1.msra.mxu0 %v556
    %1427 = vmatprep.subr.mxu0 %v562
    %1428 = vmatpush1.msra.mxu0 %v561
    %1429 = vmatprep.subr.mxu0 %v567
    %1430 = vmatpush1.msra.mxu0 %v566
    %1431 = vmatprep.subr.mxu0 %v572
    %1432 = vmatpush1.msra.mxu0 %v571
    %1433 = vmatprep.subr.mxu0 %v577
    %1434 = vmatpush1.msra.mxu0 %v576
    %1435 = vmatprep.subr.mxu0 %v582
    %1436 = vmatpush1.msra.mxu0 %v581
    %1437 = vmatprep.subr.mxu0 %v587
    %1438 = vmatpush1.msra.mxu0 %v586
    %1439 = vmatprep.subr.mxu0 %v592
    %1440 = vmatpush1.msra.mxu0 %v591
    %1441 = vmatprep.subr.mxu0 %v597
    %1442 = vmatpush1.msra.mxu0 %v596
    %1443 = vmatprep.subr.mxu0 %v602
    %1444 = vmatpush1.msra.mxu0 %v601
    %1445 = vmatprep.subr.mxu0 %v607
    %1446 = vmatpush1.msra.mxu0 %v606
    %1447 = vmatprep.subr.mxu0 %v612
    %1448 = vmatpush1.msra.mxu0 %v611
    %1449 = vmatprep.subr.mxu0 %v617
    %1450 = vmatpush1.msra.mxu0 %v616
    %1451 = vmatprep.subr.mxu0 %v622
    %1452 = vmatpush1.msra.mxu0 %v621
    %1453 = vmatprep.subr.mxu0 %v627
    %1454 = vmatpush1.msra.mxu0 %v626
    %1455 = vmatprep.subr.mxu0 %v632
    %1456 = vmatpush1.msra.mxu0 %v631
    %1457 = vmatprep.subr.mxu0 %v637
    %1458 = vmatpush1.msra.mxu0 %v636
    %1459 = vmatprep.subr.mxu0 %v642
    %1460 = vmatpush1.msra.mxu0 %v641
    %1461 = vmatprep.subr.mxu0 %v647
    %1462 = vmatpush1.msra.mxu0 %v646
    %1463 = vmatprep.subr.mxu0 %v652
    %1464 = vmatpush1.msra.mxu0 %v651
    %1465 = vmatprep.subr.mxu0 %v657
    %1466 = vmatpush1.msra.mxu0 %v656
    %1467 = vmatprep.subr.mxu0 %v662
    %1468 = vmatpush1.msra.mxu0 %v661
    %1469 = vmatprep.subr.mxu0 %v667
    %1470 = vmatpush1.msra.mxu0 %v666
    %1471 = vmatprep.subr.mxu0 %v672
    %1472 = vmatpush1.msra.mxu0 %v671
    %1473 = vmatprep.subr.mxu0 %v677
    %1474 = vmatpush1.msra.mxu0 %v676
    %1475 = vmatprep.subr.mxu0 %v682
    %1476 = vmatpush1.msra.mxu0 %v681
    %1477 = vmatprep.subr.mxu0 %v687
    %1478 = vmatpush1.msra.mxu0 %v686
    %1479 = vmatprep.subr.mxu0 %v692
    %1480 = vmatpush1.msra.mxu0 %v691
    %1481 = vmatprep.subr.mxu0 %v697
    %1482 = vmatpush1.msra.mxu0 %v696
    %1483 = vmatprep.subr.mxu0 %v702
    %1484 = vmatpush1.msra.mxu0 %v701
    %1485 = vmatprep.subr.mxu0 %v707
    %1486 = vmatpush1.msra.mxu0 %v706
    %1487 = vmatprep.subr.mxu0 %v712
    %1488 = vmatpush1.msra.mxu0 %v711
    %1489 = vmatprep.mubr.f32.mxu0 %v548
    %1490 = vmatmul.mubr.f32.gmra.mrb[0].mxu0 %v547
    %v1491 = vpop.f32.mrb[0].mxu0
    %v1492 = vadd.f32 %v1127, %v1491
    %v1493 = vpop.f32.mrb[0].mxu0
    %v1494 = vadd.f32 %v1131, %v1493
    %1495 = vdwg.mxu0
    %1496 = vmatprep.subr.mxu0 %v717
    %1497 = vmatpush1.msra.mxu0 %v716
    %1498 = vmatprep.subr.mxu0 %v722
    %1499 = vmatpush1.msra.mxu0 %v721
    %1500 = vmatprep.subr.mxu0 %v727
    %1501 = vmatpush1.msra.mxu0 %v726
    %1502 = vmatprep.subr.mxu0 %v732
    %1503 = vmatpush1.msra.mxu0 %v731
    %1504 = vmatprep.subr.mxu0 %v737
    %1505 = vmatpush1.msra.mxu0 %v736
    %1506 = vmatprep.subr.mxu0 %v742
    %1507 = vmatpush1.msra.mxu0 %v741
    %1508 = vmatprep.subr.mxu0 %v747
    %1509 = vmatpush1.msra.mxu0 %v746
    %1510 = vmatprep.subr.mxu0 %v752
    %1511 = vmatpush1.msra.mxu0 %v751
    %1512 = vmatprep.subr.mxu0 %v757
    %1513 = vmatpush1.msra.mxu0 %v756
    %1514 = vmatprep.subr.mxu0 %v762
    %1515 = vmatpush1.msra.mxu0 %v761
    %1516 = vmatprep.subr.mxu0 %v767
    %1517 = vmatpush1.msra.mxu0 %v766
    %1518 = vmatprep.subr.mxu0 %v772
    %1519 = vmatpush1.msra.mxu0 %v771
    %1520 = vmatprep.subr.mxu0 %v777
    %1521 = vmatpush1.msra.mxu0 %v776
    %1522 = vmatprep.subr.mxu0 %v782
    %1523 = vmatpush1.msra.mxu0 %v781
    %1524 = vmatprep.subr.mxu0 %v787
    %1525 = vmatpush1.msra.mxu0 %v786
    %1526 = vmatprep.subr.mxu0 %v792
    %1527 = vmatpush1.msra.mxu0 %v791
    %1528 = vmatprep.subr.mxu0 %v797
    %1529 = vmatpush1.msra.mxu0 %v796
    %1530 = vmatprep.subr.mxu0 %v802
    %1531 = vmatpush1.msra.mxu0 %v801
    %1532 = vmatprep.subr.mxu0 %v807
    %1533 = vmatpush1.msra.mxu0 %v806
    %1534 = vmatprep.subr.mxu0 %v812
    %1535 = vmatpush1.msra.mxu0 %v811
    %1536 = vmatprep.subr.mxu0 %v817
    %1537 = vmatpush1.msra.mxu0 %v816
    %1538 = vmatprep.subr.mxu0 %v822
    %1539 = vmatpush1.msra.mxu0 %v821
    %1540 = vmatprep.subr.mxu0 %v827
    %1541 = vmatpush1.msra.mxu0 %v826
    %1542 = vmatprep.subr.mxu0 %v832
    %1543 = vmatpush1.msra.mxu0 %v831
    %1544 = vmatprep.subr.mxu0 %v837
    %1545 = vmatpush1.msra.mxu0 %v836
    %1546 = vmatprep.subr.mxu0 %v842
    %1547 = vmatpush1.msra.mxu0 %v841
    %1548 = vmatprep.subr.mxu0 %v847
    %1549 = vmatpush1.msra.mxu0 %v846
    %1550 = vmatprep.subr.mxu0 %v852
    %1551 = vmatpush1.msra.mxu0 %v851
    %1552 = vmatprep.subr.mxu0 %v857
    %1553 = vmatpush1.msra.mxu0 %v856
    %1554 = vmatprep.subr.mxu0 %v862
    %1555 = vmatpush1.msra.mxu0 %v861
    %1556 = vmatprep.subr.mxu0 %v867
    %1557 = vmatpush1.msra.mxu0 %v866
    %1558 = vmatprep.subr.mxu0 %v872
    %1559 = vmatpush1.msra.mxu0 %v871
    %1560 = vmatprep.mubr.f32.mxu0 %v550
    %1561 = vmatmul.mubr.f32.gmra.mrb[0].mxu0 %v549
    %v1562 = vpop.f32.mrb[0].mxu0
    %v1563 = vadd.f32 %v1492, %v1562
    %v1564 = vpop.f32.mrb[0].mxu0
    %v1565 = vadd.f32 %v1494, %v1564
    %1566 = vdwg.mxu0
    %1567 = vmatprep.subr.mxu0 %v877
    %1568 = vmatpush1.msra.mxu0 %v876
    %1569 = vmatprep.subr.mxu0 %v882
    %1570 = vmatpush1.msra.mxu0 %v881
    %1571 = vmatprep.subr.mxu0 %v887
    %1572 = vmatpush1.msra.mxu0 %v886
    %1573 = vmatprep.subr.mxu0 %v892
    %1574 = vmatpush1.msra.mxu0 %v891
    %1575 = vmatprep.subr.mxu0 %v897
    %1576 = vmatpush1.msra.mxu0 %v896
    %1577 = vmatprep.subr.mxu0 %v902
    %1578 = vmatpush1.msra.mxu0 %v901
    %1579 = vmatprep.subr.mxu0 %v907
    %1580 = vmatpush1.msra.mxu0 %v906
    %1581 = vmatprep.subr.mxu0 %v912
    %1582 = vmatpush1.msra.mxu0 %v911
    %1583 = vmatprep.subr.mxu0 %v917
    %1584 = vmatpush1.msra.mxu0 %v916
    %1585 = vmatprep.subr.mxu0 %v922
    %1586 = vmatpush1.msra.mxu0 %v921
    %1587 = vmatprep.subr.mxu0 %v927
    %1588 = vmatpush1.msra.mxu0 %v926
    %1589 = vmatprep.subr.mxu0 %v932
    %1590 = vmatpush1.msra.mxu0 %v931
    %1591 = vmatprep.subr.mxu0 %v937
    %1592 = vmatpush1.msra.mxu0 %v936
    %1593 = vmatprep.subr.mxu0 %v942
    %1594 = vmatpush1.msra.mxu0 %v941
    %1595 = vmatprep.subr.mxu0 %v947
    %1596 = vmatpush1.msra.mxu0 %v946
    %1597 = vmatprep.subr.mxu0 %v952
    %1598 = vmatpush1.msra.mxu0 %v951
    %1599 = vmatprep.subr.mxu0 %v957
    %1600 = vmatpush1.msra.mxu0 %v956
    %1601 = vmatprep.subr.mxu0 %v962
    %1602 = vmatpush1.msra.mxu0 %v961
    %1603 = vmatprep.subr.mxu0 %v967
    %1604 = vmatpush1.msra.mxu0 %v966
    %1605 = vmatprep.subr.mxu0 %v972
    %1606 = vmatpush1.msra.mxu0 %v971
    %1607 = vmatprep.subr.mxu0 %v977
    %1608 = vmatpush1.msra.mxu0 %v976
    %1609 = vmatprep.subr.mxu0 %v982
    %1610 = vmatpush1.msra.mxu0 %v981
    %1611 = vmatprep.subr.mxu0 %v987
    %1612 = vmatpush1.msra.mxu0 %v986
    %1613 = vmatprep.subr.mxu0 %v992
    %1614 = vmatpush1.msra.mxu0 %v991
    %1615 = vmatprep.subr.mxu0 %v997
    %1616 = vmatpush1.msra.mxu0 %v996
    %1617 = vmatprep.subr.mxu0 %v1002
    %1618 = vmatpush1.msra.mxu0 %v1001
    %1619 = vmatprep.subr.mxu0 %v1007
    %1620 = vmatpush1.msra.mxu0 %v1006
    %1621 = vmatprep.subr.mxu0 %v1012
    %1622 = vmatpush1.msra.mxu0 %v1011
    %1623 = vmatprep.subr.mxu0 %v1017
    %1624 = vmatpush1.msra.mxu0 %v1016
    %1625 = vmatprep.subr.mxu0 %v1022
    %1626 = vmatpush1.msra.mxu0 %v1021
    %1627 = vmatprep.subr.mxu0 %v1027
    %1628 = vmatpush1.msra.mxu0 %v1026
    %1629 = vmatprep.subr.mxu0 %v1032
    %1630 = vmatpush1.msra.mxu0 %v1031
    %1631 = vmatprep.mubr.f32.mxu0 %v552
    %1632 = vmatmul.mubr.f32.gmra.mrb[0].mxu0 %v551
    %v1633 = vpop.f32.mrb[0].mxu0
    %v1634 = vadd.f32 %v1563, %v1633
    %v1635 = vpop.f32.mrb[0].mxu0
    %v1636 = vadd.f32 %v1565, %v1635
    %1637 = vdwg.mxu0
    %1638 = vmatprep.subr.mxu0 %v1037
    %1639 = vmatpush1.msra.mxu0 %v1036
    %1640 = vmatprep.subr.mxu0 %v1042
    %1641 = vmatpush1.msra.mxu0 %v1041
    %1642 = vmatprep.subr.mxu0 %v1047
    %1643 = vmatpush1.msra.mxu0 %v1046
    %1644 = vmatprep.subr.mxu0 %v1052
    %1645 = vmatpush1.msra.mxu0 %v1051
    %1646 = vmatprep.subr.mxu0 %v1057
    %1647 = vmatpush1.msra.mxu0 %v1056
    %1648 = vmatprep.subr.mxu0 %v1062
    %1649 = vmatpush1.msra.mxu0 %v1061
    %1650 = vmatprep.subr.mxu0 %v1067
    %1651 = vmatpush1.msra.mxu0 %v1066
    %1652 = vmatprep.subr.mxu0 %v1072
    %1653 = vmatpush1.msra.mxu0 %v1071
    %1654 = vmatprep.subr.mxu0 %v1077
    %1655 = vmatpush1.msra.mxu0 %v1076
    %1656 = vmatprep.subr.mxu0 %v1082
    %1657 = vmatpush1.msra.mxu0 %v1081
    %1658 = vmatprep.subr.mxu0 %v1087
    %1659 = vmatpush1.msra.mxu0 %v1086
    %1660 = vmatprep.subr.mxu0 %v1092
    %1661 = vmatpush1.msra.mxu0 %v1091
    %1662 = vmatprep.subr.mxu0 %v1097
    %1663 = vmatpush1.msra.mxu0 %v1096
    %1664 = vmatprep.subr.mxu0 %v1102
    %1665 = vmatpush1.msra.mxu0 %v1101
    %1666 = vmatprep.subr.mxu0 %v1107
    %1667 = vmatpush1.msra.mxu0 %v1106
    %1668 = vmatprep.subr.mxu0 %v1112
    %1669 = vmatpush1.msra.mxu0 %v1111
    %1670 = vmatprep.subr.mxu0 0.0
    %1671 = vmatpush1.msra.mxu0 0.0
    %1672 = vmatprep.subr.mxu0 0.0
    %1673 = vmatpush1.msra.mxu0 0.0
    %1674 = vmatprep.subr.mxu0 0.0
    %1675 = vmatpush1.msra.mxu0 0.0
    %1676 = vmatprep.subr.mxu0 0.0
    %1677 = vmatpush1.msra.mxu0 0.0
    %1678 = vmatprep.subr.mxu0 0.0
    %1679 = vmatpush1.msra.mxu0 0.0
    %1680 = vmatprep.subr.mxu0 0.0
    %1681 = vmatpush1.msra.mxu0 0.0
    %1682 = vmatprep.subr.mxu0 0.0
    %1683 = vmatpush1.msra.mxu0 0.0
    %1684 = vmatprep.subr.mxu0 0.0
    %1685 = vmatpush1.msra.mxu0 0.0
    %1686 = vmatprep.subr.mxu0 0.0
    %1687 = vmatpush1.msra.mxu0 0.0
    %1688 = vmatprep.subr.mxu0 0.0
    %1689 = vmatpush1.msra.mxu0 0.0
    %1690 = vmatprep.subr.mxu0 0.0
    %1691 = vmatpush1.msra.mxu0 0.0
    %1692 = vmatprep.subr.mxu0 0.0
    %1693 = vmatpush1.msra.mxu0 0.0
    %1694 = vmatprep.subr.mxu0 0.0
    %1695 = vmatpush1.msra.mxu0 0.0
    %1696 = vmatprep.subr.mxu0 0.0
    %1697 = vmatpush1.msra.mxu0 0.0
    %1698 = vmatprep.subr.mxu0 0.0
    %1699 = vmatpush1.msra.mxu0 0.0
    %1700 = vmatprep.subr.mxu0 0.0
    %1701 = vmatpush1.msra.mxu0 0.0
    %1702 = vmatprep.mubr.f32.mxu0 0.0
    %1703 = vmatmul.mubr.f32.gmra.mrb[0].mxu0 %v553
    %v1704 = vpop.f32.mrb[0].mxu0
    %v1705 = vadd.f32 %v1634, %v1704
    %v1706 = vpop.f32.mrb[0].mxu0
    %v1707 = vadd.f32 %v1636, %v1706
    %1708 = vdwg.mxu0
    %1709 = vmatprep.subr.mxu0 0.0
    %1710 = vmatpush1.msra.mxu0 %v558
    %1711 = vmatprep.subr.mxu0 0.0
    %1712 = vmatpush1.msra.mxu0 %v563
    %1713 = vmatprep.subr.mxu0 0.0
    %1714 = vmatpush1.msra.mxu0 %v568
    %1715 = vmatprep.subr.mxu0 0.0
    %1716 = vmatpush1.msra.mxu0 %v573
    %1717 = vmatprep.subr.mxu0 0.0
    %1718 = vmatpush1.msra.mxu0 %v578
    %1719 = vmatprep.subr.mxu0 0.0
    %1720 = vmatpush1.msra.mxu0 %v583
    %1721 = vmatprep.subr.mxu0 0.0
    %1722 = vmatpush1.msra.mxu0 %v588
    %1723 = vmatprep.subr.mxu0 0.0
    %1724 = vmatpush1.msra.mxu0 %v593
    %1725 = vmatprep.subr.mxu0 0.0
    %1726 = vmatpush1.msra.mxu0 %v598
    %1727 = vmatprep.subr.mxu0 0.0
    %1728 = vmatpush1.msra.mxu0 %v603
    %1729 = vmatprep.subr.mxu0 0.0
    %1730 = vmatpush1.msra.mxu0 %v608
    %1731 = vmatprep.subr.mxu0 0.0
    %1732 = vmatpush1.msra.mxu0 %v613
    %1733 = vmatprep.subr.mxu0 0.0
    %1734 = vmatpush1.msra.mxu0 %v618
    %1735 = vmatprep.subr.mxu0 0.0
    %1736 = vmatpush1.msra.mxu0 %v623
    %1737 = vmatprep.subr.mxu0 0.0
    %1738 = vmatpush1.msra.mxu0 %v628
    %1739 = vmatprep.subr.mxu0 0.0
    %1740 = vmatpush1.msra.mxu0 %v633
    %1741 = vmatprep.subr.mxu0 0.0
    %1742 = vmatpush1.msra.mxu0 %v638
    %1743 = vmatprep.subr.mxu0 0.0
    %1744 = vmatpush1.msra.mxu0 %v643
    %1745 = vmatprep.subr.mxu0 0.0
    %1746 = vmatpush1.msra.mxu0 %v648
    %1747 = vmatprep.subr.mxu0 0.0
    %1748 = vmatpush1.msra.mxu0 %v653
    %1749 = vmatprep.subr.mxu0 0.0
    %1750 = vmatpush1.msra.mxu0 %v658
    %1751 = vmatprep.subr.mxu0 0.0
    %1752 = vmatpush1.msra.mxu0 %v663
    %1753 = vmatprep.subr.mxu0 0.0
    %1754 = vmatpush1.msra.mxu0 %v668
    %1755 = vmatprep.subr.mxu0 0.0
    %1756 = vmatpush1.msra.mxu0 %v673
    %1757 = vmatprep.subr.mxu0 0.0
    %1758 = vmatpush1.msra.mxu0 %v678
    %1759 = vmatprep.subr.mxu0 0.0
    %1760 = vmatpush1.msra.mxu0 %v683
    %1761 = vmatprep.subr.mxu0 0.0
    %1762 = vmatpush1.msra.mxu0 %v688
    %1763 = vmatprep.subr.mxu0 0.0
    %1764 = vmatpush1.msra.mxu0 %v693
    %1765 = vmatprep.subr.mxu0 0.0
    %1766 = vmatpush1.msra.mxu0 %v698
    %1767 = vmatprep.subr.mxu0 0.0
    %1768 = vmatpush1.msra.mxu0 %v703
    %1769 = vmatprep.subr.mxu0 0.0
    %1770 = vmatpush1.msra.mxu0 %v708
    %1771 = vmatprep.subr.mxu0 0.0
    %1772 = vmatpush1.msra.mxu0 %v713
    %1773 = vmatprep.mubr.f32.mxu0 %v548
    %1774 = vmatmul.mubr.f32.gmra.mrb[0].mxu0 %v547
    %v1775 = vpop.f32.mrb[0].mxu0
    %v1776 = vadd.f32 %v1135, %v1775
    %v1777 = vpop.f32.mrb[0].mxu0
    %1778 = vdwg.mxu0
    %1779 = vmatprep.subr.mxu0 0.0
    %1780 = vmatpush1.msra.mxu0 %v718
    %1781 = vmatprep.subr.mxu0 0.0
    %1782 = vmatpush1.msra.mxu0 %v723
    %1783 = vmatprep.subr.mxu0 0.0
    %1784 = vmatpush1.msra.mxu0 %v728
    %1785 = vmatprep.subr.mxu0 0.0
    %1786 = vmatpush1.msra.mxu0 %v733
    %1787 = vmatprep.subr.mxu0 0.0
    %1788 = vmatpush1.msra.mxu0 %v738
    %1789 = vmatprep.subr.mxu0 0.0
    %1790 = vmatpush1.msra.mxu0 %v743
    %1791 = vmatprep.subr.mxu0 0.0
    %1792 = vmatpush1.msra.mxu0 %v748
    %1793 = vmatprep.subr.mxu0 0.0
    %1794 = vmatpush1.msra.mxu0 %v753
    %1795 = vmatprep.subr.mxu0 0.0
    %1796 = vmatpush1.msra.mxu0 %v758
    %1797 = vmatprep.subr.mxu0 0.0
    %1798 = vmatpush1.msra.mxu0 %v763
    %1799 = vmatprep.subr.mxu0 0.0
    %1800 = vmatpush1.msra.mxu0 %v768
    %1801 = vmatprep.subr.mxu0 0.0
    %1802 = vmatpush1.msra.mxu0 %v773
    %1803 = vmatprep.subr.mxu0 0.0
    %1804 = vmatpush1.msra.mxu0 %v778
    %1805 = vmatprep.subr.mxu0 0.0
    %1806 = vmatpush1.msra.mxu0 %v783
    %1807 = vmatprep.subr.mxu0 0.0
    %1808 = vmatpush1.msra.mxu0 %v788
    %1809 = vmatprep.subr.mxu0 0.0
    %1810 = vmatpush1.msra.mxu0 %v793
    %1811 = vmatprep.subr.mxu0 0.0
    %1812 = vmatpush1.msra.mxu0 %v798
    %1813 = vmatprep.subr.mxu0 0.0
    %1814 = vmatpush1.msra.mxu0 %v803
    %1815 = vmatprep.subr.mxu0 0.0
    %1816 = vmatpush1.msra.mxu0 %v808
    %1817 = vmatprep.subr.mxu0 0.0
    %1818 = vmatpush1.msra.mxu0 %v813
    %1819 = vmatprep.subr.mxu0 0.0
    %1820 = vmatpush1.msra.mxu0 %v818
    %1821 = vmatprep.subr.mxu0 0.0
    %1822 = vmatpush1.msra.mxu0 %v823
    %1823 = vmatprep.subr.mxu0 0.0
    %1824 = vmatpush1.msra.mxu0 %v828
    %1825 = vmatprep.subr.mxu0 0.0
    %1826 = vmatpush1.msra.mxu0 %v833
    %1827 = vmatprep.subr.mxu0 0.0
    %1828 = vmatpush1.msra.mxu0 %v838
    %1829 = vmatprep.subr.mxu0 0.0
    %1830 = vmatpush1.msra.mxu0 %v843
    %1831 = vmatprep.subr.mxu0 0.0
    %1832 = vmatpush1.msra.mxu0 %v848
    %1833 = vmatprep.subr.mxu0 0.0
    %1834 = vmatpush1.msra.mxu0 %v853
    %1835 = vmatprep.subr.mxu0 0.0
    %1836 = vmatpush1.msra.mxu0 %v858
    %1837 = vmatprep.subr.mxu0 0.0
    %1838 = vmatpush1.msra.mxu0 %v863
    %1839 = vmatprep.subr.mxu0 0.0
    %1840 = vmatpush1.msra.mxu0 %v868
    %1841 = vmatprep.subr.mxu0 0.0
    %1842 = vmatpush1.msra.mxu0 %v873
    %1843 = vmatprep.mubr.f32.mxu0 %v550
    %1844 = vmatmul.mubr.f32.gmra.mrb[0].mxu0 %v549
    %v1845 = vpop.f32.mrb[0].mxu0
    %v1846 = vadd.f32 %v1776, %v1845
    %v1847 = vpop.f32.mrb[0].mxu0
    %1848 = vdwg.mxu0
    %1849 = vmatprep.subr.mxu0 0.0
    %1850 = vmatpush1.msra.mxu0 %v878
    %1851 = vmatprep.subr.mxu0 0.0
    %1852 = vmatpush1.msra.mxu0 %v883
    %1853 = vmatprep.subr.mxu0 0.0
    %1854 = vmatpush1.msra.mxu0 %v888
    %1855 = vmatprep.subr.mxu0 0.0
    %1856 = vmatpush1.msra.mxu0 %v893
    %1857 = vmatprep.subr.mxu0 0.0
    %1858 = vmatpush1.msra.mxu0 %v898
    %1859 = vmatprep.subr.mxu0 0.0
    %1860 = vmatpush1.msra.mxu0 %v903
    %1861 = vmatprep.subr.mxu0 0.0
    %1862 = vmatpush1.msra.mxu0 %v908
    %1863 = vmatprep.subr.mxu0 0.0
    %1864 = vmatpush1.msra.mxu0 %v913
    %1865 = vmatprep.subr.mxu0 0.0
    %1866 = vmatpush1.msra.mxu0 %v918
    %1867 = vmatprep.subr.mxu0 0.0
    %1868 = vmatpush1.msra.mxu0 %v923
    %1869 = vmatprep.subr.mxu0 0.0
    %1870 = vmatpush1.msra.mxu0 %v928
    %1871 = vmatprep.subr.mxu0 0.0
    %1872 = vmatpush1.msra.mxu0 %v933
    %1873 = vmatprep.subr.mxu0 0.0
    %1874 = vmatpush1.msra.mxu0 %v938
    %1875 = vmatprep.subr.mxu0 0.0
    %1876 = vmatpush1.msra.mxu0 %v943
    %1877 = vmatprep.subr.mxu0 0.0
    %1878 = vmatpush1.msra.mxu0 %v948
    %1879 = vmatprep.subr.mxu0 0.0
    %1880 = vmatpush1.msra.mxu0 %v953
    %1881 = vmatprep.subr.mxu0 0.0
    %1882 = vmatpush1.msra.mxu0 %v958
    %1883 = vmatprep.subr.mxu0 0.0
    %1884 = vmatpush1.msra.mxu0 %v963
    %1885 = vmatprep.subr.mxu0 0.0
    %1886 = vmatpush1.msra.mxu0 %v968
    %1887 = vmatprep.subr.mxu0 0.0
    %1888 = vmatpush1.msra.mxu0 %v973
    %1889 = vmatprep.subr.mxu0 0.0
    %1890 = vmatpush1.msra.mxu0 %v978
    %1891 = vmatprep.subr.mxu0 0.0
    %1892 = vmatpush1.msra.mxu0 %v983
    %1893 = vmatprep.subr.mxu0 0.0
    %1894 = vmatpush1.msra.mxu0 %v988
    %1895 = vmatprep.subr.mxu0 0.0
    %1896 = vmatpush1.msra.mxu0 %v993
    %1897 = vmatprep.subr.mxu0 0.0
    %1898 = vmatpush1.msra.mxu0 %v998
    %1899 = vmatprep.subr.mxu0 0.0
    %1900 = vmatpush1.msra.mxu0 %v1003
    %1901 = vmatprep.subr.mxu0 0.0
    %1902 = vmatpush1.msra.mxu0 %v1008
    %1903 = vmatprep.subr.mxu0 0.0
    %1904 = vmatpush1.msra.mxu0 %v1013
    %1905 = vmatprep.subr.mxu0 0.0
    %1906 = vmatpush1.msra.mxu0 %v1018
    %1907 = vmatprep.subr.mxu0 0.0
    %1908 = vmatpush1.msra.mxu0 %v1023
    %1909 = vmatprep.subr.mxu0 0.0
    %1910 = vmatpush1.msra.mxu0 %v1028
    %1911 = vmatprep.subr.mxu0 0.0
    %1912 = vmatpush1.msra.mxu0 %v1033
    %1913 = vmatprep.mubr.f32.mxu0 %v552
    %1914 = vmatmul.mubr.f32.gmra.mrb[0].mxu0 %v551
    %v1915 = vpop.f32.mrb[0].mxu0
    %v1916 = vadd.f32 %v1846, %v1915
    %v1917 = vpop.f32.mrb[0].mxu0
    %1918 = vdwg.mxu0
    %1919 = vmatprep.subr.mxu0 0.0
    %1920 = vmatpush1.msra.mxu0 %v1038
    %1921 = vmatprep.subr.mxu0 0.0
    %1922 = vmatpush1.msra.mxu0 %v1043
    %1923 = vmatprep.subr.mxu0 0.0
    %1924 = vmatpush1.msra.mxu0 %v1048
    %1925 = vmatprep.subr.mxu0 0.0
    %1926 = vmatpush1.msra.mxu0 %v1053
    %1927 = vmatprep.subr.mxu0 0.0
    %1928 = vmatpush1.msra.mxu0 %v1058
    %1929 = vmatprep.subr.mxu0 0.0
    %1930 = vmatpush1.msra.mxu0 %v1063
    %1931 = vmatprep.subr.mxu0 0.0
    %1932 = vmatpush1.msra.mxu0 %v1068
    %1933 = vmatprep.subr.mxu0 0.0
    %1934 = vmatpush1.msra.mxu0 %v1073
    %1935 = vmatprep.subr.mxu0 0.0
    %1936 = vmatpush1.msra.mxu0 %v1078
    %1937 = vmatprep.subr.mxu0 0.0
    %1938 = vmatpush1.msra.mxu0 %v1083
    %1939 = vmatprep.subr.mxu0 0.0
    %1940 = vmatpush1.msra.mxu0 %v1088
    %1941 = vmatprep.subr.mxu0 0.0
    %1942 = vmatpush1.msra.mxu0 %v1093
    %1943 = vmatprep.subr.mxu0 0.0
    %1944 = vmatpush1.msra.mxu0 %v1098
    %1945 = vmatprep.subr.mxu0 0.0
    %1946 = vmatpush1.msra.mxu0 %v1103
    %1947 = vmatprep.subr.mxu0 0.0
    %1948 = vmatpush1.msra.mxu0 %v1108
    %1949 = vmatprep.subr.mxu0 0.0
    %1950 = vmatpush1.msra.mxu0 %v1113
    %1951 = vmatprep.subr.mxu0 0.0
    %1952 = vmatpush1.msra.mxu0 0.0
    %1953 = vmatprep.subr.mxu0 0.0
    %1954 = vmatpush1.msra.mxu0 0.0
    %1955 = vmatprep.subr.mxu0 0.0
    %1956 = vmatpush1.msra.mxu0 0.0
    %1957 = vmatprep.subr.mxu0 0.0
    %1958 = vmatpush1.msra.mxu0 0.0
    %1959 = vmatprep.subr.mxu0 0.0
    %1960 = vmatpush1.msra.mxu0 0.0
    %1961 = vmatprep.subr.mxu0 0.0
    %1962 = vmatpush1.msra.mxu0 0.0
    %1963 = vmatprep.subr.mxu0 0.0
    %1964 = vmatpush1.msra.mxu0 0.0
    %1965 = vmatprep.subr.mxu0 0.0
    %1966 = vmatpush1.msra.mxu0 0.0
    %1967 = vmatprep.subr.mxu0 0.0
    %1968 = vmatpush1.msra.mxu0 0.0
    %1969 = vmatprep.subr.mxu0 0.0
    %1970 = vmatpush1.msra.mxu0 0.0
    %1971 = vmatprep.subr.mxu0 0.0
    %1972 = vmatpush1.msra.mxu0 0.0
    %1973 = vmatprep.subr.mxu0 0.0
    %1974 = vmatpush1.msra.mxu0 0.0
    %1975 = vmatprep.subr.mxu0 0.0
    %1976 = vmatpush1.msra.mxu0 0.0
    %1977 = vmatprep.subr.mxu0 0.0
    %1978 = vmatpush1.msra.mxu0 0.0
    %1979 = vmatprep.subr.mxu0 0.0
    %1980 = vmatpush1.msra.mxu0 0.0
    %1981 = vmatprep.subr.mxu0 0.0
    %1982 = vmatpush1.msra.mxu0 0.0
    %1983 = vmatprep.mubr.f32.mxu0 0.0
    %1984 = vmatmul.mubr.f32.gmra.mrb[0].mxu0 %v553
    %v1985 = vpop.f32.mrb[0].mxu0
    %v1986 = vadd.f32 %v1916, %v1985
    %v1987 = vpop.f32.mrb[0].mxu0
    %1988 = vdwg.mxu0
    %v1989 = vmax.f32 %v1421, 0.0
    %v1990 = vmax.f32 %v1423, 0.0
    %v1991 = vmax.f32 %v1705, 0.0
    %v1992 = vmax.f32 %v1707, 0.0
    %v1993 = vmax.f32 %v1986, 0.0
    %v1994 = vld [vmem:[#allocation11] sm:$0xff]
    %v1995 = vld [vmem:[#allocation11 + $0x8] sm:$0xff]
    %v1996 = vld [vmem:[#allocation11 + $0x10] sm:$0xff]
    %v1997 = vld [vmem:[#allocation11 + $0x18] sm:$0xff]
    %v1998 = vld [vmem:[#allocation11 + $0x20] sm:$0xff]
    %v1999 = vld [vmem:[#allocation11 + $0x28] sm:$0xff]
    %v2000 = vld [vmem:[#allocation11 + $0x30] sm:$0xff]
    %v2001 = vld [vmem:[#allocation11 + $0x38] sm:$0xff]
    %v2002 = vld [vmem:[#allocation11 + $0x40] sm:$0xff]
    %v2003 = vld [vmem:[#allocation11 + $0x48] sm:$0xff]
    %v2004 = vld [vmem:[#allocation11 + $0x50] sm:$0xff]
    %v2005 = vld [vmem:[#allocation11 + $0x58] sm:$0xff]
    %v2006 = vld [vmem:[#allocation11 + $0x60] sm:$0xff]
    %v2007 = vld [vmem:[#allocation11 + $0x68] sm:$0xff]
    %v2008 = vld [vmem:[#allocation11 + $0x70] sm:$0xff]
    %v2009 = vld [vmem:[#allocation11 + $0x78] sm:$0xff]
    %v2010 = vld [vmem:[#allocation11 + $0x80] sm:$0xff]
    %v2011 = vld [vmem:[#allocation11 + $0x88] sm:$0xff]
    %v2012 = vld [vmem:[#allocation11 + $0x90] sm:$0xff]
    %v2013 = vld [vmem:[#allocation11 + $0x98] sm:$0xff]
    %v2014 = vld [vmem:[#allocation11 + $0xa0] sm:$0xff]
    %v2015 = vld [vmem:[#allocation11 + $0xa8] sm:$0xff]
    %v2016 = vld [vmem:[#allocation11 + $0xb0] sm:$0xff]
    %v2017 = vld [vmem:[#allocation11 + $0xb8] sm:$0xff]
    %v2018 = vld [vmem:[#allocation11 + $0xc0] sm:$0xff]
    %v2019 = vld [vmem:[#allocation11 + $0xc8] sm:$0xff]
    %v2020 = vld [vmem:[#allocation11 + $0xd0] sm:$0xff]
    %v2021 = vld [vmem:[#allocation11 + $0xd8] sm:$0xff]
    %v2022 = vld [vmem:[#allocation11 + $0xe0] sm:$0xff]
    %v2023 = vld [vmem:[#allocation11 + $0xe8] sm:$0xff]
    %v2024 = vld [vmem:[#allocation11 + $0xf0] sm:$0xff]
    %v2025 = vld [vmem:[#allocation11 + $0xf8] sm:$0xff]
    %v2026 = vld [vmem:[#allocation11 + $0x100] sm:$0xff]
    %v2027 = vld [vmem:[#allocation11 + $0x108] sm:$0xff]
    %v2028 = vld [vmem:[#allocation11 + $0x110] sm:$0xff]
    %v2029 = vld [vmem:[#allocation11 + $0x118] sm:$0xff]
    %v2030 = vld [vmem:[#allocation11 + $0x120] sm:$0xff]
    %v2031 = vld [vmem:[#allocation11 + $0x128] sm:$0xff]
    %v2032 = vld [vmem:[#allocation11 + $0x130] sm:$0xff]
    %v2033 = vld [vmem:[#allocation11 + $0x138] sm:$0xff]
    %v2034 = vld [vmem:[#allocation11 + $0x140] sm:$0xff]
    %v2035 = vld [vmem:[#allocation11 + $0x148] sm:$0xff]
    %v2036 = vld [vmem:[#allocation11 + $0x150] sm:$0xff]
    %v2037 = vld [vmem:[#allocation11 + $0x158] sm:$0xff]
    %v2038 = vld [vmem:[#allocation11 + $0x160] sm:$0xff]
    %v2039 = vld [vmem:[#allocation11 + $0x168] sm:$0xff]
    %v2040 = vld [vmem:[#allocation11 + $0x170] sm:$0xff]
    %v2041 = vld [vmem:[#allocation11 + $0x178] sm:$0xff]
    %v2042 = vld [vmem:[#allocation11 + $0x180] sm:$0xff]
    %v2043 = vld [vmem:[#allocation11 + $0x188] sm:$0xff]
    %v2044 = vld [vmem:[#allocation11 + $0x190] sm:$0xff]
    %v2045 = vld [vmem:[#allocation11 + $0x198] sm:$0xff]
    %v2046 = vld [vmem:[#allocation11 + $0x1a0] sm:$0xff]
    %v2047 = vld [vmem:[#allocation11 + $0x1a8] sm:$0xff]
    %v2048 = vld [vmem:[#allocation11 + $0x1b0] sm:$0xff]
    %v2049 = vld [vmem:[#allocation11 + $0x1b8] sm:$0xff]
    %v2050 = vld [vmem:[#allocation11 + $0x1c0] sm:$0xff]
    %v2051 = vld [vmem:[#allocation11 + $0x1c8] sm:$0xff]
    %v2052 = vld [vmem:[#allocation11 + $0x1d0] sm:$0xff]
    %v2053 = vld [vmem:[#allocation11 + $0x1d8] sm:$0xff]
    %v2054 = vld [vmem:[#allocation11 + $0x1e0] sm:$0xff]
    %v2055 = vld [vmem:[#allocation11 + $0x1e8] sm:$0xff]
    %v2056 = vld [vmem:[#allocation11 + $0x1f0] sm:$0xff]
    %v2057 = vld [vmem:[#allocation11 + $0x1f8] sm:$0xff]
    %v2058 = vld [vmem:[#allocation11 + $0x200] sm:$0xff]
    %v2059 = vld [vmem:[#allocation11 + $0x208] sm:$0xff]
    %v2060 = vld [vmem:[#allocation11 + $0x210] sm:$0xff]
    %v2061 = vld [vmem:[#allocation11 + $0x218] sm:$0xff]
    %v2062 = vld [vmem:[#allocation11 + $0x220] sm:$0xff]
    %v2063 = vld [vmem:[#allocation11 + $0x228] sm:$0xff]
    %v2064 = vld [vmem:[#allocation11 + $0x230] sm:$0xff]
    %v2065 = vld [vmem:[#allocation11 + $0x238] sm:$0xff]
    %v2066 = vld [vmem:[#allocation11 + $0x240] sm:$0xff]
    %v2067 = vld [vmem:[#allocation11 + $0x248] sm:$0xff]
    %v2068 = vld [vmem:[#allocation11 + $0x250] sm:$0xff]
    %v2069 = vld [vmem:[#allocation11 + $0x258] sm:$0xff]
    %v2070 = vld [vmem:[#allocation11 + $0x260] sm:$0xff]
    %v2071 = vld [vmem:[#allocation11 + $0x268] sm:$0xff]
    %v2072 = vld [vmem:[#allocation11 + $0x270] sm:$0xff]
    %v2073 = vld [vmem:[#allocation11 + $0x278] sm:$0xff]
    %v2074 = vld [vmem:[#allocation13] sm:$0x1]
    %v2076 = vlaneseq
    %v2077 = vshrl.u32 %v2076, 7
    %v2078 = vsub.s32 0, %v2077
    %v2079 = vrot.slane %v2074, %v2078
    %2081 = vmatprep.subr.mxu0 0.0
    %2082 = vmatpush1.msra.mxu0 %v1994
    %2083 = vmatprep.subr.mxu0 0.0
    %2084 = vmatpush1.msra.mxu0 %v1995
    %2085 = vmatprep.subr.mxu0 0.0
    %2086 = vmatpush1.msra.mxu0 %v1996
    %2087 = vmatprep.subr.mxu0 0.0
    %2088 = vmatpush1.msra.mxu0 %v1997
    %2089 = vmatprep.subr.mxu0 0.0
    %2090 = vmatpush1.msra.mxu0 %v1998
    %2091 = vmatprep.subr.mxu0 0.0
    %2092 = vmatpush1.msra.mxu0 %v1999
    %2093 = vmatprep.subr.mxu0 0.0
    %2094 = vmatpush1.msra.mxu0 %v2000
    %2095 = vmatprep.subr.mxu0 0.0
    %2096 = vmatpush1.msra.mxu0 %v2001
    %2097 = vmatprep.subr.mxu0 0.0
    %2098 = vmatpush1.msra.mxu0 %v2002
    %2099 = vmatprep.subr.mxu0 0.0
    %2100 = vmatpush1.msra.mxu0 %v2003
    %2101 = vmatprep.subr.mxu0 0.0
    %2102 = vmatpush1.msra.mxu0 %v2004
    %2103 = vmatprep.subr.mxu0 0.0
    %2104 = vmatpush1.msra.mxu0 %v2005
    %2105 = vmatprep.subr.mxu0 0.0
    %2106 = vmatpush1.msra.mxu0 %v2006
    %2107 = vmatprep.subr.mxu0 0.0
    %2108 = vmatpush1.msra.mxu0 %v2007
    %2109 = vmatprep.subr.mxu0 0.0
    %2110 = vmatpush1.msra.mxu0 %v2008
    %2111 = vmatprep.subr.mxu0 0.0
    %2112 = vmatpush1.msra.mxu0 %v2009
    %2113 = vmatprep.subr.mxu0 0.0
    %2114 = vmatpush1.msra.mxu0 %v2010
    %2115 = vmatprep.subr.mxu0 0.0
    %2116 = vmatpush1.msra.mxu0 %v2011
    %2117 = vmatprep.subr.mxu0 0.0
    %2118 = vmatpush1.msra.mxu0 %v2012
    %2119 = vmatprep.subr.mxu0 0.0
    %2120 = vmatpush1.msra.mxu0 %v2013
    %2121 = vmatprep.subr.mxu0 0.0
    %2122 = vmatpush1.msra.mxu0 %v2014
    %2123 = vmatprep.subr.mxu0 0.0
    %2124 = vmatpush1.msra.mxu0 %v2015
    %2125 = vmatprep.subr.mxu0 0.0
    %2126 = vmatpush1.msra.mxu0 %v2016
    %2127 = vmatprep.subr.mxu0 0.0
    %2128 = vmatpush1.msra.mxu0 %v2017
    %2129 = vmatprep.subr.mxu0 0.0
    %2130 = vmatpush1.msra.mxu0 %v2018
    %2131 = vmatprep.subr.mxu0 0.0
    %2132 = vmatpush1.msra.mxu0 %v2019
    %2133 = vmatprep.subr.mxu0 0.0
    %2134 = vmatpush1.msra.mxu0 %v2020
    %2135 = vmatprep.subr.mxu0 0.0
    %2136 = vmatpush1.msra.mxu0 %v2021
    %2137 = vmatprep.subr.mxu0 0.0
    %2138 = vmatpush1.msra.mxu0 %v2022
    %2139 = vmatprep.subr.mxu0 0.0
    %2140 = vmatpush1.msra.mxu0 %v2023
    %2141 = vmatprep.subr.mxu0 0.0
    %2142 = vmatpush1.msra.mxu0 %v2024
    %2143 = vmatprep.subr.mxu0 0.0
    %2144 = vmatpush1.msra.mxu0 %v2025
    %2145 = vmatprep.mubr.f32.mxu0 %v1990
    %2146 = vmatmul.mubr.f32.gmra.mrb[0].mxu0 %v1989
    %v2147 = vpop.f32.mrb[0].mxu0
    %v2148 = vadd.f32 %v2079, %v2147
    %v2149 = vpop.f32.mrb[0].mxu0
    %2150 = vdwg.mxu0
    %2151 = vmatprep.subr.mxu0 0.0
    %2152 = vmatpush1.msra.mxu0 %v2026
    %2153 = vmatprep.subr.mxu0 0.0
    %2154 = vmatpush1.msra.mxu0 %v2027
    %2155 = vmatprep.subr.mxu0 0.0
    %2156 = vmatpush1.msra.mxu0 %v2028
    %2157 = vmatprep.subr.mxu0 0.0
    %2158 = vmatpush1.msra.mxu0 %v2029
    %2159 = vmatprep.subr.mxu0 0.0
    %2160 = vmatpush1.msra.mxu0 %v2030
    %2161 = vmatprep.subr.mxu0 0.0
    %2162 = vmatpush1.msra.mxu0 %v2031
    %2163 = vmatprep.subr.mxu0 0.0
    %2164 = vmatpush1.msra.mxu0 %v2032
    %2165 = vmatprep.subr.mxu0 0.0
    %2166 = vmatpush1.msra.mxu0 %v2033
    %2167 = vmatprep.subr.mxu0 0.0
    %2168 = vmatpush1.msra.mxu0 %v2034
    %2169 = vmatprep.subr.mxu0 0.0
    %2170 = vmatpush1.msra.mxu0 %v2035
    %2171 = vmatprep.subr.mxu0 0.0
    %2172 = vmatpush1.msra.mxu0 %v2036
    %2173 = vmatprep.subr.mxu0 0.0
    %2174 = vmatpush1.msra.mxu0 %v2037
    %2175 = vmatprep.subr.mxu0 0.0
    %2176 = vmatpush1.msra.mxu0 %v2038
    %2177 = vmatprep.subr.mxu0 0.0
    %2178 = vmatpush1.msra.mxu0 %v2039
    %2179 = vmatprep.subr.mxu0 0.0
    %2180 = vmatpush1.msra.mxu0 %v2040
    %2181 = vmatprep.subr.mxu0 0.0
    %2182 = vmatpush1.msra.mxu0 %v2041
    %2183 = vmatprep.subr.mxu0 0.0
    %2184 = vmatpush1.msra.mxu0 %v2042
    %2185 = vmatprep.subr.mxu0 0.0
    %2186 = vmatpush1.msra.mxu0 %v2043
    %2187 = vmatprep.subr.mxu0 0.0
    %2188 = vmatpush1.msra.mxu0 %v2044
    %2189 = vmatprep.subr.mxu0 0.0
    %2190 = vmatpush1.msra.mxu0 %v2045
    %2191 = vmatprep.subr.mxu0 0.0
    %2192 = vmatpush1.msra.mxu0 %v2046
    %2193 = vmatprep.subr.mxu0 0.0
    %2194 = vmatpush1.msra.mxu0 %v2047
    %2195 = vmatprep.subr.mxu0 0.0
    %2196 = vmatpush1.msra.mxu0 %v2048
    %2197 = vmatprep.subr.mxu0 0.0
    %2198 = vmatpush1.msra.mxu0 %v2049
    %2199 = vmatprep.subr.mxu0 0.0
    %2200 = vmatpush1.msra.mxu0 %v2050
    %2201 = vmatprep.subr.mxu0 0.0
    %2202 = vmatpush1.msra.mxu0 %v2051
    %2203 = vmatprep.subr.mxu0 0.0
    %2204 = vmatpush1.msra.mxu0 %v2052
    %2205 = vmatprep.subr.mxu0 0.0
    %2206 = vmatpush1.msra.mxu0 %v2053
    %2207 = vmatprep.subr.mxu0 0.0
    %2208 = vmatpush1.msra.mxu0 %v2054
    %2209 = vmatprep.subr.mxu0 0.0
    %2210 = vmatpush1.msra.mxu0 %v2055
    %2211 = vmatprep.subr.mxu0 0.0
    %2212 = vmatpush1.msra.mxu0 %v2056
    %2213 = vmatprep.subr.mxu0 0.0
    %2214 = vmatpush1.msra.mxu0 %v2057
    %2215 = vmatprep.mubr.f32.mxu0 %v1992
    %2216 = vmatmul.mubr.f32.gmra.mrb[0].mxu0 %v1991
    %v2217 = vpop.f32.mrb[0].mxu0
    %v2218 = vadd.f32 %v2148, %v2217
    %v2219 = vpop.f32.mrb[0].mxu0
    %2220 = vdwg.mxu0
    %2221 = vmatprep.subr.mxu0 0.0
    %2222 = vmatpush1.msra.mxu0 %v2058
    %2223 = vmatprep.subr.mxu0 0.0
    %2224 = vmatpush1.msra.mxu0 %v2059
    %2225 = vmatprep.subr.mxu0 0.0
    %2226 = vmatpush1.msra.mxu0 %v2060
    %2227 = vmatprep.subr.mxu0 0.0
    %2228 = vmatpush1.msra.mxu0 %v2061
    %2229 = vmatprep.subr.mxu0 0.0
    %2230 = vmatpush1.msra.mxu0 %v2062
    %2231 = vmatprep.subr.mxu0 0.0
    %2232 = vmatpush1.msra.mxu0 %v2063
    %2233 = vmatprep.subr.mxu0 0.0
    %2234 = vmatpush1.msra.mxu0 %v2064
    %2235 = vmatprep.subr.mxu0 0.0
    %2236 = vmatpush1.msra.mxu0 %v2065
    %2237 = vmatprep.subr.mxu0 0.0
    %2238 = vmatpush1.msra.mxu0 %v2066
    %2239 = vmatprep.subr.mxu0 0.0
    %2240 = vmatpush1.msra.mxu0 %v2067
    %2241 = vmatprep.subr.mxu0 0.0
    %2242 = vmatpush1.msra.mxu0 %v2068
    %2243 = vmatprep.subr.mxu0 0.0
    %2244 = vmatpush1.msra.mxu0 %v2069
    %2245 = vmatprep.subr.mxu0 0.0
    %2246 = vmatpush1.msra.mxu0 %v2070
    %2247 = vmatprep.subr.mxu0 0.0
    %2248 = vmatpush1.msra.mxu0 %v2071
    %2249 = vmatprep.subr.mxu0 0.0
    %2250 = vmatpush1.msra.mxu0 %v2072
    %2251 = vmatprep.subr.mxu0 0.0
    %2252 = vmatpush1.msra.mxu0 %v2073
    %2253 = vmatprep.subr.mxu0 0.0
    %2254 = vmatpush1.msra.mxu0 0.0
    %2255 = vmatprep.subr.mxu0 0.0
    %2256 = vmatpush1.msra.mxu0 0.0
    %2257 = vmatprep.subr.mxu0 0.0
    %2258 = vmatpush1.msra.mxu0 0.0
    %2259 = vmatprep.subr.mxu0 0.0
    %2260 = vmatpush1.msra.mxu0 0.0
    %2261 = vmatprep.subr.mxu0 0.0
    %2262 = vmatpush1.msra.mxu0 0.0
    %2263 = vmatprep.subr.mxu0 0.0
    %2264 = vmatpush1.msra.mxu0 0.0
    %2265 = vmatprep.subr.mxu0 0.0
    %2266 = vmatpush1.msra.mxu0 0.0
    %2267 = vmatprep.subr.mxu0 0.0
    %2268 = vmatpush1.msra.mxu0 0.0
    %2269 = vmatprep.subr.mxu0 0.0
    %2270 = vmatpush1.msra.mxu0 0.0
    %2271 = vmatprep.subr.mxu0 0.0
    %2272 = vmatpush1.msra.mxu0 0.0
    %2273 = vmatprep.subr.mxu0 0.0
    %2274 = vmatpush1.msra.mxu0 0.0
    %2275 = vmatprep.subr.mxu0 0.0
    %2276 = vmatpush1.msra.mxu0 0.0
    %2277 = vmatprep.subr.mxu0 0.0
    %2278 = vmatpush1.msra.mxu0 0.0
    %2279 = vmatprep.subr.mxu0 0.0
    %2280 = vmatpush1.msra.mxu0 0.0
    %2281 = vmatprep.subr.mxu0 0.0
    %2282 = vmatpush1.msra.mxu0 0.0
    %2283 = vmatprep.subr.mxu0 0.0
    %2284 = vmatpush1.msra.mxu0 0.0
    %2285 = vmatprep.mubr.f32.mxu0 0.0
    %2286 = vmatmul.mubr.f32.gmra.mrb[0].mxu0 %v1993
    %v2287 = vpop.f32.mrb[0].mxu0
    %v2288 = vadd.f32 %v2218, %v2287
    %v2289 = vpop.f32.mrb[0].mxu0
    %2290 = vdwg.mxu0
    %v2291 = vtanh.pop %v2288
    %2292 = vst [vmem:[#allocation14] sm:$0xff] %v2291
    // Predicated region
    $region58: #{tpu_custom_call.1} parent=1 // pred_check
      _
    $region59: #{tpu_custom_call.1} parent=1 // pred_check_branch
      %2294 = sbr.rel (0) target = $region61
    $region60: #{tpu_custom_call.1} parent=1 // pred_region
      %s2296 = ssub.s32 128, 128
      %2297 = vsyncadd [#allocation4], %s2296
      %s2299 = sshll.u32 [#allocation14], 4
      %s2300 = int_to_ptr.vmem [resolvable:$true] %s2299
      %2302 = dma.vmem_to_hbm [thread:$0]  %s2300, 128, %s7, [#allocation4]
    $region61: #{tpu_custom_call.1} parent=1 // pred_fallthru
      _
    // Predicated region
    $region62: #{tpu_custom_call.1} parent=1 // pred_check
      _
    $region63: #{tpu_custom_call.1} parent=1 // pred_check_branch
      %2304 = sbr.rel (0) target = $region65
    $region64: #{tpu_custom_call.1} parent=1 // pred_region
      %2305 = dma.done [#allocation4], 128
    $region65: #{tpu_custom_call.1} parent=1 // pred_fallthru
      _
    %2306 = vsyncpa [#allocation3], 1
    %2307 = vsyncpa [#allocation6], 1
    %2308 = vsyncpa [#allocation9], 1
    %2309 = vsyncpa [#allocation12], 1
    %2310 = vsyncpa [#allocation4], 1

</llo_original>
